<compile_context>
chip_gen: v7x
topology: tpu7x:2x2x1
jax: 0.10.0
libtpu: 0.0.40
codegen_flags: <defaults>
</compile_context>

<pallas_src>
import functools
import math

import jax
import jax.numpy as jnp
from jax import lax
from jax.experimental import pallas as pl
from jax.experimental.pallas import tpu as pltpu

_MXU_DTYPE = jnp.float32          # set to jnp.bfloat16 on v6e/v7x for 2x MXU rate
_LANES = 128                      # lane-dense channel width carried through the net
_VMEM_LIMIT = 32 * 1024 * 1024    # explicit scoped-VMEM limit (valid on v5e/v6e/v7x)


def _divisor_tile(n, target):
    """Largest divisor of n that is <= target (>= 1)."""
    t = int(max(1, min(n, target)))
    while n % t:
        t -= 1
    return t


# --------------------------- fused conv3x3 kernel ---------------------------

def _conv3x3_kernel(x_ref, w_ref, b_ref, m_ref, o_ref, acc_ref, *, H, W):
    """3x3 'same' conv + bias + ReLU on a row-flattened, H-padded NHWC block.

    x_ref  : (TB, (H+4)*W, Cin)  activation (2 zero rows above/below, flattened)
    w_ref  : (9, Cin, Cout)      tap-major weights (tap = 3*ky + kx)
    b_ref  : (1, Cout)           bias
    m_ref  : (2, H*W, 1)         column-wrap masks for kx=0 / kx=2
    o_ref  : (TB, H*W, Cout)     output (ReLU'd conv map, spatially flattened)
    acc_ref: (H*W, Cout) f32 VMEM scratch accumulator
    """
    HW = H * W
    TB = o_ref.shape[0]
    for b in range(TB):                       # small static unroll (TB <= 8)
        acc_ref[...] = jnp.zeros_like(acc_ref)
        for ky in range(3):
            for kx in range(3):
                # Tap (ky,kx) is the contiguous row slice [start, start+HW) of
                # the H-padded, row-flattened input (column wraps masked out).
                start = (ky + 1) * W + (kx - 1)
                xs = x_ref[b, start:start + HW, :]
                if kx == 0:
                    xs = xs * m_ref[0]
                elif kx == 2:
                    xs = xs * m_ref[1]
                acc_ref[...] += jnp.dot(
                    xs.astype(_MXU_DTYPE), w_ref[3 * ky + kx],
                    preferred_element_type=jnp.float32)
        o_ref[b] = jnp.maximum(acc_ref[...] + b_ref[...], 0.0).astype(o_ref.dtype)


def conv3x3_relu_flat(x_flat, w9, b2, wmask, *, H, W):
    """x_flat: (B, (H+4)*W, Cin) -> (B, H*W, Cout) fused conv+bias+ReLU."""
    B, Lp, Cin = x_flat.shape
    Cout = w9.shape[-1]
    HW = H * W
    # >= 2 parallel grid steps whenever B >= 2 (v7x megacore); TB capped at 8.
    TB = _divisor_tile(B, 8 if B >= 16 else max(1, B // 2))
    flops = 2 * B * HW * 9 * Cin * Cout
    bytes_accessed = 4 * (B * Lp * Cin + 9 * Cin * Cout + Cout + B * HW * Cout)
    kernel = functools.partial(_conv3x3_kernel, H=H, W=W)
    return pl.pallas_call(
        kernel,
        out_shape=jax.ShapeDtypeStruct((B, HW, Cout), jnp.float32),
        grid=(B // TB,),
        in_specs=[
            pl.BlockSpec((TB, Lp, Cin), lambda i: (i, 0, 0)),
            pl.BlockSpec((9, Cin, Cout), lambda i: (0, 0, 0)),
            pl.BlockSpec((1, Cout), lambda i: (0, 0)),
            pl.BlockSpec((2, HW, 1), lambda i: (0, 0, 0)),
        ],
        out_specs=pl.BlockSpec((TB, HW, Cout), lambda i: (i, 0, 0)),
        scratch_shapes=[pltpu.VMEM((HW, Cout), jnp.float32)],
        compiler_params=pltpu.CompilerParams(
            dimension_semantics=("parallel",),
            vmem_limit_bytes=_VMEM_LIMIT),
        cost_estimate=pl.CostEstimate(
            flops=flops, transcendentals=0, bytes_accessed=bytes_accessed),
    )(x_flat, w9, b2, wmask)


# ------------------------- fused classifier tail ----------------------------

def _tail_kernel(x_ref, w1_ref, b1_ref, w2_ref, b2_ref, o_ref):
    """AdaptiveAvgPool2d((1,1)) + fc1 + ReLU + (eval) Dropout + fc2, fused."""
    pooled = jnp.mean(x_ref[...], axis=1)                        # (TB, C)
    h = jnp.dot(pooled.astype(_MXU_DTYPE), w1_ref[...],
                preferred_element_type=jnp.float32) + b1_ref[...]
    h = jnp.maximum(h, 0.0)
    # TODO(synk): nn.Dropout(0.5) is identity in eval mode; stochastic
    # training-mode dropout is not implemented.
    out = jnp.dot(h.astype(_MXU_DTYPE), w2_ref[...],
                  preferred_element_type=jnp.float32) + b2_ref[...]
    o_ref[...] = out.astype(o_ref.dtype)


def classifier_tail(h3, fc1_w, fc1_b, fc2_w, fc2_b):
    """h3: (B, HW3, 128) conv3 output.  Returns (B, num_classes) logits."""
    B, HW3, C = h3.shape
    hidden = fc1_w.shape[0]
    ncls = fc2_w.shape[0]
    npad = -(-ncls // _LANES) * _LANES        # lane-dense padded class dim
    w1 = fc1_w.T.astype(_MXU_DTYPE)                               # (128, 256)
    b1 = fc1_b.reshape(1, hidden)
    w2 = jnp.pad(fc2_w.T, ((0, 0), (0, npad - ncls))).astype(_MXU_DTYPE)
    b2 = jnp.pad(fc2_b, (0, npad - ncls)).reshape(1, npad)
    TB = 8 if (B > 8 and B % 8 == 0) else B   # keep 2-D out block (8,128)-legal
    flops = 2 * B * (C * hidden + hidden * npad)
    bytes_accessed = 4 * (B * HW3 * C + C * hidden + hidden * npad + B * npad)
    out = pl.pallas_call(
        _tail_kernel,
        out_shape=jax.ShapeDtypeStruct((B, npad), jnp.float32),
        grid=(B // TB,),
        in_specs=[
            pl.BlockSpec((TB, HW3, C), lambda i: (i, 0, 0)),
            pl.BlockSpec((C, hidden), lambda i: (0, 0)),
            pl.BlockSpec((1, hidden), lambda i: (0, 0)),
            pl.BlockSpec((hidden, npad), lambda i: (0, 0)),
            pl.BlockSpec((1, npad), lambda i: (0, 0)),
        ],
        out_specs=pl.BlockSpec((TB, npad), lambda i: (i, 0)),
        compiler_params=pltpu.CompilerParams(
            dimension_semantics=("parallel",),
            vmem_limit_bytes=_VMEM_LIMIT),
        cost_estimate=pl.CostEstimate(
            flops=flops, transcendentals=0, bytes_accessed=bytes_accessed),
    )(h3, w1, b1, w2, b2)
    return out[:, :ncls]


# ------------------------------- layer glue ---------------------------------

def _prep_conv_inputs(w, b, cin_eff, cout_pad):
    """torch (Cout,Cin,3,3) -> tap-major (9, cin_eff, cout_pad) + (1, cout_pad)."""
    cout_r, cin_r = w.shape[0], w.shape[1]
    wt = jnp.transpose(w, (2, 3, 1, 0)).reshape(9, cin_r, cout_r)   # (ky,kx,ci,co)
    wt = jnp.pad(wt, ((0, 0), (0, cin_eff - cin_r), (0, cout_pad - cout_r)))
    bt = jnp.pad(b, (0, cout_pad - cout_r)).reshape(1, cout_pad)
    return wt.astype(_MXU_DTYPE), bt


def _flatten_pad_rows(x):
    """(B,H,W,C) NHWC -> (B,(H+4)*W,C): 2 zero rows above/below, row-flattened."""
    B, H, W, C = x.shape
    xp = jnp.pad(x, ((0, 0), (2, 2), (0, 0), (0, 0)))
    return xp.reshape(B, (H + 4) * W, C)


def _col_masks(H, W):
    """(2, H*W, 1) 0/1 masks: [0] valid for kx=0 (w>=1), [1] for kx=2 (w<=W-2)."""
    w_idx = jnp.tile(jnp.arange(W), H).reshape(H * W, 1)
    left = (w_idx >= 1).astype(jnp.float32)
    right = (w_idx <= W - 2).astype(jnp.float32)
    return jnp.stack([left, right], axis=0)


def _maxpool2x2(x):
    """XLA 2x2/stride-2 max-pool on NHWC (floor semantics = nn.MaxPool2d(2))."""
    B, H, W, C = x.shape
    Ho, Wo = H // 2, W // 2
    x = x[:, :2 * Ho, :2 * Wo, :]
    return jnp.max(x.reshape(B, Ho, 2, Wo, 2, C), axis=(2, 4))


# ------------------------------ model wrapper -------------------------------

def init_params(key, input_dim, num_classes):
    side = int(math.sqrt(input_dim))
    reshape_dim = side * side
    if reshape_dim < input_dim:
        side += 1
        reshape_dim = side * side
    ks = jax.random.split(key, 10)

    def w_init(k, shape, fan_in):
        return jax.random.normal(k, shape, jnp.float32) / jnp.sqrt(float(fan_in))

    params = {
        "conv1_w": w_init(ks[0], (32, 1, 3, 3), 1 * 9),
        "conv1_b": 0.01 * jax.random.normal(ks[1], (32,), jnp.float32),
        "conv2_w": w_init(ks[2], (64, 32, 3, 3), 32 * 9),
        "conv2_b": 0.01 * jax.random.normal(ks[3], (64,), jnp.float32),
        "conv3_w": w_init(ks[4], (128, 64, 3, 3), 64 * 9),
        "conv3_b": 0.01 * jax.random.normal(ks[5], (128,), jnp.float32),
        "fc1_w": w_init(ks[6], (256, 128), 128),
        "fc1_b": 0.01 * jax.random.normal(ks[7], (256,), jnp.float32),
        "fc2_w": w_init(ks[8], (num_classes, 256), 256),
        "fc2_b": 0.01 * jax.random.normal(ks[9], (num_classes,), jnp.float32),
    }
    return params, side, reshape_dim


def cnn_forward(params, x, side, reshape_dim):
    """Matches CNNClassifier.forward (returns logits, no softmax)."""
    B, D = x.shape
    x_padded = jnp.zeros((B, reshape_dim), x.dtype).at[:, :D].set(x)
    h = x_padded.reshape(B, 1, side, side)          # NCHW, as in the module
    h = jnp.transpose(h, (0, 2, 3, 1))              # -> NHWC (B, side, side, 1)

    # conv1: Cin padded 1 -> 8 (dense MXU K), Cout carried lane-dense 32 -> 128
    h = jnp.pad(h, ((0, 0), (0, 0), (0, 0), (0, 7)))
    H = W = side
    w9, b2 = _prep_conv_inputs(params["conv1_w"], params["conv1_b"], 8, _LANES)
    y = conv3x3_relu_flat(_flatten_pad_rows(h), w9, b2, _col_masks(H, W), H=H, W=W)
    h = _maxpool2x2(y.reshape(B, H, W, _LANES))

    # conv2: real 32 -> 64, carried as 128 -> 128 lane-dense (zero-padded weights)
    H, W = h.shape[1], h.shape[2]
    w9, b2 = _prep_conv_inputs(params["conv2_w"], params["conv2_b"], _LANES, _LANES)
    y = conv3x3_relu_flat(_flatten_pad_rows(h), w9, b2, _col_masks(H, W), H=H, W=W)
    h = _maxpool2x2(y.reshape(B, H, W, _LANES))

    # conv3: real 64 -> 128, no pool; its (B, H*W, 128) output feeds the tail
    H, W = h.shape[1], h.shape[2]
    w9, b2 = _prep_conv_inputs(params["conv3_w"], params["conv3_b"], _LANES, _LANES)
    y = conv3x3_relu_flat(_flatten_pad_rows(h), w9, b2, _col_masks(H, W), H=H, W=W)

    # fused tail: AdaptiveAvgPool2d((1,1)) + fc1 + ReLU + Dropout(eval) + fc2
    return classifier_tail(y, params["fc1_w"], params["fc1_b"],
                           params["fc2_w"], params["fc2_b"])


def cnn_forward_ref(params, x, side, reshape_dim):
    """Pure-JAX reference of the same forward pass (for correctness check)."""
    B, D = x.shape
    xp = jnp.zeros((B, reshape_dim), x.dtype).at[:, :D].set(x)
    h = jnp.transpose(xp.reshape(B, 1, side, side), (0, 2, 3, 1))

    def conv(h, w, b):
        w_hwio = jnp.transpose(w, (2, 3, 1, 0))
        y = lax.conv_general_dilated(h, w_hwio, (1, 1), "SAME",
                                     dimension_numbers=("NHWC", "HWIO", "NHWC"))
        return jnp.maximum(y + b, 0.0)

    def pool(h):
        return lax.reduce_window(h, -jnp.inf, lax.max,
                                 (1, 2, 2, 1), (1, 2, 2, 1), "VALID")

    h = pool(conv(h, params["conv1_w"], params["conv1_b"]))
    h = pool(conv(h, params["conv2_w"], params["conv2_b"]))
    h = conv(h, params["conv3_w"], params["conv3_b"])
    h = jnp.mean(h, axis=(1, 2))
    h = jnp.maximum(h @ params["fc1_w"].T + params["fc1_b"], 0.0)
    return h @ params["fc2_w"].T + params["fc2_b"]


if __name__ == "__main__":
    input_dim = 60       # -> side_length 8, reshape_dim 64 (exercises zero-pad path)
    num_classes = 10
    batch = 2

    key = jax.random.PRNGKey(0)
    k_x, k_p = jax.random.split(key)
    x = jax.random.normal(k_x, (batch, input_dim), jnp.float32)
    params, side, reshape_dim = init_params(k_p, input_dim, num_classes)

    fwd = jax.jit(functools.partial(cnn_forward, side=side,
                                    reshape_dim=reshape_dim))
    logits = fwd(params, x)
    jax.block_until_ready(logits)

    ref = cnn_forward_ref(params, x, side, reshape_dim)
    assert logits.shape == (batch, num_classes)
    assert jnp.allclose(logits, ref, atol=1e-3, rtol=1e-3), "mismatch vs reference"

    print("KERNEL_OK")
</pallas_src>

<mosaic_0001>
module attributes {stable_mosaic.version = 11 : i64} {
  func.func @_conv3x3_kernel(%arg0: i32, %arg1: memref<1x32x128xf32, #tpu.memory_space<vmem>>, %arg2: memref<9x128x128xf32, #tpu.memory_space<vmem>>, %arg3: memref<1x128xf32, #tpu.memory_space<vmem>>, %arg4: memref<2x16x1xf32, #tpu.memory_space<vmem>>, %arg5: memref<1x16x128xf32, #tpu.memory_space<vmem>>, %arg6: memref<16x128xf32, #tpu.memory_space<vmem>>) attributes {dimension_semantics = [#tpu.dimension_semantics<parallel>], iteration_bounds = array<i64: 2>, scalar_prefetch = 0 : i64, scratch_operands = 1 : i64, tpu.core_type = #tpu.core_type<tc>, window_params = [{transform_indices = @transform_0, window_bounds = array<i64: 1, 32, 128>}, {pipeline_mode = #tpu.pipeline_mode<synchronous>, transform_indices = @transform_1, window_bounds = array<i64: 9, 128, 128>}, {pipeline_mode = #tpu.pipeline_mode<synchronous>, transform_indices = @transform_2, window_bounds = array<i64: 1, 128>}, {pipeline_mode = #tpu.pipeline_mode<synchronous>, transform_indices = @transform_3, window_bounds = array<i64: 2, 16, 1>}, {transform_indices = @transform_4, window_bounds = array<i64: 1, 16, 128>}]} {
    %cst = arith.constant 0.000000e+00 : f32
    %0 = vector.broadcast %cst : f32 to vector<16x128xf32>
    %c0 = arith.constant 0 : index
    %c0_0 = arith.constant 0 : index
    %1 = vector.load %arg6[%c0, %c0_0] : memref<16x128xf32, #tpu.memory_space<vmem>>, vector<16x128xf32>
    tpu.vector_store %arg6[%c0, %c0_0], %0 {strides = array<i32>} : memref<16x128xf32, #tpu.memory_space<vmem>>, vector<16x128xf32>,
    %c0_1 = arith.constant 0 : index
    %c3 = arith.constant 3 : index
    %c0_2 = arith.constant 0 : index
    %2 = vector.load %arg1[%c0_1, %c3, %c0_2] : memref<1x32x128xf32, #tpu.memory_space<vmem>>, vector<1x16x128xf32>
    %3 = vector.shape_cast %2 : vector<1x16x128xf32> to vector<16x128xf32>
    %c0_3 = arith.constant 0 : index
    %c0_4 = arith.constant 0 : index
    %c0_5 = arith.constant 0 : index
    %4 = vector.load %arg4[%c0_3, %c0_4, %c0_5] : memref<2x16x1xf32, #tpu.memory_space<vmem>>, vector<1x16x1xf32>
    %5 = vector.shape_cast %4 : vector<1x16x1xf32> to vector<16x1xf32>
    %6 = vector.broadcast %5 : vector<16x1xf32> to vector<16x128xf32>
    %7 = arith.mulf %3, %6 : vector<16x128xf32>
    %c0_6 = arith.constant 0 : index
    %c0_7 = arith.constant 0 : index
    %8 = vector.load %arg6[%c0_6, %c0_7] : memref<16x128xf32, #tpu.memory_space<vmem>>, vector<16x128xf32>
    %c0_8 = arith.constant 0 : index
    %c0_9 = arith.constant 0 : index
    %c0_10 = arith.constant 0 : index
    %9 = vector.load %arg2[%c0_8, %c0_9, %c0_10] : memref<9x128x128xf32, #tpu.memory_space<vmem>>, vector<1x128x128xf32>
    %10 = vector.shape_cast %9 : vector<1x128x128xf32> to vector<128x128xf32>
    %cst_11 = arith.constant dense<0.000000e+00> : vector<16x128xf32>
    %11 = tpu.matmul %7, %10, %cst_11 {dimension_numbers = #tpu.dot_dimension_numbers<[1], [0], [0], [1], [0, 0, 1, 1], [], []>} : vector<16x128xf32>, vector<128x128xf32>, vector<16x128xf32> -> vector<16x128xf32>
    %12 = arith.addf %8, %11 : vector<16x128xf32>
    %c0_12 = arith.constant 0 : index
    %c0_13 = arith.constant 0 : index
    %13 = vector.load %arg6[%c0_12, %c0_13] : memref<16x128xf32, #tpu.memory_space<vmem>>, vector<16x128xf32>
    tpu.vector_store %arg6[%c0_12, %c0_13], %12 {strides = array<i32>} : memref<16x128xf32, #tpu.memory_space<vmem>>, vector<16x128xf32>,
    %c0_14 = arith.constant 0 : index
    %c4 = arith.constant 4 : index
    %c0_15 = arith.constant 0 : index
    %14 = vector.load %arg1[%c0_14, %c4, %c0_15] : memref<1x32x128xf32, #tpu.memory_space<vmem>>, vector<1x16x128xf32>
    %15 = vector.shape_cast %14 : vector<1x16x128xf32> to vector<16x128xf32>
    %c0_16 = arith.constant 0 : index
    %c0_17 = arith.constant 0 : index
    %16 = vector.load %arg6[%c0_16, %c0_17] : memref<16x128xf32, #tpu.memory_space<vmem>>, vector<16x128xf32>
    %c1 = arith.constant 1 : index
    %c0_18 = arith.constant 0 : index
    %c0_19 = arith.constant 0 : index
    %17 = vector.load %arg2[%c1, %c0_18, %c0_19] : memref<9x128x128xf32, #tpu.memory_space<vmem>>, vector<1x128x128xf32>
    %18 = vector.shape_cast %17 : vector<1x128x128xf32> to vector<128x128xf32>
    %cst_20 = arith.constant dense<0.000000e+00> : vector<16x128xf32>
    %19 = tpu.matmul %15, %18, %cst_20 {dimension_numbers = #tpu.dot_dimension_numbers<[1], [0], [0], [1], [0, 0, 1, 1], [], []>} : vector<16x128xf32>, vector<128x128xf32>, vector<16x128xf32> -> vector<16x128xf32>
    %20 = arith.addf %16, %19 : vector<16x128xf32>
    %c0_21 = arith.constant 0 : index
    %c0_22 = arith.constant 0 : index
    %21 = vector.load %arg6[%c0_21, %c0_22] : memref<16x128xf32, #tpu.memory_space<vmem>>, vector<16x128xf32>
    tpu.vector_store %arg6[%c0_21, %c0_22], %20 {strides = array<i32>} : memref<16x128xf32, #tpu.memory_space<vmem>>, vector<16x128xf32>,
    %c0_23 = arith.constant 0 : index
    %c5 = arith.constant 5 : index
    %c0_24 = arith.constant 0 : index
    %22 = vector.load %arg1[%c0_23, %c5, %c0_24] : memref<1x32x128xf32, #tpu.memory_space<vmem>>, vector<1x16x128xf32>
    %23 = vector.shape_cast %22 : vector<1x16x128xf32> to vector<16x128xf32>
    %c1_25 = arith.constant 1 : index
    %c0_26 = arith.constant 0 : index
    %c0_27 = arith.constant 0 : index
    %24 = vector.load %arg4[%c1_25, %c0_26, %c0_27] : memref<2x16x1xf32, #tpu.memory_space<vmem>>, vector<1x16x1xf32>
    %25 = vector.shape_cast %24 : vector<1x16x1xf32> to vector<16x1xf32>
    %26 = vector.broadcast %25 : vector<16x1xf32> to vector<16x128xf32>
    %27 = arith.mulf %23, %26 : vector<16x128xf32>
    %c0_28 = arith.constant 0 : index
    %c0_29 = arith.constant 0 : index
    %28 = vector.load %arg6[%c0_28, %c0_29] : memref<16x128xf32, #tpu.memory_space<vmem>>, vector<16x128xf32>
    %c2 = arith.constant 2 : index
    %c0_30 = arith.constant 0 : index
    %c0_31 = arith.constant 0 : index
    %29 = vector.load %arg2[%c2, %c0_30, %c0_31] : memref<9x128x128xf32, #tpu.memory_space<vmem>>, vector<1x128x128xf32>
    %30 = vector.shape_cast %29 : vector<1x128x128xf32> to vector<128x128xf32>
    %cst_32 = arith.constant dense<0.000000e+00> : vector<16x128xf32>
    %31 = tpu.matmul %27, %30, %cst_32 {dimension_numbers = #tpu.dot_dimension_numbers<[1], [0], [0], [1], [0, 0, 1, 1], [], []>} : vector<16x128xf32>, vector<128x128xf32>, vector<16x128xf32> -> vector<16x128xf32>
    %32 = arith.addf %28, %31 : vector<16x128xf32>
    %c0_33 = arith.constant 0 : index
    %c0_34 = arith.constant 0 : index
    %33 = vector.load %arg6[%c0_33, %c0_34] : memref<16x128xf32, #tpu.memory_space<vmem>>, vector<16x128xf32>
    tpu.vector_store %arg6[%c0_33, %c0_34], %32 {strides = array<i32>} : memref<16x128xf32, #tpu.memory_space<vmem>>, vector<16x128xf32>,
    %c0_35 = arith.constant 0 : index
    %c7 = arith.constant 7 : index
    %c0_36 = arith.constant 0 : index
    %34 = vector.load %arg1[%c0_35, %c7, %c0_36] : memref<1x32x128xf32, #tpu.memory_space<vmem>>, vector<1x16x128xf32>
    %35 = vector.shape_cast %34 : vector<1x16x128xf32> to vector<16x128xf32>
    %c0_37 = arith.constant 0 : index
    %c0_38 = arith.constant 0 : index
    %c0_39 = arith.constant 0 : index
    %36 = vector.load %arg4[%c0_37, %c0_38, %c0_39] : memref<2x16x1xf32, #tpu.memory_space<vmem>>, vector<1x16x1xf32>
    %37 = vector.shape_cast %36 : vector<1x16x1xf32> to vector<16x1xf32>
    %38 = vector.broadcast %37 : vector<16x1xf32> to vector<16x128xf32>
    %39 = arith.mulf %35, %38 : vector<16x128xf32>
    %c0_40 = arith.constant 0 : index
    %c0_41 = arith.constant 0 : index
    %40 = vector.load %arg6[%c0_40, %c0_41] : memref<16x128xf32, #tpu.memory_space<vmem>>, vector<16x128xf32>
    %c3_42 = arith.constant 3 : index
    %c0_43 = arith.constant 0 : index
    %c0_44 = arith.constant 0 : index
    %41 = vector.load %arg2[%c3_42, %c0_43, %c0_44] : memref<9x128x128xf32, #tpu.memory_space<vmem>>, vector<1x128x128xf32>
    %42 = vector.shape_cast %41 : vector<1x128x128xf32> to vector<128x128xf32>
    %cst_45 = arith.constant dense<0.000000e+00> : vector<16x128xf32>
    %43 = tpu.matmul %39, %42, %cst_45 {dimension_numbers = #tpu.dot_dimension_numbers<[1], [0], [0], [1], [0, 0, 1, 1], [], []>} : vector<16x128xf32>, vector<128x128xf32>, vector<16x128xf32> -> vector<16x128xf32>
    %44 = arith.addf %40, %43 : vector<16x128xf32>
    %c0_46 = arith.constant 0 : index
    %c0_47 = arith.constant 0 : index
    %45 = vector.load %arg6[%c0_46, %c0_47] : memref<16x128xf32, #tpu.memory_space<vmem>>, vector<16x128xf32>
    tpu.vector_store %arg6[%c0_46, %c0_47], %44 {strides = array<i32>} : memref<16x128xf32, #tpu.memory_space<vmem>>, vector<16x128xf32>,
    %c0_48 = arith.constant 0 : index
    %c8 = arith.constant 8 : index
    %c0_49 = arith.constant 0 : index
    %46 = vector.load %arg1[%c0_48, %c8, %c0_49] : memref<1x32x128xf32, #tpu.memory_space<vmem>>, vector<1x16x128xf32>
    %47 = vector.shape_cast %46 : vector<1x16x128xf32> to vector<16x128xf32>
    %c0_50 = arith.constant 0 : index
    %c0_51 = arith.constant 0 : index
    %48 = vector.load %arg6[%c0_50, %c0_51] : memref<16x128xf32, #tpu.memory_space<vmem>>, vector<16x128xf32>
    %c4_52 = arith.constant 4 : index
    %c0_53 = arith.constant 0 : index
    %c0_54 = arith.constant 0 : index
    %49 = vector.load %arg2[%c4_52, %c0_53, %c0_54] : memref<9x128x128xf32, #tpu.memory_space<vmem>>, vector<1x128x128xf32>
    %50 = vector.shape_cast %49 : vector<1x128x128xf32> to vector<128x128xf32>
    %cst_55 = arith.constant dense<0.000000e+00> : vector<16x128xf32>
    %51 = tpu.matmul %47, %50, %cst_55 {dimension_numbers = #tpu.dot_dimension_numbers<[1], [0], [0], [1], [0, 0, 1, 1], [], []>} : vector<16x128xf32>, vector<128x128xf32>, vector<16x128xf32> -> vector<16x128xf32>
    %52 = arith.addf %48, %51 : vector<16x128xf32>
    %c0_56 = arith.constant 0 : index
    %c0_57 = arith.constant 0 : index
    %53 = vector.load %arg6[%c0_56, %c0_57] : memref<16x128xf32, #tpu.memory_space<vmem>>, vector<16x128xf32>
    tpu.vector_store %arg6[%c0_56, %c0_57], %52 {strides = array<i32>} : memref<16x128xf32, #tpu.memory_space<vmem>>, vector<16x128xf32>,
    %c0_58 = arith.constant 0 : index
    %c9 = arith.constant 9 : index
    %c0_59 = arith.constant 0 : index
    %54 = vector.load %arg1[%c0_58, %c9, %c0_59] : memref<1x32x128xf32, #tpu.memory_space<vmem>>, vector<1x16x128xf32>
    %55 = vector.shape_cast %54 : vector<1x16x128xf32> to vector<16x128xf32>
    %c1_60 = arith.constant 1 : index
    %c0_61 = arith.constant 0 : index
    %c0_62 = arith.constant 0 : index
    %56 = vector.load %arg4[%c1_60, %c0_61, %c0_62] : memref<2x16x1xf32, #tpu.memory_space<vmem>>, vector<1x16x1xf32>
    %57 = vector.shape_cast %56 : vector<1x16x1xf32> to vector<16x1xf32>
    %58 = vector.broadcast %57 : vector<16x1xf32> to vector<16x128xf32>
    %59 = arith.mulf %55, %58 : vector<16x128xf32>
    %c0_63 = arith.constant 0 : index
    %c0_64 = arith.constant 0 : index
    %60 = vector.load %arg6[%c0_63, %c0_64] : memref<16x128xf32, #tpu.memory_space<vmem>>, vector<16x128xf32>
    %c5_65 = arith.constant 5 : index
    %c0_66 = arith.constant 0 : index
    %c0_67 = arith.constant 0 : index
    %61 = vector.load %arg2[%c5_65, %c0_66, %c0_67] : memref<9x128x128xf32, #tpu.memory_space<vmem>>, vector<1x128x128xf32>
    %62 = vector.shape_cast %61 : vector<1x128x128xf32> to vector<128x128xf32>
    %cst_68 = arith.constant dense<0.000000e+00> : vector<16x128xf32>
    %63 = tpu.matmul %59, %62, %cst_68 {dimension_numbers = #tpu.dot_dimension_numbers<[1], [0], [0], [1], [0, 0, 1, 1], [], []>} : vector<16x128xf32>, vector<128x128xf32>, vector<16x128xf32> -> vector<16x128xf32>
    %64 = arith.addf %60, %63 : vector<16x128xf32>
    %c0_69 = arith.constant 0 : index
    %c0_70 = arith.constant 0 : index
    %65 = vector.load %arg6[%c0_69, %c0_70] : memref<16x128xf32, #tpu.memory_space<vmem>>, vector<16x128xf32>
    tpu.vector_store %arg6[%c0_69, %c0_70], %64 {strides = array<i32>} : memref<16x128xf32, #tpu.memory_space<vmem>>, vector<16x128xf32>,
    %c0_71 = arith.constant 0 : index
    %c11 = arith.constant 11 : index
    %c0_72 = arith.constant 0 : index
    %66 = vector.load %arg1[%c0_71, %c11, %c0_72] : memref<1x32x128xf32, #tpu.memory_space<vmem>>, vector<1x16x128xf32>
    %67 = vector.shape_cast %66 : vector<1x16x128xf32> to vector<16x128xf32>
    %c0_73 = arith.constant 0 : index
    %c0_74 = arith.constant 0 : index
    %c0_75 = arith.constant 0 : index
    %68 = vector.load %arg4[%c0_73, %c0_74, %c0_75] : memref<2x16x1xf32, #tpu.memory_space<vmem>>, vector<1x16x1xf32>
    %69 = vector.shape_cast %68 : vector<1x16x1xf32> to vector<16x1xf32>
    %70 = vector.broadcast %69 : vector<16x1xf32> to vector<16x128xf32>
    %71 = arith.mulf %67, %70 : vector<16x128xf32>
    %c0_76 = arith.constant 0 : index
    %c0_77 = arith.constant 0 : index
    %72 = vector.load %arg6[%c0_76, %c0_77] : memref<16x128xf32, #tpu.memory_space<vmem>>, vector<16x128xf32>
    %c6 = arith.constant 6 : index
    %c0_78 = arith.constant 0 : index
    %c0_79 = arith.constant 0 : index
    %73 = vector.load %arg2[%c6, %c0_78, %c0_79] : memref<9x128x128xf32, #tpu.memory_space<vmem>>, vector<1x128x128xf32>
    %74 = vector.shape_cast %73 : vector<1x128x128xf32> to vector<128x128xf32>
    %cst_80 = arith.constant dense<0.000000e+00> : vector<16x128xf32>
    %75 = tpu.matmul %71, %74, %cst_80 {dimension_numbers = #tpu.dot_dimension_numbers<[1], [0], [0], [1], [0, 0, 1, 1], [], []>} : vector<16x128xf32>, vector<128x128xf32>, vector<16x128xf32> -> vector<16x128xf32>
    %76 = arith.addf %72, %75 : vector<16x128xf32>
    %c0_81 = arith.constant 0 : index
    %c0_82 = arith.constant 0 : index
    %77 = vector.load %arg6[%c0_81, %c0_82] : memref<16x128xf32, #tpu.memory_space<vmem>>, vector<16x128xf32>
    tpu.vector_store %arg6[%c0_81, %c0_82], %76 {strides = array<i32>} : memref<16x128xf32, #tpu.memory_space<vmem>>, vector<16x128xf32>,
    %c0_83 = arith.constant 0 : index
    %c12 = arith.constant 12 : index
    %c0_84 = arith.constant 0 : index
    %78 = vector.load %arg1[%c0_83, %c12, %c0_84] : memref<1x32x128xf32, #tpu.memory_space<vmem>>, vector<1x16x128xf32>
    %79 = vector.shape_cast %78 : vector<1x16x128xf32> to vector<16x128xf32>
    %c0_85 = arith.constant 0 : index
    %c0_86 = arith.constant 0 : index
    %80 = vector.load %arg6[%c0_85, %c0_86] : memref<16x128xf32, #tpu.memory_space<vmem>>, vector<16x128xf32>
    %c7_87 = arith.constant 7 : index
    %c0_88 = arith.constant 0 : index
    %c0_89 = arith.constant 0 : index
    %81 = vector.load %arg2[%c7_87, %c0_88, %c0_89] : memref<9x128x128xf32, #tpu.memory_space<vmem>>, vector<1x128x128xf32>
    %82 = vector.shape_cast %81 : vector<1x128x128xf32> to vector<128x128xf32>
    %cst_90 = arith.constant dense<0.000000e+00> : vector<16x128xf32>
    %83 = tpu.matmul %79, %82, %cst_90 {dimension_numbers = #tpu.dot_dimension_numbers<[1], [0], [0], [1], [0, 0, 1, 1], [], []>} : vector<16x128xf32>, vector<128x128xf32>, vector<16x128xf32> -> vector<16x128xf32>
    %84 = arith.addf %80, %83 : vector<16x128xf32>
    %c0_91 = arith.constant 0 : index
    %c0_92 = arith.constant 0 : index
    %85 = vector.load %arg6[%c0_91, %c0_92] : memref<16x128xf32, #tpu.memory_space<vmem>>, vector<16x128xf32>
    tpu.vector_store %arg6[%c0_91, %c0_92], %84 {strides = array<i32>} : memref<16x128xf32, #tpu.memory_space<vmem>>, vector<16x128xf32>,
    %c0_93 = arith.constant 0 : index
    %c13 = arith.constant 13 : index
    %c0_94 = arith.constant 0 : index
    %86 = vector.load %arg1[%c0_93, %c13, %c0_94] : memref<1x32x128xf32, #tpu.memory_space<vmem>>, vector<1x16x128xf32>
    %87 = vector.shape_cast %86 : vector<1x16x128xf32> to vector<16x128xf32>
    %c1_95 = arith.constant 1 : index
    %c0_96 = arith.constant 0 : index
    %c0_97 = arith.constant 0 : index
    %88 = vector.load %arg4[%c1_95, %c0_96, %c0_97] : memref<2x16x1xf32, #tpu.memory_space<vmem>>, vector<1x16x1xf32>
    %89 = vector.shape_cast %88 : vector<1x16x1xf32> to vector<16x1xf32>
    %90 = vector.broadcast %89 : vector<16x1xf32> to vector<16x128xf32>
    %91 = arith.mulf %87, %90 : vector<16x128xf32>
    %c0_98 = arith.constant 0 : index
    %c0_99 = arith.constant 0 : index
    %92 = vector.load %arg6[%c0_98, %c0_99] : memref<16x128xf32, #tpu.memory_space<vmem>>, vector<16x128xf32>
    %c8_100 = arith.constant 8 : index
    %c0_101 = arith.constant 0 : index
    %c0_102 = arith.constant 0 : index
    %93 = vector.load %arg2[%c8_100, %c0_101, %c0_102] : memref<9x128x128xf32, #tpu.memory_space<vmem>>, vector<1x128x128xf32>
    %94 = vector.shape_cast %93 : vector<1x128x128xf32> to vector<128x128xf32>
    %cst_103 = arith.constant dense<0.000000e+00> : vector<16x128xf32>
    %95 = tpu.matmul %91, %94, %cst_103 {dimension_numbers = #tpu.dot_dimension_numbers<[1], [0], [0], [1], [0, 0, 1, 1], [], []>} : vector<16x128xf32>, vector<128x128xf32>, vector<16x128xf32> -> vector<16x128xf32>
    %96 = arith.addf %92, %95 : vector<16x128xf32>
    %c0_104 = arith.constant 0 : index
    %c0_105 = arith.constant 0 : index
    %97 = vector.load %arg6[%c0_104, %c0_105] : memref<16x128xf32, #tpu.memory_space<vmem>>, vector<16x128xf32>
    tpu.vector_store %arg6[%c0_104, %c0_105], %96 {strides = array<i32>} : memref<16x128xf32, #tpu.memory_space<vmem>>, vector<16x128xf32>,
    %c0_106 = arith.constant 0 : index
    %c0_107 = arith.constant 0 : index
    %98 = vector.load %arg6[%c0_106, %c0_107] : memref<16x128xf32, #tpu.memory_space<vmem>>, vector<16x128xf32>
    %c0_108 = arith.constant 0 : index
    %c0_109 = arith.constant 0 : index
    %99 = vector.load %arg3[%c0_108, %c0_109] : memref<1x128xf32, #tpu.memory_space<vmem>>, vector<1x128xf32>
    %100 = vector.broadcast %99 : vector<1x128xf32> to vector<16x128xf32>
    %101 = arith.addf %98, %100 : vector<16x128xf32>
    %cst_110 = arith.constant 0.000000e+00 : f32
    %102 = vector.broadcast %cst_110 : f32 to vector<16x128xf32>
    %103 = arith.maximumf %101, %102 : vector<16x128xf32>
    %c0_111 = arith.constant 0 : index
    %c0_112 = arith.constant 0 : index
    %c0_113 = arith.constant 0 : index
    %104 = vector.load %arg5[%c0_111, %c0_112, %c0_113] : memref<1x16x128xf32, #tpu.memory_space<vmem>>, vector<1x16x128xf32>
    %105 = vector.shape_cast %104 : vector<1x16x128xf32> to vector<16x128xf32>
    %106 = vector.shape_cast %103 : vector<16x128xf32> to vector<1x16x128xf32>
    tpu.vector_store %arg5[%c0_111, %c0_112, %c0_113], %106 {strides = array<i32>} : memref<1x16x128xf32, #tpu.memory_space<vmem>>, vector<1x16x128xf32>,
    return
  }
  func.func @transform_0(%arg0: i32) -> (i32, i32, i32) {
    %c0_i32 = arith.constant 0 : i32
    %c0_i32_0 = arith.constant 0 : i32
    %c0_i32_1 = arith.constant 0 : i32
    return %arg0, %c0_i32, %c0_i32_0 : i32, i32, i32
  }
  func.func @transform_1(%arg0: i32) -> (i32, i32, i32) {
    %c0_i32 = arith.constant 0 : i32
    %c0_i32_0 = arith.constant 0 : i32
    %c0_i32_1 = arith.constant 0 : i32
    %c0_i32_2 = arith.constant 0 : i32
    return %c0_i32, %c0_i32_0, %c0_i32_1 : i32, i32, i32
  }
  func.func @transform_2(%arg0: i32) -> (i32, i32) {
    %c0_i32 = arith.constant 0 : i32
    %c0_i32_0 = arith.constant 0 : i32
    %c0_i32_1 = arith.constant 0 : i32
    return %c0_i32, %c0_i32_0 : i32, i32
  }
  func.func @transform_3(%arg0: i32) -> (i32, i32, i32) {
    %c0_i32 = arith.constant 0 : i32
    %c0_i32_0 = arith.constant 0 : i32
    %c0_i32_1 = arith.constant 0 : i32
    %c0_i32_2 = arith.constant 0 : i32
    return %c0_i32, %c0_i32_0, %c0_i32_1 : i32, i32, i32
  }
  func.func @transform_4(%arg0: i32) -> (i32, i32, i32) {
    %c0_i32 = arith.constant 0 : i32
    %c0_i32_0 = arith.constant 0 : i32
    %c0_i32_1 = arith.constant 0 : i32
    return %arg0, %c0_i32, %c0_i32_0 : i32, i32, i32
  }
}

module attributes {stable_mosaic.version = 11 : i64} {
  func.func @_conv3x3_kernel(%arg0: i32, %arg1: memref<1x96x8xf32, #tpu.memory_space<vmem>>, %arg2: memref<9x8x128xf32, #tpu.memory_space<vmem>>, %arg3: memref<1x128xf32, #tpu.memory_space<vmem>>, %arg4: memref<2x64x1xf32, #tpu.memory_space<vmem>>, %arg5: memref<1x64x128xf32, #tpu.memory_space<vmem>>, %arg6: memref<64x128xf32, #tpu.memory_space<vmem>>) attributes {dimension_semantics = [#tpu.dimension_semantics<parallel>], iteration_bounds = array<i64: 2>, scalar_prefetch = 0 : i64, scratch_operands = 1 : i64, tpu.core_type = #tpu.core_type<tc>, window_params = [{transform_indices = @transform_0, window_bounds = array<i64: 1, 96, 8>}, {pipeline_mode = #tpu.pipeline_mode<synchronous>, transform_indices = @transform_1, window_bounds = array<i64: 9, 8, 128>}, {pipeline_mode = #tpu.pipeline_mode<synchronous>, transform_indices = @transform_2, window_bounds = array<i64: 1, 128>}, {pipeline_mode = #tpu.pipeline_mode<synchronous>, transform_indices = @transform_3, window_bounds = array<i64: 2, 64, 1>}, {transform_indices = @transform_4, window_bounds = array<i64: 1, 64, 128>}]} {
    %cst = arith.constant 0.000000e+00 : f32
    %0 = vector.broadcast %cst : f32 to vector<64x128xf32>
    %c0 = arith.constant 0 : index
    %c0_0 = arith.constant 0 : index
    %1 = vector.load %arg6[%c0, %c0_0] : memref<64x128xf32, #tpu.memory_space<vmem>>, vector<64x128xf32>
    tpu.vector_store %arg6[%c0, %c0_0], %0 {strides = array<i32>} : memref<64x128xf32, #tpu.memory_space<vmem>>, vector<64x128xf32>,
    %c0_1 = arith.constant 0 : index
    %c7 = arith.constant 7 : index
    %c0_2 = arith.constant 0 : index
    %2 = vector.load %arg1[%c0_1, %c7, %c0_2] : memref<1x96x8xf32, #tpu.memory_space<vmem>>, vector<1x64x8xf32>
    %3 = vector.shape_cast %2 : vector<1x64x8xf32> to vector<64x8xf32>
    %c0_3 = arith.constant 0 : index
    %c0_4 = arith.constant 0 : index
    %c0_5 = arith.constant 0 : index
    %4 = vector.load %arg4[%c0_3, %c0_4, %c0_5] : memref<2x64x1xf32, #tpu.memory_space<vmem>>, vector<1x64x1xf32>
    %5 = vector.shape_cast %4 : vector<1x64x1xf32> to vector<64x1xf32>
    %6 = vector.broadcast %5 : vector<64x1xf32> to vector<64x8xf32>
    %7 = arith.mulf %3, %6 : vector<64x8xf32>
    %c0_6 = arith.constant 0 : index
    %c0_7 = arith.constant 0 : index
    %8 = vector.load %arg6[%c0_6, %c0_7] : memref<64x128xf32, #tpu.memory_space<vmem>>, vector<64x128xf32>
    %c0_8 = arith.constant 0 : index
    %c0_9 = arith.constant 0 : index
    %c0_10 = arith.constant 0 : index
    %9 = vector.load %arg2[%c0_8, %c0_9, %c0_10] : memref<9x8x128xf32, #tpu.memory_space<vmem>>, vector<1x8x128xf32>
    %10 = vector.shape_cast %9 : vector<1x8x128xf32> to vector<8x128xf32>
    %cst_11 = arith.constant dense<0.000000e+00> : vector<64x128xf32>
    %11 = tpu.matmul %7, %10, %cst_11 {dimension_numbers = #tpu.dot_dimension_numbers<[1], [0], [0], [1], [0, 0, 1, 1], [], []>} : vector<64x8xf32>, vector<8x128xf32>, vector<64x128xf32> -> vector<64x128xf32>
    %12 = arith.addf %8, %11 : vector<64x128xf32>
    %c0_12 = arith.constant 0 : index
    %c0_13 = arith.constant 0 : index
    %13 = vector.load %arg6[%c0_12, %c0_13] : memref<64x128xf32, #tpu.memory_space<vmem>>, vector<64x128xf32>
    tpu.vector_store %arg6[%c0_12, %c0_13], %12 {strides = array<i32>} : memref<64x128xf32, #tpu.memory_space<vmem>>, vector<64x128xf32>,
    %c0_14 = arith.constant 0 : index
    %c8 = arith.constant 8 : index
    %c0_15 = arith.constant 0 : index
    %14 = vector.load %arg1[%c0_14, %c8, %c0_15] : memref<1x96x8xf32, #tpu.memory_space<vmem>>, vector<1x64x8xf32>
    %15 = vector.shape_cast %14 : vector<1x64x8xf32> to vector<64x8xf32>
    %c0_16 = arith.constant 0 : index
    %c0_17 = arith.constant 0 : index
    %16 = vector.load %arg6[%c0_16, %c0_17] : memref<64x128xf32, #tpu.memory_space<vmem>>, vector<64x128xf32>
    %c1 = arith.constant 1 : index
    %c0_18 = arith.constant 0 : index
    %c0_19 = arith.constant 0 : index
    %17 = vector.load %arg2[%c1, %c0_18, %c0_19] : memref<9x8x128xf32, #tpu.memory_space<vmem>>, vector<1x8x128xf32>
    %18 = vector.shape_cast %17 : vector<1x8x128xf32> to vector<8x128xf32>
    %cst_20 = arith.constant dense<0.000000e+00> : vector<64x128xf32>
    %19 = tpu.matmul %15, %18, %cst_20 {dimension_numbers = #tpu.dot_dimension_numbers<[1], [0], [0], [1], [0, 0, 1, 1], [], []>} : vector<64x8xf32>, vector<8x128xf32>, vector<64x128xf32> -> vector<64x128xf32>
    %20 = arith.addf %16, %19 : vector<64x128xf32>
    %c0_21 = arith.constant 0 : index
    %c0_22 = arith.constant 0 : index
    %21 = vector.load %arg6[%c0_21, %c0_22] : memref<64x128xf32, #tpu.memory_space<vmem>>, vector<64x128xf32>
    tpu.vector_store %arg6[%c0_21, %c0_22], %20 {strides = array<i32>} : memref<64x128xf32, #tpu.memory_space<vmem>>, vector<64x128xf32>,
    %c0_23 = arith.constant 0 : index
    %c9 = arith.constant 9 : index
    %c0_24 = arith.constant 0 : index
    %22 = vector.load %arg1[%c0_23, %c9, %c0_24] : memref<1x96x8xf32, #tpu.memory_space<vmem>>, vector<1x64x8xf32>
    %23 = vector.shape_cast %22 : vector<1x64x8xf32> to vector<64x8xf32>
    %c1_25 = arith.constant 1 : index
    %c0_26 = arith.constant 0 : index
    %c0_27 = arith.constant 0 : index
    %24 = vector.load %arg4[%c1_25, %c0_26, %c0_27] : memref<2x64x1xf32, #tpu.memory_space<vmem>>, vector<1x64x1xf32>
    %25 = vector.shape_cast %24 : vector<1x64x1xf32> to vector<64x1xf32>
    %26 = vector.broadcast %25 : vector<64x1xf32> to vector<64x8xf32>
    %27 = arith.mulf %23, %26 : vector<64x8xf32>
    %c0_28 = arith.constant 0 : index
    %c0_29 = arith.constant 0 : index
    %28 = vector.load %arg6[%c0_28, %c0_29] : memref<64x128xf32, #tpu.memory_space<vmem>>, vector<64x128xf32>
    %c2 = arith.constant 2 : index
    %c0_30 = arith.constant 0 : index
    %c0_31 = arith.constant 0 : index
    %29 = vector.load %arg2[%c2, %c0_30, %c0_31] : memref<9x8x128xf32, #tpu.memory_space<vmem>>, vector<1x8x128xf32>
    %30 = vector.shape_cast %29 : vector<1x8x128xf32> to vector<8x128xf32>
    %cst_32 = arith.constant dense<0.000000e+00> : vector<64x128xf32>
    %31 = tpu.matmul %27, %30, %cst_32 {dimension_numbers = #tpu.dot_dimension_numbers<[1], [0], [0], [1], [0, 0, 1, 1], [], []>} : vector<64x8xf32>, vector<8x128xf32>, vector<64x128xf32> -> vector<64x128xf32>
    %32 = arith.addf %28, %31 : vector<64x128xf32>
    %c0_33 = arith.constant 0 : index
    %c0_34 = arith.constant 0 : index
    %33 = vector.load %arg6[%c0_33, %c0_34] : memref<64x128xf32, #tpu.memory_space<vmem>>, vector<64x128xf32>
    tpu.vector_store %arg6[%c0_33, %c0_34], %32 {strides = array<i32>} : memref<64x128xf32, #tpu.memory_space<vmem>>, vector<64x128xf32>,
    %c0_35 = arith.constant 0 : index
    %c15 = arith.constant 15 : index
    %c0_36 = arith.constant 0 : index
    %34 = vector.load %arg1[%c0_35, %c15, %c0_36] : memref<1x96x8xf32, #tpu.memory_space<vmem>>, vector<1x64x8xf32>
    %35 = vector.shape_cast %34 : vector<1x64x8xf32> to vector<64x8xf32>
    %c0_37 = arith.constant 0 : index
    %c0_38 = arith.constant 0 : index
    %c0_39 = arith.constant 0 : index
    %36 = vector.load %arg4[%c0_37, %c0_38, %c0_39] : memref<2x64x1xf32, #tpu.memory_space<vmem>>, vector<1x64x1xf32>
    %37 = vector.shape_cast %36 : vector<1x64x1xf32> to vector<64x1xf32>
    %38 = vector.broadcast %37 : vector<64x1xf32> to vector<64x8xf32>
    %39 = arith.mulf %35, %38 : vector<64x8xf32>
    %c0_40 = arith.constant 0 : index
    %c0_41 = arith.constant 0 : index
    %40 = vector.load %arg6[%c0_40, %c0_41] : memref<64x128xf32, #tpu.memory_space<vmem>>, vector<64x128xf32>
    %c3 = arith.constant 3 : index
    %c0_42 = arith.constant 0 : index
    %c0_43 = arith.constant 0 : index
    %41 = vector.load %arg2[%c3, %c0_42, %c0_43] : memref<9x8x128xf32, #tpu.memory_space<vmem>>, vector<1x8x128xf32>
    %42 = vector.shape_cast %41 : vector<1x8x128xf32> to vector<8x128xf32>
    %cst_44 = arith.constant dense<0.000000e+00> : vector<64x128xf32>
    %43 = tpu.matmul %39, %42, %cst_44 {dimension_numbers = #tpu.dot_dimension_numbers<[1], [0], [0], [1], [0, 0, 1, 1], [], []>} : vector<64x8xf32>, vector<8x128xf32>, vector<64x128xf32> -> vector<64x128xf32>
    %44 = arith.addf %40, %43 : vector<64x128xf32>
    %c0_45 = arith.constant 0 : index
    %c0_46 = arith.constant 0 : index
    %45 = vector.load %arg6[%c0_45, %c0_46] : memref<64x128xf32, #tpu.memory_space<vmem>>, vector<64x128xf32>
    tpu.vector_store %arg6[%c0_45, %c0_46], %44 {strides = array<i32>} : memref<64x128xf32, #tpu.memory_space<vmem>>, vector<64x128xf32>,
    %c0_47 = arith.constant 0 : index
    %c16 = arith.constant 16 : index
    %c0_48 = arith.constant 0 : index
    %46 = vector.load %arg1[%c0_47, %c16, %c0_48] : memref<1x96x8xf32, #tpu.memory_space<vmem>>, vector<1x64x8xf32>
    %47 = vector.shape_cast %46 : vector<1x64x8xf32> to vector<64x8xf32>
    %c0_49 = arith.constant 0 : index
    %c0_50 = arith.constant 0 : index
    %48 = vector.load %arg6[%c0_49, %c0_50] : memref<64x128xf32, #tpu.memory_space<vmem>>, vector<64x128xf32>
    %c4 = arith.constant 4 : index
    %c0_51 = arith.constant 0 : index
    %c0_52 = arith.constant 0 : index
    %49 = vector.load %arg2[%c4, %c0_51, %c0_52] : memref<9x8x128xf32, #tpu.memory_space<vmem>>, vector<1x8x128xf32>
    %50 = vector.shape_cast %49 : vector<1x8x128xf32> to vector<8x128xf32>
    %cst_53 = arith.constant dense<0.000000e+00> : vector<64x128xf32>
    %51 = tpu.matmul %47, %50, %cst_53 {dimension_numbers = #tpu.dot_dimension_numbers<[1], [0], [0], [1], [0, 0, 1, 1], [], []>} : vector<64x8xf32>, vector<8x128xf32>, vector<64x128xf32> -> vector<64x128xf32>
    %52 = arith.addf %48, %51 : vector<64x128xf32>
    %c0_54 = arith.constant 0 : index
    %c0_55 = arith.constant 0 : index
    %53 = vector.load %arg6[%c0_54, %c0_55] : memref<64x128xf32, #tpu.memory_space<vmem>>, vector<64x128xf32>
    tpu.vector_store %arg6[%c0_54, %c0_55], %52 {strides = array<i32>} : memref<64x128xf32, #tpu.memory_space<vmem>>, vector<64x128xf32>,
    %c0_56 = arith.constant 0 : index
    %c17 = arith.constant 17 : index
    %c0_57 = arith.constant 0 : index
    %54 = vector.load %arg1[%c0_56, %c17, %c0_57] : memref<1x96x8xf32, #tpu.memory_space<vmem>>, vector<1x64x8xf32>
    %55 = vector.shape_cast %54 : vector<1x64x8xf32> to vector<64x8xf32>
    %c1_58 = arith.constant 1 : index
    %c0_59 = arith.constant 0 : index
    %c0_60 = arith.constant 0 : index
    %56 = vector.load %arg4[%c1_58, %c0_59, %c0_60] : memref<2x64x1xf32, #tpu.memory_space<vmem>>, vector<1x64x1xf32>
    %57 = vector.shape_cast %56 : vector<1x64x1xf32> to vector<64x1xf32>
    %58 = vector.broadcast %57 : vector<64x1xf32> to vector<64x8xf32>
    %59 = arith.mulf %55, %58 : vector<64x8xf32>
    %c0_61 = arith.constant 0 : index
    %c0_62 = arith.constant 0 : index
    %60 = vector.load %arg6[%c0_61, %c0_62] : memref<64x128xf32, #tpu.memory_space<vmem>>, vector<64x128xf32>
    %c5 = arith.constant 5 : index
    %c0_63 = arith.constant 0 : index
    %c0_64 = arith.constant 0 : index
    %61 = vector.load %arg2[%c5, %c0_63, %c0_64] : memref<9x8x128xf32, #tpu.memory_space<vmem>>, vector<1x8x128xf32>
    %62 = vector.shape_cast %61 : vector<1x8x128xf32> to vector<8x128xf32>
    %cst_65 = arith.constant dense<0.000000e+00> : vector<64x128xf32>
    %63 = tpu.matmul %59, %62, %cst_65 {dimension_numbers = #tpu.dot_dimension_numbers<[1], [0], [0], [1], [0, 0, 1, 1], [], []>} : vector<64x8xf32>, vector<8x128xf32>, vector<64x128xf32> -> vector<64x128xf32>
    %64 = arith.addf %60, %63 : vector<64x128xf32>
    %c0_66 = arith.constant 0 : index
    %c0_67 = arith.constant 0 : index
    %65 = vector.load %arg6[%c0_66, %c0_67] : memref<64x128xf32, #tpu.memory_space<vmem>>, vector<64x128xf32>
    tpu.vector_store %arg6[%c0_66, %c0_67], %64 {strides = array<i32>} : memref<64x128xf32, #tpu.memory_space<vmem>>, vector<64x128xf32>,
    %c0_68 = arith.constant 0 : index
    %c23 = arith.constant 23 : index
    %c0_69 = arith.constant 0 : index
    %66 = vector.load %arg1[%c0_68, %c23, %c0_69] : memref<1x96x8xf32, #tpu.memory_space<vmem>>, vector<1x64x8xf32>
    %67 = vector.shape_cast %66 : vector<1x64x8xf32> to vector<64x8xf32>
    %c0_70 = arith.constant 0 : index
    %c0_71 = arith.constant 0 : index
    %c0_72 = arith.constant 0 : index
    %68 = vector.load %arg4[%c0_70, %c0_71, %c0_72] : memref<2x64x1xf32, #tpu.memory_space<vmem>>, vector<1x64x1xf32>
    %69 = vector.shape_cast %68 : vector<1x64x1xf32> to vector<64x1xf32>
    %70 = vector.broadcast %69 : vector<64x1xf32> to vector<64x8xf32>
    %71 = arith.mulf %67, %70 : vector<64x8xf32>
    %c0_73 = arith.constant 0 : index
    %c0_74 = arith.constant 0 : index
    %72 = vector.load %arg6[%c0_73, %c0_74] : memref<64x128xf32, #tpu.memory_space<vmem>>, vector<64x128xf32>
    %c6 = arith.constant 6 : index
    %c0_75 = arith.constant 0 : index
    %c0_76 = arith.constant 0 : index
    %73 = vector.load %arg2[%c6, %c0_75, %c0_76] : memref<9x8x128xf32, #tpu.memory_space<vmem>>, vector<1x8x128xf32>
    %74 = vector.shape_cast %73 : vector<1x8x128xf32> to vector<8x128xf32>
    %cst_77 = arith.constant dense<0.000000e+00> : vector<64x128xf32>
    %75 = tpu.matmul %71, %74, %cst_77 {dimension_numbers = #tpu.dot_dimension_numbers<[1], [0], [0], [1], [0, 0, 1, 1], [], []>} : vector<64x8xf32>, vector<8x128xf32>, vector<64x128xf32> -> vector<64x128xf32>
    %76 = arith.addf %72, %75 : vector<64x128xf32>
    %c0_78 = arith.constant 0 : index
    %c0_79 = arith.constant 0 : index
    %77 = vector.load %arg6[%c0_78, %c0_79] : memref<64x128xf32, #tpu.memory_space<vmem>>, vector<64x128xf32>
    tpu.vector_store %arg6[%c0_78, %c0_79], %76 {strides = array<i32>} : memref<64x128xf32, #tpu.memory_space<vmem>>, vector<64x128xf32>,
    %c0_80 = arith.constant 0 : index
    %c24 = arith.constant 24 : index
    %c0_81 = arith.constant 0 : index
    %78 = vector.load %arg1[%c0_80, %c24, %c0_81] : memref<1x96x8xf32, #tpu.memory_space<vmem>>, vector<1x64x8xf32>
    %79 = vector.shape_cast %78 : vector<1x64x8xf32> to vector<64x8xf32>
    %c0_82 = arith.constant 0 : index
    %c0_83 = arith.constant 0 : index
    %80 = vector.load %arg6[%c0_82, %c0_83] : memref<64x128xf32, #tpu.memory_space<vmem>>, vector<64x128xf32>
    %c7_84 = arith.constant 7 : index
    %c0_85 = arith.constant 0 : index
    %c0_86 = arith.constant 0 : index
    %81 = vector.load %arg2[%c7_84, %c0_85, %c0_86] : memref<9x8x128xf32, #tpu.memory_space<vmem>>, vector<1x8x128xf32>
    %82 = vector.shape_cast %81 : vector<1x8x128xf32> to vector<8x128xf32>
    %cst_87 = arith.constant dense<0.000000e+00> : vector<64x128xf32>
    %83 = tpu.matmul %79, %82, %cst_87 {dimension_numbers = #tpu.dot_dimension_numbers<[1], [0], [0], [1], [0, 0, 1, 1], [], []>} : vector<64x8xf32>, vector<8x128xf32>, vector<64x128xf32> -> vector<64x128xf32>
    %84 = arith.addf %80, %83 : vector<64x128xf32>
    %c0_88 = arith.constant 0 : index
    %c0_89 = arith.constant 0 : index
    %85 = vector.load %arg6[%c0_88, %c0_89] : memref<64x128xf32, #tpu.memory_space<vmem>>, vector<64x128xf32>
    tpu.vector_store %arg6[%c0_88, %c0_89], %84 {strides = array<i32>} : memref<64x128xf32, #tpu.memory_space<vmem>>, vector<64x128xf32>,
    %c0_90 = arith.constant 0 : index
    %c25 = arith.constant 25 : index
    %c0_91 = arith.constant 0 : index
    %86 = vector.load %arg1[%c0_90, %c25, %c0_91] : memref<1x96x8xf32, #tpu.memory_space<vmem>>, vector<1x64x8xf32>
    %87 = vector.shape_cast %86 : vector<1x64x8xf32> to vector<64x8xf32>
    %c1_92 = arith.constant 1 : index
    %c0_93 = arith.constant 0 : index
    %c0_94 = arith.constant 0 : index
    %88 = vector.load %arg4[%c1_92, %c0_93, %c0_94] : memref<2x64x1xf32, #tpu.memory_space<vmem>>, vector<1x64x1xf32>
    %89 = vector.shape_cast %88 : vector<1x64x1xf32> to vector<64x1xf32>
    %90 = vector.broadcast %89 : vector<64x1xf32> to vector<64x8xf32>
    %91 = arith.mulf %87, %90 : vector<64x8xf32>
    %c0_95 = arith.constant 0 : index
    %c0_96 = arith.constant 0 : index
    %92 = vector.load %arg6[%c0_95, %c0_96] : memref<64x128xf32, #tpu.memory_space<vmem>>, vector<64x128xf32>
    %c8_97 = arith.constant 8 : index
    %c0_98 = arith.constant 0 : index
    %c0_99 = arith.constant 0 : index
    %93 = vector.load %arg2[%c8_97, %c0_98, %c0_99] : memref<9x8x128xf32, #tpu.memory_space<vmem>>, vector<1x8x128xf32>
    %94 = vector.shape_cast %93 : vector<1x8x128xf32> to vector<8x128xf32>
    %cst_100 = arith.constant dense<0.000000e+00> : vector<64x128xf32>
    %95 = tpu.matmul %91, %94, %cst_100 {dimension_numbers = #tpu.dot_dimension_numbers<[1], [0], [0], [1], [0, 0, 1, 1], [], []>} : vector<64x8xf32>, vector<8x128xf32>, vector<64x128xf32> -> vector<64x128xf32>
    %96 = arith.addf %92, %95 : vector<64x128xf32>
    %c0_101 = arith.constant 0 : index
    %c0_102 = arith.constant 0 : index
    %97 = vector.load %arg6[%c0_101, %c0_102] : memref<64x128xf32, #tpu.memory_space<vmem>>, vector<64x128xf32>
    tpu.vector_store %arg6[%c0_101, %c0_102], %96 {strides = array<i32>} : memref<64x128xf32, #tpu.memory_space<vmem>>, vector<64x128xf32>,
    %c0_103 = arith.constant 0 : index
    %c0_104 = arith.constant 0 : index
    %98 = vector.load %arg6[%c0_103, %c0_104] : memref<64x128xf32, #tpu.memory_space<vmem>>, vector<64x128xf32>
    %c0_105 = arith.constant 0 : index
    %c0_106 = arith.constant 0 : index
    %99 = vector.load %arg3[%c0_105, %c0_106] : memref<1x128xf32, #tpu.memory_space<vmem>>, vector<1x128xf32>
    %100 = vector.broadcast %99 : vector<1x128xf32> to vector<64x128xf32>
    %101 = arith.addf %98, %100 : vector<64x128xf32>
    %cst_107 = arith.constant 0.000000e+00 : f32
    %102 = vector.broadcast %cst_107 : f32 to vector<64x128xf32>
    %103 = arith.maximumf %101, %102 : vector<64x128xf32>
    %c0_108 = arith.constant 0 : index
    %c0_109 = arith.constant 0 : index
    %c0_110 = arith.constant 0 : index
    %104 = vector.load %arg5[%c0_108, %c0_109, %c0_110] : memref<1x64x128xf32, #tpu.memory_space<vmem>>, vector<1x64x128xf32>
    %105 = vector.shape_cast %104 : vector<1x64x128xf32> to vector<64x128xf32>
    %106 = vector.shape_cast %103 : vector<64x128xf32> to vector<1x64x128xf32>
    tpu.vector_store %arg5[%c0_108, %c0_109, %c0_110], %106 {strides = array<i32>} : memref<1x64x128xf32, #tpu.memory_space<vmem>>, vector<1x64x128xf32>,
    return
  }
  func.func @transform_0(%arg0: i32) -> (i32, i32, i32) {
    %c0_i32 = arith.constant 0 : i32
    %c0_i32_0 = arith.constant 0 : i32
    %c0_i32_1 = arith.constant 0 : i32
    return %arg0, %c0_i32, %c0_i32_0 : i32, i32, i32
  }
  func.func @transform_1(%arg0: i32) -> (i32, i32, i32) {
    %c0_i32 = arith.constant 0 : i32
    %c0_i32_0 = arith.constant 0 : i32
    %c0_i32_1 = arith.constant 0 : i32
    %c0_i32_2 = arith.constant 0 : i32
    return %c0_i32, %c0_i32_0, %c0_i32_1 : i32, i32, i32
  }
  func.func @transform_2(%arg0: i32) -> (i32, i32) {
    %c0_i32 = arith.constant 0 : i32
    %c0_i32_0 = arith.constant 0 : i32
    %c0_i32_1 = arith.constant 0 : i32
    return %c0_i32, %c0_i32_0 : i32, i32
  }
  func.func @transform_3(%arg0: i32) -> (i32, i32, i32) {
    %c0_i32 = arith.constant 0 : i32
    %c0_i32_0 = arith.constant 0 : i32
    %c0_i32_1 = arith.constant 0 : i32
    %c0_i32_2 = arith.constant 0 : i32
    return %c0_i32, %c0_i32_0, %c0_i32_1 : i32, i32, i32
  }
  func.func @transform_4(%arg0: i32) -> (i32, i32, i32) {
    %c0_i32 = arith.constant 0 : i32
    %c0_i32_0 = arith.constant 0 : i32
    %c0_i32_1 = arith.constant 0 : i32
    return %arg0, %c0_i32, %c0_i32_0 : i32, i32, i32
  }
}

module attributes {stable_mosaic.version = 11 : i64} {
  func.func @_conv3x3_kernel(%arg0: i32, %arg1: memref<1x12x128xf32, #tpu.memory_space<vmem>>, %arg2: memref<9x128x128xf32, #tpu.memory_space<vmem>>, %arg3: memref<1x128xf32, #tpu.memory_space<vmem>>, %arg4: memref<2x4x1xf32, #tpu.memory_space<vmem>>, %arg5: memref<1x4x128xf32, #tpu.memory_space<vmem>>, %arg6: memref<4x128xf32, #tpu.memory_space<vmem>>) attributes {dimension_semantics = [#tpu.dimension_semantics<parallel>], iteration_bounds = array<i64: 2>, scalar_prefetch = 0 : i64, scratch_operands = 1 : i64, tpu.core_type = #tpu.core_type<tc>, window_params = [{transform_indices = @transform_0, window_bounds = array<i64: 1, 12, 128>}, {pipeline_mode = #tpu.pipeline_mode<synchronous>, transform_indices = @transform_1, window_bounds = array<i64: 9, 128, 128>}, {pipeline_mode = #tpu.pipeline_mode<synchronous>, transform_indices = @transform_2, window_bounds = array<i64: 1, 128>}, {pipeline_mode = #tpu.pipeline_mode<synchronous>, transform_indices = @transform_3, window_bounds = array<i64: 2, 4, 1>}, {transform_indices = @transform_4, window_bounds = array<i64: 1, 4, 128>}]} {
    %cst = arith.constant 0.000000e+00 : f32
    %0 = vector.broadcast %cst : f32 to vector<4x128xf32>
    %c0 = arith.constant 0 : index
    %c0_0 = arith.constant 0 : index
    %1 = vector.load %arg6[%c0, %c0_0] : memref<4x128xf32, #tpu.memory_space<vmem>>, vector<4x128xf32>
    tpu.vector_store %arg6[%c0, %c0_0], %0 {strides = array<i32>} : memref<4x128xf32, #tpu.memory_space<vmem>>, vector<4x128xf32>,
    %c0_1 = arith.constant 0 : index
    %c1 = arith.constant 1 : index
    %c0_2 = arith.constant 0 : index
    %2 = vector.load %arg1[%c0_1, %c1, %c0_2] : memref<1x12x128xf32, #tpu.memory_space<vmem>>, vector<1x4x128xf32>
    %3 = vector.shape_cast %2 : vector<1x4x128xf32> to vector<4x128xf32>
    %c0_3 = arith.constant 0 : index
    %c0_4 = arith.constant 0 : index
    %c0_5 = arith.constant 0 : index
    %4 = vector.load %arg4[%c0_3, %c0_4, %c0_5] : memref<2x4x1xf32, #tpu.memory_space<vmem>>, vector<1x4x1xf32>
    %5 = vector.shape_cast %4 : vector<1x4x1xf32> to vector<4x1xf32>
    %6 = vector.broadcast %5 : vector<4x1xf32> to vector<4x128xf32>
    %7 = arith.mulf %3, %6 : vector<4x128xf32>
    %c0_6 = arith.constant 0 : index
    %c0_7 = arith.constant 0 : index
    %8 = vector.load %arg6[%c0_6, %c0_7] : memref<4x128xf32, #tpu.memory_space<vmem>>, vector<4x128xf32>
    %c0_8 = arith.constant 0 : index
    %c0_9 = arith.constant 0 : index
    %c0_10 = arith.constant 0 : index
    %9 = vector.load %arg2[%c0_8, %c0_9, %c0_10] : memref<9x128x128xf32, #tpu.memory_space<vmem>>, vector<1x128x128xf32>
    %10 = vector.shape_cast %9 : vector<1x128x128xf32> to vector<128x128xf32>
    %cst_11 = arith.constant dense<0.000000e+00> : vector<4x128xf32>
    %11 = tpu.matmul %7, %10, %cst_11 {dimension_numbers = #tpu.dot_dimension_numbers<[1], [0], [0], [1], [0, 0, 1, 1], [], []>} : vector<4x128xf32>, vector<128x128xf32>, vector<4x128xf32> -> vector<4x128xf32>
    %12 = arith.addf %8, %11 : vector<4x128xf32>
    %c0_12 = arith.constant 0 : index
    %c0_13 = arith.constant 0 : index
    %13 = vector.load %arg6[%c0_12, %c0_13] : memref<4x128xf32, #tpu.memory_space<vmem>>, vector<4x128xf32>
    tpu.vector_store %arg6[%c0_12, %c0_13], %12 {strides = array<i32>} : memref<4x128xf32, #tpu.memory_space<vmem>>, vector<4x128xf32>,
    %c0_14 = arith.constant 0 : index
    %c2 = arith.constant 2 : index
    %c0_15 = arith.constant 0 : index
    %14 = vector.load %arg1[%c0_14, %c2, %c0_15] : memref<1x12x128xf32, #tpu.memory_space<vmem>>, vector<1x4x128xf32>
    %15 = vector.shape_cast %14 : vector<1x4x128xf32> to vector<4x128xf32>
    %c0_16 = arith.constant 0 : index
    %c0_17 = arith.constant 0 : index
    %16 = vector.load %arg6[%c0_16, %c0_17] : memref<4x128xf32, #tpu.memory_space<vmem>>, vector<4x128xf32>
    %c1_18 = arith.constant 1 : index
    %c0_19 = arith.constant 0 : index
    %c0_20 = arith.constant 0 : index
    %17 = vector.load %arg2[%c1_18, %c0_19, %c0_20] : memref<9x128x128xf32, #tpu.memory_space<vmem>>, vector<1x128x128xf32>
    %18 = vector.shape_cast %17 : vector<1x128x128xf32> to vector<128x128xf32>
    %cst_21 = arith.constant dense<0.000000e+00> : vector<4x128xf32>
    %19 = tpu.matmul %15, %18, %cst_21 {dimension_numbers = #tpu.dot_dimension_numbers<[1], [0], [0], [1], [0, 0, 1, 1], [], []>} : vector<4x128xf32>, vector<128x128xf32>, vector<4x128xf32> -> vector<4x128xf32>
    %20 = arith.addf %16, %19 : vector<4x128xf32>
    %c0_22 = arith.constant 0 : index
    %c0_23 = arith.constant 0 : index
    %21 = vector.load %arg6[%c0_22, %c0_23] : memref<4x128xf32, #tpu.memory_space<vmem>>, vector<4x128xf32>
    tpu.vector_store %arg6[%c0_22, %c0_23], %20 {strides = array<i32>} : memref<4x128xf32, #tpu.memory_space<vmem>>, vector<4x128xf32>,
    %c0_24 = arith.constant 0 : index
    %c3 = arith.constant 3 : index
    %c0_25 = arith.constant 0 : index
    %22 = vector.load %arg1[%c0_24, %c3, %c0_25] : memref<1x12x128xf32, #tpu.memory_space<vmem>>, vector<1x4x128xf32>
    %23 = vector.shape_cast %22 : vector<1x4x128xf32> to vector<4x128xf32>
    %c1_26 = arith.constant 1 : index
    %c0_27 = arith.constant 0 : index
    %c0_28 = arith.constant 0 : index
    %24 = vector.load %arg4[%c1_26, %c0_27, %c0_28] : memref<2x4x1xf32, #tpu.memory_space<vmem>>, vector<1x4x1xf32>
    %25 = vector.shape_cast %24 : vector<1x4x1xf32> to vector<4x1xf32>
    %26 = vector.broadcast %25 : vector<4x1xf32> to vector<4x128xf32>
    %27 = arith.mulf %23, %26 : vector<4x128xf32>
    %c0_29 = arith.constant 0 : index
    %c0_30 = arith.constant 0 : index
    %28 = vector.load %arg6[%c0_29, %c0_30] : memref<4x128xf32, #tpu.memory_space<vmem>>, vector<4x128xf32>
    %c2_31 = arith.constant 2 : index
    %c0_32 = arith.constant 0 : index
    %c0_33 = arith.constant 0 : index
    %29 = vector.load %arg2[%c2_31, %c0_32, %c0_33] : memref<9x128x128xf32, #tpu.memory_space<vmem>>, vector<1x128x128xf32>
    %30 = vector.shape_cast %29 : vector<1x128x128xf32> to vector<128x128xf32>
    %cst_34 = arith.constant dense<0.000000e+00> : vector<4x128xf32>
    %31 = tpu.matmul %27, %30, %cst_34 {dimension_numbers = #tpu.dot_dimension_numbers<[1], [0], [0], [1], [0, 0, 1, 1], [], []>} : vector<4x128xf32>, vector<128x128xf32>, vector<4x128xf32> -> vector<4x128xf32>
    %32 = arith.addf %28, %31 : vector<4x128xf32>
    %c0_35 = arith.constant 0 : index
    %c0_36 = arith.constant 0 : index
    %33 = vector.load %arg6[%c0_35, %c0_36] : memref<4x128xf32, #tpu.memory_space<vmem>>, vector<4x128xf32>
    tpu.vector_store %arg6[%c0_35, %c0_36], %32 {strides = array<i32>} : memref<4x128xf32, #tpu.memory_space<vmem>>, vector<4x128xf32>,
    %c0_37 = arith.constant 0 : index
    %c3_38 = arith.constant 3 : index
    %c0_39 = arith.constant 0 : index
    %34 = vector.load %arg1[%c0_37, %c3_38, %c0_39] : memref<1x12x128xf32, #tpu.memory_space<vmem>>, vector<1x4x128xf32>
    %35 = vector.shape_cast %34 : vector<1x4x128xf32> to vector<4x128xf32>
    %c0_40 = arith.constant 0 : index
    %c0_41 = arith.constant 0 : index
    %c0_42 = arith.constant 0 : index
    %36 = vector.load %arg4[%c0_40, %c0_41, %c0_42] : memref<2x4x1xf32, #tpu.memory_space<vmem>>, vector<1x4x1xf32>
    %37 = vector.shape_cast %36 : vector<1x4x1xf32> to vector<4x1xf32>
    %38 = vector.broadcast %37 : vector<4x1xf32> to vector<4x128xf32>
    %39 = arith.mulf %35, %38 : vector<4x128xf32>
    %c0_43 = arith.constant 0 : index
    %c0_44 = arith.constant 0 : index
    %40 = vector.load %arg6[%c0_43, %c0_44] : memref<4x128xf32, #tpu.memory_space<vmem>>, vector<4x128xf32>
    %c3_45 = arith.constant 3 : index
    %c0_46 = arith.constant 0 : index
    %c0_47 = arith.constant 0 : index
    %41 = vector.load %arg2[%c3_45, %c0_46, %c0_47] : memref<9x128x128xf32, #tpu.memory_space<vmem>>, vector<1x128x128xf32>
    %42 = vector.shape_cast %41 : vector<1x128x128xf32> to vector<128x128xf32>
    %cst_48 = arith.constant dense<0.000000e+00> : vector<4x128xf32>
    %43 = tpu.matmul %39, %42, %cst_48 {dimension_numbers = #tpu.dot_dimension_numbers<[1], [0], [0], [1], [0, 0, 1, 1], [], []>} : vector<4x128xf32>, vector<128x128xf32>, vector<4x128xf32> -> vector<4x128xf32>
    %44 = arith.addf %40, %43 : vector<4x128xf32>
    %c0_49 = arith.constant 0 : index
    %c0_50 = arith.constant 0 : index
    %45 = vector.load %arg6[%c0_49, %c0_50] : memref<4x128xf32, #tpu.memory_space<vmem>>, vector<4x128xf32>
    tpu.vector_store %arg6[%c0_49, %c0_50], %44 {strides = array<i32>} : memref<4x128xf32, #tpu.memory_space<vmem>>, vector<4x128xf32>,
    %c0_51 = arith.constant 0 : index
    %c4 = arith.constant 4 : index
    %c0_52 = arith.constant 0 : index
    %46 = vector.load %arg1[%c0_51, %c4, %c0_52] : memref<1x12x128xf32, #tpu.memory_space<vmem>>, vector<1x4x128xf32>
    %47 = vector.shape_cast %46 : vector<1x4x128xf32> to vector<4x128xf32>
    %c0_53 = arith.constant 0 : index
    %c0_54 = arith.constant 0 : index
    %48 = vector.load %arg6[%c0_53, %c0_54] : memref<4x128xf32, #tpu.memory_space<vmem>>, vector<4x128xf32>
    %c4_55 = arith.constant 4 : index
    %c0_56 = arith.constant 0 : index
    %c0_57 = arith.constant 0 : index
    %49 = vector.load %arg2[%c4_55, %c0_56, %c0_57] : memref<9x128x128xf32, #tpu.memory_space<vmem>>, vector<1x128x128xf32>
    %50 = vector.shape_cast %49 : vector<1x128x128xf32> to vector<128x128xf32>
    %cst_58 = arith.constant dense<0.000000e+00> : vector<4x128xf32>
    %51 = tpu.matmul %47, %50, %cst_58 {dimension_numbers = #tpu.dot_dimension_numbers<[1], [0], [0], [1], [0, 0, 1, 1], [], []>} : vector<4x128xf32>, vector<128x128xf32>, vector<4x128xf32> -> vector<4x128xf32>
    %52 = arith.addf %48, %51 : vector<4x128xf32>
    %c0_59 = arith.constant 0 : index
    %c0_60 = arith.constant 0 : index
    %53 = vector.load %arg6[%c0_59, %c0_60] : memref<4x128xf32, #tpu.memory_space<vmem>>, vector<4x128xf32>
    tpu.vector_store %arg6[%c0_59, %c0_60], %52 {strides = array<i32>} : memref<4x128xf32, #tpu.memory_space<vmem>>, vector<4x128xf32>,
    %c0_61 = arith.constant 0 : index
    %c5 = arith.constant 5 : index
    %c0_62 = arith.constant 0 : index
    %54 = vector.load %arg1[%c0_61, %c5, %c0_62] : memref<1x12x128xf32, #tpu.memory_space<vmem>>, vector<1x4x128xf32>
    %55 = vector.shape_cast %54 : vector<1x4x128xf32> to vector<4x128xf32>
    %c1_63 = arith.constant 1 : index
    %c0_64 = arith.constant 0 : index
    %c0_65 = arith.constant 0 : index
    %56 = vector.load %arg4[%c1_63, %c0_64, %c0_65] : memref<2x4x1xf32, #tpu.memory_space<vmem>>, vector<1x4x1xf32>
    %57 = vector.shape_cast %56 : vector<1x4x1xf32> to vector<4x1xf32>
    %58 = vector.broadcast %57 : vector<4x1xf32> to vector<4x128xf32>
    %59 = arith.mulf %55, %58 : vector<4x128xf32>
    %c0_66 = arith.constant 0 : index
    %c0_67 = arith.constant 0 : index
    %60 = vector.load %arg6[%c0_66, %c0_67] : memref<4x128xf32, #tpu.memory_space<vmem>>, vector<4x128xf32>
    %c5_68 = arith.constant 5 : index
    %c0_69 = arith.constant 0 : index
    %c0_70 = arith.constant 0 : index
    %61 = vector.load %arg2[%c5_68, %c0_69, %c0_70] : memref<9x128x128xf32, #tpu.memory_space<vmem>>, vector<1x128x128xf32>
    %62 = vector.shape_cast %61 : vector<1x128x128xf32> to vector<128x128xf32>
    %cst_71 = arith.constant dense<0.000000e+00> : vector<4x128xf32>
    %63 = tpu.matmul %59, %62, %cst_71 {dimension_numbers = #tpu.dot_dimension_numbers<[1], [0], [0], [1], [0, 0, 1, 1], [], []>} : vector<4x128xf32>, vector<128x128xf32>, vector<4x128xf32> -> vector<4x128xf32>
    %64 = arith.addf %60, %63 : vector<4x128xf32>
    %c0_72 = arith.constant 0 : index
    %c0_73 = arith.constant 0 : index
    %65 = vector.load %arg6[%c0_72, %c0_73] : memref<4x128xf32, #tpu.memory_space<vmem>>, vector<4x128xf32>
    tpu.vector_store %arg6[%c0_72, %c0_73], %64 {strides = array<i32>} : memref<4x128xf32, #tpu.memory_space<vmem>>, vector<4x128xf32>,
    %c0_74 = arith.constant 0 : index
    %c5_75 = arith.constant 5 : index
    %c0_76 = arith.constant 0 : index
    %66 = vector.load %arg1[%c0_74, %c5_75, %c0_76] : memref<1x12x128xf32, #tpu.memory_space<vmem>>, vector<1x4x128xf32>
    %67 = vector.shape_cast %66 : vector<1x4x128xf32> to vector<4x128xf32>
    %c0_77 = arith.constant 0 : index
    %c0_78 = arith.constant 0 : index
    %c0_79 = arith.constant 0 : index
    %68 = vector.load %arg4[%c0_77, %c0_78, %c0_79] : memref<2x4x1xf32, #tpu.memory_space<vmem>>, vector<1x4x1xf32>
    %69 = vector.shape_cast %68 : vector<1x4x1xf32> to vector<4x1xf32>
    %70 = vector.broadcast %69 : vector<4x1xf32> to vector<4x128xf32>
    %71 = arith.mulf %67, %70 : vector<4x128xf32>
    %c0_80 = arith.constant 0 : index
    %c0_81 = arith.constant 0 : index
    %72 = vector.load %arg6[%c0_80, %c0_81] : memref<4x128xf32, #tpu.memory_space<vmem>>, vector<4x128xf32>
    %c6 = arith.constant 6 : index
    %c0_82 = arith.constant 0 : index
    %c0_83 = arith.constant 0 : index
    %73 = vector.load %arg2[%c6, %c0_82, %c0_83] : memref<9x128x128xf32, #tpu.memory_space<vmem>>, vector<1x128x128xf32>
    %74 = vector.shape_cast %73 : vector<1x128x128xf32> to vector<128x128xf32>
    %cst_84 = arith.constant dense<0.000000e+00> : vector<4x128xf32>
    %75 = tpu.matmul %71, %74, %cst_84 {dimension_numbers = #tpu.dot_dimension_numbers<[1], [0], [0], [1], [0, 0, 1, 1], [], []>} : vector<4x128xf32>, vector<128x128xf32>, vector<4x128xf32> -> vector<4x128xf32>
    %76 = arith.addf %72, %75 : vector<4x128xf32>
    %c0_85 = arith.constant 0 : index
    %c0_86 = arith.constant 0 : index
    %77 = vector.load %arg6[%c0_85, %c0_86] : memref<4x128xf32, #tpu.memory_space<vmem>>, vector<4x128xf32>
    tpu.vector_store %arg6[%c0_85, %c0_86], %76 {strides = array<i32>} : memref<4x128xf32, #tpu.memory_space<vmem>>, vector<4x128xf32>,
    %c0_87 = arith.constant 0 : index
    %c6_88 = arith.constant 6 : index
    %c0_89 = arith.constant 0 : index
    %78 = vector.load %arg1[%c0_87, %c6_88, %c0_89] : memref<1x12x128xf32, #tpu.memory_space<vmem>>, vector<1x4x128xf32>
    %79 = vector.shape_cast %78 : vector<1x4x128xf32> to vector<4x128xf32>
    %c0_90 = arith.constant 0 : index
    %c0_91 = arith.constant 0 : index
    %80 = vector.load %arg6[%c0_90, %c0_91] : memref<4x128xf32, #tpu.memory_space<vmem>>, vector<4x128xf32>
    %c7 = arith.constant 7 : index
    %c0_92 = arith.constant 0 : index
    %c0_93 = arith.constant 0 : index
    %81 = vector.load %arg2[%c7, %c0_92, %c0_93] : memref<9x128x128xf32, #tpu.memory_space<vmem>>, vector<1x128x128xf32>
    %82 = vector.shape_cast %81 : vector<1x128x128xf32> to vector<128x128xf32>
    %cst_94 = arith.constant dense<0.000000e+00> : vector<4x128xf32>
    %83 = tpu.matmul %79, %82, %cst_94 {dimension_numbers = #tpu.dot_dimension_numbers<[1], [0], [0], [1], [0, 0, 1, 1], [], []>} : vector<4x128xf32>, vector<128x128xf32>, vector<4x128xf32> -> vector<4x128xf32>
    %84 = arith.addf %80, %83 : vector<4x128xf32>
    %c0_95 = arith.constant 0 : index
    %c0_96 = arith.constant 0 : index
    %85 = vector.load %arg6[%c0_95, %c0_96] : memref<4x128xf32, #tpu.memory_space<vmem>>, vector<4x128xf32>
    tpu.vector_store %arg6[%c0_95, %c0_96], %84 {strides = array<i32>} : memref<4x128xf32, #tpu.memory_space<vmem>>, vector<4x128xf32>,
    %c0_97 = arith.constant 0 : index
    %c7_98 = arith.constant 7 : index
    %c0_99 = arith.constant 0 : index
    %86 = vector.load %arg1[%c0_97, %c7_98, %c0_99] : memref<1x12x128xf32, #tpu.memory_space<vmem>>, vector<1x4x128xf32>
    %87 = vector.shape_cast %86 : vector<1x4x128xf32> to vector<4x128xf32>
    %c1_100 = arith.constant 1 : index
    %c0_101 = arith.constant 0 : index
    %c0_102 = arith.constant 0 : index
    %88 = vector.load %arg4[%c1_100, %c0_101, %c0_102] : memref<2x4x1xf32, #tpu.memory_space<vmem>>, vector<1x4x1xf32>
    %89 = vector.shape_cast %88 : vector<1x4x1xf32> to vector<4x1xf32>
    %90 = vector.broadcast %89 : vector<4x1xf32> to vector<4x128xf32>
    %91 = arith.mulf %87, %90 : vector<4x128xf32>
    %c0_103 = arith.constant 0 : index
    %c0_104 = arith.constant 0 : index
    %92 = vector.load %arg6[%c0_103, %c0_104] : memref<4x128xf32, #tpu.memory_space<vmem>>, vector<4x128xf32>
    %c8 = arith.constant 8 : index
    %c0_105 = arith.constant 0 : index
    %c0_106 = arith.constant 0 : index
    %93 = vector.load %arg2[%c8, %c0_105, %c0_106] : memref<9x128x128xf32, #tpu.memory_space<vmem>>, vector<1x128x128xf32>
    %94 = vector.shape_cast %93 : vector<1x128x128xf32> to vector<128x128xf32>
    %cst_107 = arith.constant dense<0.000000e+00> : vector<4x128xf32>
    %95 = tpu.matmul %91, %94, %cst_107 {dimension_numbers = #tpu.dot_dimension_numbers<[1], [0], [0], [1], [0, 0, 1, 1], [], []>} : vector<4x128xf32>, vector<128x128xf32>, vector<4x128xf32> -> vector<4x128xf32>
    %96 = arith.addf %92, %95 : vector<4x128xf32>
    %c0_108 = arith.constant 0 : index
    %c0_109 = arith.constant 0 : index
    %97 = vector.load %arg6[%c0_108, %c0_109] : memref<4x128xf32, #tpu.memory_space<vmem>>, vector<4x128xf32>
    tpu.vector_store %arg6[%c0_108, %c0_109], %96 {strides = array<i32>} : memref<4x128xf32, #tpu.memory_space<vmem>>, vector<4x128xf32>,
    %c0_110 = arith.constant 0 : index
    %c0_111 = arith.constant 0 : index
    %98 = vector.load %arg6[%c0_110, %c0_111] : memref<4x128xf32, #tpu.memory_space<vmem>>, vector<4x128xf32>
    %c0_112 = arith.constant 0 : index
    %c0_113 = arith.constant 0 : index
    %99 = vector.load %arg3[%c0_112, %c0_113] : memref<1x128xf32, #tpu.memory_space<vmem>>, vector<1x128xf32>
    %100 = vector.broadcast %99 : vector<1x128xf32> to vector<4x128xf32>
    %101 = arith.addf %98, %100 : vector<4x128xf32>
    %cst_114 = arith.constant 0.000000e+00 : f32
    %102 = vector.broadcast %cst_114 : f32 to vector<4x128xf32>
    %103 = arith.maximumf %101, %102 : vector<4x128xf32>
    %c0_115 = arith.constant 0 : index
    %c0_116 = arith.constant 0 : index
    %c0_117 = arith.constant 0 : index
    %104 = vector.load %arg5[%c0_115, %c0_116, %c0_117] : memref<1x4x128xf32, #tpu.memory_space<vmem>>, vector<1x4x128xf32>
    %105 = vector.shape_cast %104 : vector<1x4x128xf32> to vector<4x128xf32>
    %106 = vector.shape_cast %103 : vector<4x128xf32> to vector<1x4x128xf32>
    tpu.vector_store %arg5[%c0_115, %c0_116, %c0_117], %106 {strides = array<i32>} : memref<1x4x128xf32, #tpu.memory_space<vmem>>, vector<1x4x128xf32>,
    return
  }
  func.func @transform_0(%arg0: i32) -> (i32, i32, i32) {
    %c0_i32 = arith.constant 0 : i32
    %c0_i32_0 = arith.constant 0 : i32
    %c0_i32_1 = arith.constant 0 : i32
    return %arg0, %c0_i32, %c0_i32_0 : i32, i32, i32
  }
  func.func @transform_1(%arg0: i32) -> (i32, i32, i32) {
    %c0_i32 = arith.constant 0 : i32
    %c0_i32_0 = arith.constant 0 : i32
    %c0_i32_1 = arith.constant 0 : i32
    %c0_i32_2 = arith.constant 0 : i32
    return %c0_i32, %c0_i32_0, %c0_i32_1 : i32, i32, i32
  }
  func.func @transform_2(%arg0: i32) -> (i32, i32) {
    %c0_i32 = arith.constant 0 : i32
    %c0_i32_0 = arith.constant 0 : i32
    %c0_i32_1 = arith.constant 0 : i32
    return %c0_i32, %c0_i32_0 : i32, i32
  }
  func.func @transform_3(%arg0: i32) -> (i32, i32, i32) {
    %c0_i32 = arith.constant 0 : i32
    %c0_i32_0 = arith.constant 0 : i32
    %c0_i32_1 = arith.constant 0 : i32
    %c0_i32_2 = arith.constant 0 : i32
    return %c0_i32, %c0_i32_0, %c0_i32_1 : i32, i32, i32
  }
  func.func @transform_4(%arg0: i32) -> (i32, i32, i32) {
    %c0_i32 = arith.constant 0 : i32
    %c0_i32_0 = arith.constant 0 : i32
    %c0_i32_1 = arith.constant 0 : i32
    return %arg0, %c0_i32, %c0_i32_0 : i32, i32, i32
  }
}

module attributes {stable_mosaic.version = 11 : i64} {
  func.func @_tail_kernel(%arg0: i32, %arg1: memref<2x4x128xf32, #tpu.memory_space<vmem>>, %arg2: memref<128x256xf32, #tpu.memory_space<vmem>>, %arg3: memref<1x256xf32, #tpu.memory_space<vmem>>, %arg4: memref<256x128xf32, #tpu.memory_space<vmem>>, %arg5: memref<1x128xf32, #tpu.memory_space<vmem>>, %arg6: memref<2x128xf32, #tpu.memory_space<vmem>>) attributes {dimension_semantics = [#tpu.dimension_semantics<parallel>], iteration_bounds = array<i64: 1>, scalar_prefetch = 0 : i64, scratch_operands = 0 : i64, tpu.core_type = #tpu.core_type<tc>, window_params = [{transform_indices = @transform_0, window_bounds = array<i64: 2, 4, 128>}, {pipeline_mode = #tpu.pipeline_mode<synchronous>, transform_indices = @transform_1, window_bounds = array<i64: 128, 256>}, {pipeline_mode = #tpu.pipeline_mode<synchronous>, transform_indices = @transform_2, window_bounds = array<i64: 1, 256>}, {pipeline_mode = #tpu.pipeline_mode<synchronous>, transform_indices = @transform_3, window_bounds = array<i64: 256, 128>}, {pipeline_mode = #tpu.pipeline_mode<synchronous>, transform_indices = @transform_4, window_bounds = array<i64: 1, 128>}, {transform_indices = @transform_5, window_bounds = array<i64: 2, 128>}]} {
    %c0 = arith.constant 0 : index
    %c0_0 = arith.constant 0 : index
    %c0_1 = arith.constant 0 : index
    %0 = vector.load %arg1[%c0, %c0_0, %c0_1] : memref<2x4x128xf32, #tpu.memory_space<vmem>>, vector<2x4x128xf32>
    %cst = arith.constant dense<0.000000e+00> : vector<2x128xf32>
    %1 = vector.multi_reduction <add>, %0, %cst [1] : vector<2x4x128xf32> to vector<2x128xf32>
    %cst_2 = arith.constant 4.000000e+00 : f32
    %2 = vector.broadcast %cst_2 : f32 to vector<2x128xf32>
    %3 = arith.divf %1, %2 : vector<2x128xf32>
    %c0_3 = arith.constant 0 : index
    %c0_4 = arith.constant 0 : index
    %4 = vector.load %arg2[%c0_3, %c0_4] : memref<128x256xf32, #tpu.memory_space<vmem>>, vector<128x256xf32>
    %cst_5 = arith.constant dense<0.000000e+00> : vector<2x256xf32>
    %5 = tpu.matmul %3, %4, %cst_5 {dimension_numbers = #tpu.dot_dimension_numbers<[1], [0], [0], [1], [0, 0, 1, 1], [], []>} : vector<2x128xf32>, vector<128x256xf32>, vector<2x256xf32> -> vector<2x256xf32>
    %c0_6 = arith.constant 0 : index
    %c0_7 = arith.constant 0 : index
    %6 = vector.load %arg3[%c0_6, %c0_7] : memref<1x256xf32, #tpu.memory_space<vmem>>, vector<1x256xf32>
    %7 = vector.broadcast %6 : vector<1x256xf32> to vector<2x256xf32>
    %8 = arith.addf %5, %7 : vector<2x256xf32>
    %cst_8 = arith.constant 0.000000e+00 : f32
    %9 = vector.broadcast %cst_8 : f32 to vector<2x256xf32>
    %10 = arith.maximumf %8, %9 : vector<2x256xf32>
    %c0_9 = arith.constant 0 : index
    %c0_10 = arith.constant 0 : index
    %11 = vector.load %arg4[%c0_9, %c0_10] : memref<256x128xf32, #tpu.memory_space<vmem>>, vector<256x128xf32>
    %cst_11 = arith.constant dense<0.000000e+00> : vector<2x128xf32>
    %12 = tpu.matmul %10, %11, %cst_11 {dimension_numbers = #tpu.dot_dimension_numbers<[1], [0], [0], [1], [0, 0, 1, 1], [], []>} : vector<2x256xf32>, vector<256x128xf32>, vector<2x128xf32> -> vector<2x128xf32>
    %c0_12 = arith.constant 0 : index
    %c0_13 = arith.constant 0 : index
    %13 = vector.load %arg5[%c0_12, %c0_13] : memref<1x128xf32, #tpu.memory_space<vmem>>, vector<1x128xf32>
    %14 = vector.broadcast %13 : vector<1x128xf32> to vector<2x128xf32>
    %15 = arith.addf %12, %14 : vector<2x128xf32>
    %c0_14 = arith.constant 0 : index
    %c0_15 = arith.constant 0 : index
    %16 = vector.load %arg6[%c0_14, %c0_15] : memref<2x128xf32, #tpu.memory_space<vmem>>, vector<2x128xf32>
    tpu.vector_store %arg6[%c0_14, %c0_15], %15 {strides = array<i32>} : memref<2x128xf32, #tpu.memory_space<vmem>>, vector<2x128xf32>,
    return
  }
  func.func @transform_0(%arg0: i32) -> (i32, i32, i32) {
    %c0_i32 = arith.constant 0 : i32
    %c0_i32_0 = arith.constant 0 : i32
    %c0_i32_1 = arith.constant 0 : i32
    return %arg0, %c0_i32, %c0_i32_0 : i32, i32, i32
  }
  func.func @transform_1(%arg0: i32) -> (i32, i32) {
    %c0_i32 = arith.constant 0 : i32
    %c0_i32_0 = arith.constant 0 : i32
    %c0_i32_1 = arith.constant 0 : i32
    return %c0_i32, %c0_i32_0 : i32, i32
  }
  func.func @transform_2(%arg0: i32) -> (i32, i32) {
    %c0_i32 = arith.constant 0 : i32
    %c0_i32_0 = arith.constant 0 : i32
    %c0_i32_1 = arith.constant 0 : i32
    return %c0_i32, %c0_i32_0 : i32, i32
  }
  func.func @transform_3(%arg0: i32) -> (i32, i32) {
    %c0_i32 = arith.constant 0 : i32
    %c0_i32_0 = arith.constant 0 : i32
    %c0_i32_1 = arith.constant 0 : i32
    return %c0_i32, %c0_i32_0 : i32, i32
  }
  func.func @transform_4(%arg0: i32) -> (i32, i32) {
    %c0_i32 = arith.constant 0 : i32
    %c0_i32_0 = arith.constant 0 : i32
    %c0_i32_1 = arith.constant 0 : i32
    return %c0_i32, %c0_i32_0 : i32, i32
  }
  func.func @transform_5(%arg0: i32) -> (i32, i32) {
    %c0_i32 = arith.constant 0 : i32
    %c0_i32_0 = arith.constant 0 : i32
    return %arg0, %c0_i32 : i32, i32
  }
}

</mosaic_0001>

<llo_original>
// kernel: cnn_forward.5
$region0: #{cnn_forward.5}
  #allocation0 [shape = 'u32[]', space=smem, size = 0x4, offset = 0x4, fixed_abs, tag = 'smem constant byte address 0x4 - core index']
  #allocation1 [shape = 'u32[144,128]{1,0:T(1,128)}', space=vmem, size = 0x12000, scoped, tag = 'internal scratch']
  #allocation2 [shape = 'f32[16,128]{1,0:T(8,128)}', space=vmem, size = 0x2000, scoped, tag = 'scratch operand']
  %s0 = inlined_call_operand.vmem [shape: f32[2,32,128], index: 0, kind: input, shape index: {}]
  %s1 = inlined_call_operand.vmem [shape: f32[9,128,128], index: 1, kind: input, shape index: {}]
  %s2 = inlined_call_operand.vmem [shape: f32[1,128], index: 2, kind: input, shape index: {}]
  %s3 = inlined_call_operand.vmem [shape: f32[2,16,1], index: 3, kind: input, shape index: {}]
  %s4 = inlined_call_operand.vmem [shape: f32[2,16,128], index: 4, kind: output, shape index: {}]
  %s5 = sld [smem:[#allocation0]]
  $region49: #{cnn_forward.5} parent=0
    _
  %s7 = ssub.s32 1, %s5
  %s8 = scalar_select 0, %s7, %s5
  loop: start=0, step=1, limit=4
  $region2: #{cnn_forward.5} parent=0 // loop_pre_header
    _
  $region3: #{cnn_forward.5} parent=0 // loop_header
    %s10 = sphi 0, %s14
    %p11 = scmp.ge.s32.totalorder %s10, 4
    %s20 = sphi 0, %s22
    %s23 = sphi 0, %s20
    %s24 = sphi 0, %s23
    %s40 = sphi 0, %s24
    %s44 = sphi 0, %s44
    %s46 = sphi 0, %s44
    %s47 = sphi 0, %s46
    %s61 = sphi 0, %s47
    %s65 = sphi 0, %s65
    %s67 = sphi 0, %s65
    %s68 = sphi 0, %s67
    %s82 = sphi 0, %s68
    %s86 = sphi 0, %s86
    %s88 = sphi 0, %s86
    %s89 = sphi 0, %s88
    %s103 = sphi 0, %s89
    %s109 = sphi 0, %s111
    %s112 = sphi 0, %s109
    %s113 = sphi 0, %s112
    %s129 = sphi 0, %s113
  $region4: #{cnn_forward.5} parent=0 // loop_header_branch
    %13 = sbr.rel (%p11) target = $region8
  $region5: #{cnn_forward.5} parent=0 // loop_body
    %s15 = ssub.s32 %s10, 1
    %s16 = ssub.s32 %s10, 2
    %s17 = sadd.s32 %s10, 1
    %s18 = ssub.s32 %s10, %s17
    %p19 = scmp.eq.s32.totalorder %s18, 0
    %s21 = sadd.s32 %s20, 1
    %s22 = scalar_select %p19, %s20, %s21
    %p25 = pneg %p19
    %p26 = scmp.eq.s32.totalorder %s10, 1
    %p27 = por %p25, %p26
    %p28 = scmp.ne.s32.totalorder %s20, %s23
    %p29 = scmp.eq.s32.totalorder %s10, 0
    %p30 = por %p28, %p29
    %p31 = scmp.ne.s32.totalorder %s20, %s23
    %p32 = scmp.eq.s32.totalorder %s15, 1
    %p33 = por %p31, %p32
    %p34 = scmp.ne.s32.totalorder %s23, %s24
    %p35 = scmp.eq.s32.totalorder %s15, 0
    %p36 = por %p34, %p35
    %p37 = scmp.ne.s32.totalorder %s23, %s24
    %p38 = scmp.eq.s32.totalorder %s16, 1
    %p39 = por %p37, %p38
    %p41 = scmp.ne.s32.totalorder %s24, %s40
    %p42 = scmp.eq.s32.totalorder %s16, 0
    %p43 = por %p41, %p42
    %s45 = sadd.s32 %s44, 1
    %p48 = scmp.eq.s32.totalorder %s10, 1
    %p49 = scmp.ne.s32.totalorder %s44, %s46
    %p50 = scmp.eq.s32.totalorder %s10, 0
    %p51 = por %p49, %p50
    %p52 = scmp.ne.s32.totalorder %s44, %s46
    %p53 = scmp.eq.s32.totalorder %s15, 1
    %p54 = por %p52, %p53
    %p55 = scmp.ne.s32.totalorder %s46, %s47
    %p56 = scmp.eq.s32.totalorder %s15, 0
    %p57 = por %p55, %p56
    %p58 = scmp.ne.s32.totalorder %s46, %s47
    %p59 = scmp.eq.s32.totalorder %s16, 1
    %p60 = por %p58, %p59
    %p62 = scmp.ne.s32.totalorder %s47, %s61
    %p63 = scmp.eq.s32.totalorder %s16, 0
    %p64 = por %p62, %p63
    %s66 = sadd.s32 %s65, 1
    %p69 = scmp.eq.s32.totalorder %s10, 1
    %p70 = scmp.ne.s32.totalorder %s65, %s67
    %p71 = scmp.eq.s32.totalorder %s10, 0
    %p72 = por %p70, %p71
    %p73 = scmp.ne.s32.totalorder %s65, %s67
    %p74 = scmp.eq.s32.totalorder %s15, 1
    %p75 = por %p73, %p74
    %p76 = scmp.ne.s32.totalorder %s67, %s68
    %p77 = scmp.eq.s32.totalorder %s15, 0
    %p78 = por %p76, %p77
    %p79 = scmp.ne.s32.totalorder %s67, %s68
    %p80 = scmp.eq.s32.totalorder %s16, 1
    %p81 = por %p79, %p80
    %p83 = scmp.ne.s32.totalorder %s68, %s82
    %p84 = scmp.eq.s32.totalorder %s16, 0
    %p85 = por %p83, %p84
    %s87 = sadd.s32 %s86, 1
    %p90 = scmp.eq.s32.totalorder %s10, 1
    %p91 = scmp.ne.s32.totalorder %s86, %s88
    %p92 = scmp.eq.s32.totalorder %s10, 0
    %p93 = por %p91, %p92
    %p94 = scmp.ne.s32.totalorder %s86, %s88
    %p95 = scmp.eq.s32.totalorder %s15, 1
    %p96 = por %p94, %p95
    %p97 = scmp.ne.s32.totalorder %s88, %s89
    %p98 = scmp.eq.s32.totalorder %s15, 0
    %p99 = por %p97, %p98
    %p100 = scmp.ne.s32.totalorder %s88, %s89
    %p101 = scmp.eq.s32.totalorder %s16, 1
    %p102 = por %p100, %p101
    %p104 = scmp.ne.s32.totalorder %s89, %s103
    %p105 = scmp.eq.s32.totalorder %s16, 0
    %p106 = por %p104, %p105
    %s107 = ssub.s32 %s10, %s17
    %p108 = scmp.eq.s32.totalorder %s107, 0
    %s110 = sadd.s32 %s109, 1
    %s111 = scalar_select %p108, %s109, %s110
    %p114 = pneg %p108
    %p115 = scmp.eq.s32.totalorder %s10, 1
    %p116 = por %p114, %p115
    %p117 = scmp.ne.s32.totalorder %s109, %s112
    %p118 = scmp.eq.s32.totalorder %s10, 0
    %p119 = por %p117, %p118
    %p120 = scmp.ne.s32.totalorder %s109, %s112
    %p121 = scmp.eq.s32.totalorder %s15, 1
    %p122 = por %p120, %p121
    %p123 = scmp.ne.s32.totalorder %s112, %s113
    %p124 = scmp.eq.s32.totalorder %s15, 0
    %p125 = por %p123, %p124
    %p126 = scmp.ne.s32.totalorder %s112, %s113
    %p127 = scmp.eq.s32.totalorder %s16, 1
    %p128 = por %p126, %p127
    %p130 = scmp.ne.s32.totalorder %s113, %s129
    %p131 = scmp.eq.s32.totalorder %s16, 0
    %p132 = por %p130, %p131
    %p133 = scmp.le.s32.totalorder 1, %s10
    %p134 = scmp.lt.s32.totalorder %s10, 3
    %p135 = pnand %p133, %p134
    %p136 = pneg %p135
    // Predicated region
    $region9: #{cnn_forward.5} parent=5 // pred_check
      _
    $region10: #{cnn_forward.5} parent=5 // pred_check_branch
      %138 = sbr.rel (%p135) target = $region12
    $region11: #{cnn_forward.5} parent=5 // pred_region
      %s139 = ssub.s32 %s10, 1
      // Predicated region
      $region13: #{cnn_forward.5} parent=11 // pred_check
        %p140 = pneg %p57
      $region14: #{cnn_forward.5} parent=11 // pred_check_branch
        %142 = sbr.rel (%p140) target = $region16
      $region15: #{cnn_forward.5} parent=11 // pred_region
        _
      $region16: #{cnn_forward.5} parent=11 // pred_fallthru
        _
      // Predicated region
      $region17: #{cnn_forward.5} parent=11 // pred_check
        %p143 = pneg %p78
      $region18: #{cnn_forward.5} parent=11 // pred_check_branch
        %145 = sbr.rel (%p143) target = $region20
      $region19: #{cnn_forward.5} parent=11 // pred_region
        _
      $region20: #{cnn_forward.5} parent=11 // pred_fallthru
        _
      // Predicated region
      $region21: #{cnn_forward.5} parent=11 // pred_check
        %p146 = pneg %p99
      $region22: #{cnn_forward.5} parent=11 // pred_check_branch
        %148 = sbr.rel (%p146) target = $region24
      $region23: #{cnn_forward.5} parent=11 // pred_region
        _
      $region24: #{cnn_forward.5} parent=11 // pred_fallthru
        _
    $region12: #{cnn_forward.5} parent=5 // pred_fallthru
      _
    %p149 = scmp.lt.s32.totalorder %s10, 2
    // Predicated region
    $region25: #{cnn_forward.5} parent=5 // pred_check
      %p150 = pneg %p149
    $region26: #{cnn_forward.5} parent=5 // pred_check_branch
      %152 = sbr.rel (%p150) target = $region28
    $region27: #{cnn_forward.5} parent=5 // pred_region
      // Predicated region
      $region29: #{cnn_forward.5} parent=27 // pred_check
        %p153 = pneg %p30
      $region30: #{cnn_forward.5} parent=27 // pred_check_branch
        %155 = sbr.rel (%p153) target = $region32
      $region31: #{cnn_forward.5} parent=27 // pred_region
        %p156 = scmp.lt.s32.totalorder %s10, 1
        %s157 = scalar_select %p156, %s10, 1
        %s158 = smul.addr %s157, 4
        %s159 = smul.addr %s158, 8
        %s160 = scalar_lea.vmem %s0, %s159
      $region32: #{cnn_forward.5} parent=27 // pred_fallthru
        _
    $region28: #{cnn_forward.5} parent=5 // pred_fallthru
      _
    %p161 = scmp.le.s32.totalorder 1, %s10
    %p162 = scmp.lt.s32.totalorder %s10, 3
    %p163 = pnand %p161, %p162
    %p164 = pneg %p163
    // Predicated region
    $region33: #{cnn_forward.5} parent=5 // pred_check
      _
    $region34: #{cnn_forward.5} parent=5 // pred_check_branch
      %166 = sbr.rel (%p163) target = $region36
    $region35: #{cnn_forward.5} parent=5 // pred_region
      %s167 = ssub.s32 %s10, 1
      %p168 = scmp.lt.s32.totalorder %s15, 1
      %s169 = scalar_select %p168, %s15, 1
      %s170 = smul.addr %s169, 4
      %s171 = smul.addr %s170, 8
      %s172 = scalar_lea.vmem %s0, %s171
      %p173 = pneg %p36
      %p174 = pneg %p33
      %p175 = pneg %p57
      %p176 = pneg %p54
      %p177 = pneg %p78
      %p178 = pneg %p75
      %p179 = pneg %p99
      %p180 = pneg %p96
      %p181 = pneg %p125
      %p182 = pneg %p122
      %p183 = scmp.lt.s32.totalorder %s15, 1
      %s184 = scalar_select %p183, %s15, 1
      %s185 = smul.addr %s184, 2
      %s186 = smul.addr %s185, 8
      %s187 = scalar_lea.vmem %s4, %s186
      %p188 = scmp.lt.s32.totalorder %s15, 1
      %s189 = scalar_select %p188, %s15, 1
      %s190 = smul.addr %s189, 4
      %s191 = smul.addr %s190, 8
      %s192 = scalar_lea.vmem %s0, %s191
      %p193 = scmp.lt.s32.totalorder %s15, 1
      %s194 = scalar_select %p193, %s15, 1
      %s195 = smul.addr %s194, 2
      %s196 = smul.addr %s195, 8
      %s197 = scalar_lea.vmem %s4, %s196
      %198 = vst [vmem:[#allocation2] sm:$0xff] 0.0
      %199 = vst [vmem:[#allocation2 + $0x8] sm:$0xff] 0.0
      %v200 = vld [vmem:[%s192 + $0x3] sm:$0xff]
      %v201 = vld [vmem:[%s192 + $0xb] sm:$0xff]
      %v202 = vld [vmem:[%s3] sm:$0xff]
      %v203 = vld [vmem:[%s3 + $0x8] sm:$0xff]
      %205 = vset.pattern.permute.xlu0 0
      %206 = vperm.xlu0 %205, %v202
      %v207 = vpop.permute.xlu0 %206
      %210 = vset.pattern.permute.xlu0 0
      %211 = vperm.xlu0 %210, %v203
      %v212 = vpop.permute.xlu0 %211
      %v214 = vmul.f32 %v200, %v207
      %v215 = vmul.f32 %v201, %v212
      %v216 = vld [vmem:[#allocation2] sm:$0xff]
      %v217 = vld [vmem:[#allocation2 + $0x8] sm:$0xff]
      %v218 = vld [vmem:[%s1] sm:$0xff]
      %v219 = vld [vmem:[%s1 + $0x8] sm:$0xff]
      %v220 = vld [vmem:[%s1 + $0x10] sm:$0xff]
      %v221 = vld [vmem:[%s1 + $0x18] sm:$0xff]
      %v222 = vld [vmem:[%s1 + $0x20] sm:$0xff]
      %v223 = vld [vmem:[%s1 + $0x28] sm:$0xff]
      %v224 = vld [vmem:[%s1 + $0x30] sm:$0xff]
      %v225 = vld [vmem:[%s1 + $0x38] sm:$0xff]
      %v226 = vld [vmem:[%s1 + $0x40] sm:$0xff]
      %v227 = vld [vmem:[%s1 + $0x48] sm:$0xff]
      %v228 = vld [vmem:[%s1 + $0x50] sm:$0xff]
      %v229 = vld [vmem:[%s1 + $0x58] sm:$0xff]
      %v230 = vld [vmem:[%s1 + $0x60] sm:$0xff]
      %v231 = vld [vmem:[%s1 + $0x68] sm:$0xff]
      %v232 = vld [vmem:[%s1 + $0x70] sm:$0xff]
      %v233 = vld [vmem:[%s1 + $0x78] sm:$0xff]
      %234 = vmatprep.subr.mxu0 0.0
      %235 = vmatpush1.msra.mxu0 %v218
      %236 = vmatprep.subr.mxu0 0.0
      %237 = vmatpush1.msra.mxu0 %v219
      %238 = vmatprep.subr.mxu0 0.0
      %239 = vmatpush1.msra.mxu0 %v220
      %240 = vmatprep.subr.mxu0 0.0
      %241 = vmatpush1.msra.mxu0 %v221
      %242 = vmatprep.subr.mxu0 0.0
      %243 = vmatpush1.msra.mxu0 %v222
      %244 = vmatprep.subr.mxu0 0.0
      %245 = vmatpush1.msra.mxu0 %v223
      %246 = vmatprep.subr.mxu0 0.0
      %247 = vmatpush1.msra.mxu0 %v224
      %248 = vmatprep.subr.mxu0 0.0
      %249 = vmatpush1.msra.mxu0 %v225
      %250 = vmatprep.subr.mxu0 0.0
      %251 = vmatpush1.msra.mxu0 %v226
      %252 = vmatprep.subr.mxu0 0.0
      %253 = vmatpush1.msra.mxu0 %v227
      %254 = vmatprep.subr.mxu0 0.0
      %255 = vmatpush1.msra.mxu0 %v228
      %256 = vmatprep.subr.mxu0 0.0
      %257 = vmatpush1.msra.mxu0 %v229
      %258 = vmatprep.subr.mxu0 0.0
      %259 = vmatpush1.msra.mxu0 %v230
      %260 = vmatprep.subr.mxu0 0.0
      %261 = vmatpush1.msra.mxu0 %v231
      %262 = vmatprep.subr.mxu0 0.0
      %263 = vmatpush1.msra.mxu0 %v232
      %264 = vmatprep.subr.mxu0 0.0
      %265 = vmatpush1.msra.mxu0 %v233
      %266 = vmatprep.subr.mxu0 0.0
      %267 = vmatpush1.msra.mxu0 0.0
      %268 = vmatprep.subr.mxu0 0.0
      %269 = vmatpush1.msra.mxu0 0.0
      %270 = vmatprep.subr.mxu0 0.0
      %271 = vmatpush1.msra.mxu0 0.0
      %272 = vmatprep.subr.mxu0 0.0
      %273 = vmatpush1.msra.mxu0 0.0
      %274 = vmatprep.subr.mxu0 0.0
      %275 = vmatpush1.msra.mxu0 0.0
      %276 = vmatprep.subr.mxu0 0.0
      %277 = vmatpush1.msra.mxu0 0.0
      %278 = vmatprep.subr.mxu0 0.0
      %279 = vmatpush1.msra.mxu0 0.0
      %280 = vmatprep.subr.mxu0 0.0
      %281 = vmatpush1.msra.mxu0 0.0
      %282 = vmatprep.subr.mxu0 0.0
      %283 = vmatpush1.msra.mxu0 0.0
      %284 = vmatprep.subr.mxu0 0.0
      %285 = vmatpush1.msra.mxu0 0.0
      %286 = vmatprep.subr.mxu0 0.0
      %287 = vmatpush1.msra.mxu0 0.0
      %288 = vmatprep.subr.mxu0 0.0
      %289 = vmatpush1.msra.mxu0 0.0
      %290 = vmatprep.subr.mxu0 0.0
      %291 = vmatpush1.msra.mxu0 0.0
      %292 = vmatprep.subr.mxu0 0.0
      %293 = vmatpush1.msra.mxu0 0.0
      %294 = vmatprep.subr.mxu0 0.0
      %295 = vmatpush1.msra.mxu0 0.0
      %296 = vmatprep.subr.mxu0 0.0
      %297 = vmatpush1.msra.mxu0 0.0
      %298 = vmatprep.mubr.f32.mxu0 0.0
      %299 = vmatmul.mubr.f32.gmra.mrb[0].mxu0 %v214
      %v300 = vpop.f32.mrb[0].mxu0
      %v301 = vadd.f32 0.0, %v300
      %v302 = vpop.f32.mrb[0].mxu0
      %303 = vmatprep.mubr.f32.mxu0 0.0
      %304 = vmatmul.mubr.f32.gmra.mrb[0].mxu0 %v215
      %v305 = vpop.f32.mrb[0].mxu0
      %v306 = vadd.f32 0.0, %v305
      %v307 = vpop.f32.mrb[0].mxu0
      %308 = vdwg.mxu0
      %v309 = vadd.f32 %v216, %v301
      %v310 = vadd.f32 %v217, %v306
      %311 = vst [vmem:[#allocation2] sm:$0xff] %v309
      %312 = vst [vmem:[#allocation2 + $0x8] sm:$0xff] %v310
      %v313 = vld [vmem:[%s192 + $0x4] sm:$0xff]
      %v314 = vld [vmem:[%s192 + $0xc] sm:$0xff]
      %v315 = vld [vmem:[#allocation2] sm:$0xff]
      %v316 = vld [vmem:[#allocation2 + $0x8] sm:$0xff]
      %s317 = scalar_lea.vmem %s1, 128
      %v318 = vld [vmem:[%s317] sm:$0xff]
      %v319 = vld [vmem:[%s317 + $0x8] sm:$0xff]
      %v320 = vld [vmem:[%s317 + $0x10] sm:$0xff]
      %v321 = vld [vmem:[%s317 + $0x18] sm:$0xff]
      %v322 = vld [vmem:[%s317 + $0x20] sm:$0xff]
      %v323 = vld [vmem:[%s317 + $0x28] sm:$0xff]
      %v324 = vld [vmem:[%s317 + $0x30] sm:$0xff]
      %v325 = vld [vmem:[%s317 + $0x38] sm:$0xff]
      %v326 = vld [vmem:[%s317 + $0x40] sm:$0xff]
      %v327 = vld [vmem:[%s317 + $0x48] sm:$0xff]
      %v328 = vld [vmem:[%s317 + $0x50] sm:$0xff]
      %v329 = vld [vmem:[%s317 + $0x58] sm:$0xff]
      %v330 = vld [vmem:[%s317 + $0x60] sm:$0xff]
      %v331 = vld [vmem:[%s317 + $0x68] sm:$0xff]
      %v332 = vld [vmem:[%s317 + $0x70] sm:$0xff]
      %v333 = vld [vmem:[%s317 + $0x78] sm:$0xff]
      %334 = vmatprep.subr.mxu0 0.0
      %335 = vmatpush1.msra.mxu0 %v318
      %336 = vmatprep.subr.mxu0 0.0
      %337 = vmatpush1.msra.mxu0 %v319
      %338 = vmatprep.subr.mxu0 0.0
      %339 = vmatpush1.msra.mxu0 %v320
      %340 = vmatprep.subr.mxu0 0.0
      %341 = vmatpush1.msra.mxu0 %v321
      %342 = vmatprep.subr.mxu0 0.0
      %343 = vmatpush1.msra.mxu0 %v322
      %344 = vmatprep.subr.mxu0 0.0
      %345 = vmatpush1.msra.mxu0 %v323
      %346 = vmatprep.subr.mxu0 0.0
      %347 = vmatpush1.msra.mxu0 %v324
      %348 = vmatprep.subr.mxu0 0.0
      %349 = vmatpush1.msra.mxu0 %v325
      %350 = vmatprep.subr.mxu0 0.0
      %351 = vmatpush1.msra.mxu0 %v326
      %352 = vmatprep.subr.mxu0 0.0
      %353 = vmatpush1.msra.mxu0 %v327
      %354 = vmatprep.subr.mxu0 0.0
      %355 = vmatpush1.msra.mxu0 %v328
      %356 = vmatprep.subr.mxu0 0.0
      %357 = vmatpush1.msra.mxu0 %v329
      %358 = vmatprep.subr.mxu0 0.0
      %359 = vmatpush1.msra.mxu0 %v330
      %360 = vmatprep.subr.mxu0 0.0
      %361 = vmatpush1.msra.mxu0 %v331
      %362 = vmatprep.subr.mxu0 0.0
      %363 = vmatpush1.msra.mxu0 %v332
      %364 = vmatprep.subr.mxu0 0.0
      %365 = vmatpush1.msra.mxu0 %v333
      %366 = vmatprep.subr.mxu0 0.0
      %367 = vmatpush1.msra.mxu0 0.0
      %368 = vmatprep.subr.mxu0 0.0
      %369 = vmatpush1.msra.mxu0 0.0
      %370 = vmatprep.subr.mxu0 0.0
      %371 = vmatpush1.msra.mxu0 0.0
      %372 = vmatprep.subr.mxu0 0.0
      %373 = vmatpush1.msra.mxu0 0.0
      %374 = vmatprep.subr.mxu0 0.0
      %375 = vmatpush1.msra.mxu0 0.0
      %376 = vmatprep.subr.mxu0 0.0
      %377 = vmatpush1.msra.mxu0 0.0
      %378 = vmatprep.subr.mxu0 0.0
      %379 = vmatpush1.msra.mxu0 0.0
      %380 = vmatprep.subr.mxu0 0.0
      %381 = vmatpush1.msra.mxu0 0.0
      %382 = vmatprep.subr.mxu0 0.0
      %383 = vmatpush1.msra.mxu0 0.0
      %384 = vmatprep.subr.mxu0 0.0
      %385 = vmatpush1.msra.mxu0 0.0
      %386 = vmatprep.subr.mxu0 0.0
      %387 = vmatpush1.msra.mxu0 0.0
      %388 = vmatprep.subr.mxu0 0.0
      %389 = vmatpush1.msra.mxu0 0.0
      %390 = vmatprep.subr.mxu0 0.0
      %391 = vmatpush1.msra.mxu0 0.0
      %392 = vmatprep.subr.mxu0 0.0
      %393 = vmatpush1.msra.mxu0 0.0
      %394 = vmatprep.subr.mxu0 0.0
      %395 = vmatpush1.msra.mxu0 0.0
      %396 = vmatprep.subr.mxu0 0.0
      %397 = vmatpush1.msra.mxu0 0.0
      %398 = vmatprep.mubr.f32.mxu0 0.0
      %399 = vmatmul.mubr.f32.gmra.mrb[0].mxu0 %v313
      %v400 = vpop.f32.mrb[0].mxu0
      %v401 = vadd.f32 0.0, %v400
      %v402 = vpop.f32.mrb[0].mxu0
      %403 = vmatprep.mubr.f32.mxu0 0.0
      %404 = vmatmul.mubr.f32.gmra.mrb[0].mxu0 %v314
      %v405 = vpop.f32.mrb[0].mxu0
      %v406 = vadd.f32 0.0, %v405
      %v407 = vpop.f32.mrb[0].mxu0
      %408 = vdwg.mxu0
      %v409 = vadd.f32 %v315, %v401
      %v410 = vadd.f32 %v316, %v406
      %411 = vst [vmem:[#allocation2] sm:$0xff] %v409
      %412 = vst [vmem:[#allocation2 + $0x8] sm:$0xff] %v410
      %v413 = vld [vmem:[%s192 + $0x5] sm:$0xff]
      %v414 = vld [vmem:[%s192 + $0xd] sm:$0xff]
      %s415 = scalar_lea.vmem %s3, 16
      %v416 = vld [vmem:[%s415] sm:$0xff]
      %v417 = vld [vmem:[%s415 + $0x8] sm:$0xff]
      %419 = vset.pattern.permute.xlu0 0
      %420 = vperm.xlu0 %419, %v416
      %v421 = vpop.permute.xlu0 %420
      %424 = vset.pattern.permute.xlu0 0
      %425 = vperm.xlu0 %424, %v417
      %v426 = vpop.permute.xlu0 %425
      %v428 = vmul.f32 %v413, %v421
      %v429 = vmul.f32 %v414, %v426
      %v430 = vld [vmem:[#allocation2] sm:$0xff]
      %v431 = vld [vmem:[#allocation2 + $0x8] sm:$0xff]
      %s432 = scalar_lea.vmem %s1, 256
      %v433 = vld [vmem:[%s432] sm:$0xff]
      %v434 = vld [vmem:[%s432 + $0x8] sm:$0xff]
      %v435 = vld [vmem:[%s432 + $0x10] sm:$0xff]
      %v436 = vld [vmem:[%s432 + $0x18] sm:$0xff]
      %v437 = vld [vmem:[%s432 + $0x20] sm:$0xff]
      %v438 = vld [vmem:[%s432 + $0x28] sm:$0xff]
      %v439 = vld [vmem:[%s432 + $0x30] sm:$0xff]
      %v440 = vld [vmem:[%s432 + $0x38] sm:$0xff]
      %v441 = vld [vmem:[%s432 + $0x40] sm:$0xff]
      %v442 = vld [vmem:[%s432 + $0x48] sm:$0xff]
      %v443 = vld [vmem:[%s432 + $0x50] sm:$0xff]
      %v444 = vld [vmem:[%s432 + $0x58] sm:$0xff]
      %v445 = vld [vmem:[%s432 + $0x60] sm:$0xff]
      %v446 = vld [vmem:[%s432 + $0x68] sm:$0xff]
      %v447 = vld [vmem:[%s432 + $0x70] sm:$0xff]
      %v448 = vld [vmem:[%s432 + $0x78] sm:$0xff]
      %449 = vmatprep.subr.mxu0 0.0
      %450 = vmatpush1.msra.mxu0 %v433
      %451 = vmatprep.subr.mxu0 0.0
      %452 = vmatpush1.msra.mxu0 %v434
      %453 = vmatprep.subr.mxu0 0.0
      %454 = vmatpush1.msra.mxu0 %v435
      %455 = vmatprep.subr.mxu0 0.0
      %456 = vmatpush1.msra.mxu0 %v436
      %457 = vmatprep.subr.mxu0 0.0
      %458 = vmatpush1.msra.mxu0 %v437
      %459 = vmatprep.subr.mxu0 0.0
      %460 = vmatpush1.msra.mxu0 %v438
      %461 = vmatprep.subr.mxu0 0.0
      %462 = vmatpush1.msra.mxu0 %v439
      %463 = vmatprep.subr.mxu0 0.0
      %464 = vmatpush1.msra.mxu0 %v440
      %465 = vmatprep.subr.mxu0 0.0
      %466 = vmatpush1.msra.mxu0 %v441
      %467 = vmatprep.subr.mxu0 0.0
      %468 = vmatpush1.msra.mxu0 %v442
      %469 = vmatprep.subr.mxu0 0.0
      %470 = vmatpush1.msra.mxu0 %v443
      %471 = vmatprep.subr.mxu0 0.0
      %472 = vmatpush1.msra.mxu0 %v444
      %473 = vmatprep.subr.mxu0 0.0
      %474 = vmatpush1.msra.mxu0 %v445
      %475 = vmatprep.subr.mxu0 0.0
      %476 = vmatpush1.msra.mxu0 %v446
      %477 = vmatprep.subr.mxu0 0.0
      %478 = vmatpush1.msra.mxu0 %v447
      %479 = vmatprep.subr.mxu0 0.0
      %480 = vmatpush1.msra.mxu0 %v448
      %481 = vmatprep.subr.mxu0 0.0
      %482 = vmatpush1.msra.mxu0 0.0
      %483 = vmatprep.subr.mxu0 0.0
      %484 = vmatpush1.msra.mxu0 0.0
      %485 = vmatprep.subr.mxu0 0.0
      %486 = vmatpush1.msra.mxu0 0.0
      %487 = vmatprep.subr.mxu0 0.0
      %488 = vmatpush1.msra.mxu0 0.0
      %489 = vmatprep.subr.mxu0 0.0
      %490 = vmatpush1.msra.mxu0 0.0
      %491 = vmatprep.subr.mxu0 0.0
      %492 = vmatpush1.msra.mxu0 0.0
      %493 = vmatprep.subr.mxu0 0.0
      %494 = vmatpush1.msra.mxu0 0.0
      %495 = vmatprep.subr.mxu0 0.0
      %496 = vmatpush1.msra.mxu0 0.0
      %497 = vmatprep.subr.mxu0 0.0
      %498 = vmatpush1.msra.mxu0 0.0
      %499 = vmatprep.subr.mxu0 0.0
      %500 = vmatpush1.msra.mxu0 0.0
      %501 = vmatprep.subr.mxu0 0.0
      %502 = vmatpush1.msra.mxu0 0.0
      %503 = vmatprep.subr.mxu0 0.0
      %504 = vmatpush1.msra.mxu0 0.0
      %505 = vmatprep.subr.mxu0 0.0
      %506 = vmatpush1.msra.mxu0 0.0
      %507 = vmatprep.subr.mxu0 0.0
      %508 = vmatpush1.msra.mxu0 0.0
      %509 = vmatprep.subr.mxu0 0.0
      %510 = vmatpush1.msra.mxu0 0.0
      %511 = vmatprep.subr.mxu0 0.0
      %512 = vmatpush1.msra.mxu0 0.0
      %513 = vmatprep.mubr.f32.mxu0 0.0
      %514 = vmatmul.mubr.f32.gmra.mrb[0].mxu0 %v428
      %v515 = vpop.f32.mrb[0].mxu0
      %v516 = vadd.f32 0.0, %v515
      %v517 = vpop.f32.mrb[0].mxu0
      %518 = vmatprep.mubr.f32.mxu0 0.0
      %519 = vmatmul.mubr.f32.gmra.mrb[0].mxu0 %v429
      %v520 = vpop.f32.mrb[0].mxu0
      %v521 = vadd.f32 0.0, %v520
      %v522 = vpop.f32.mrb[0].mxu0
      %523 = vdwg.mxu0
      %v524 = vadd.f32 %v430, %v516
      %v525 = vadd.f32 %v431, %v521
      %526 = vst [vmem:[#allocation2] sm:$0xff] %v524
      %527 = vst [vmem:[#allocation2 + $0x8] sm:$0xff] %v525
      %v528 = vld [vmem:[%s192 + $0x7] sm:$0xff]
      %v529 = vld [vmem:[%s192 + $0xf] sm:$0xff]
      %v530 = vld [vmem:[%s3] sm:$0xff]
      %v531 = vld [vmem:[%s3 + $0x8] sm:$0xff]
      %533 = vset.pattern.permute.xlu0 0
      %534 = vperm.xlu0 %533, %v530
      %v535 = vpop.permute.xlu0 %534
      %538 = vset.pattern.permute.xlu0 0
      %539 = vperm.xlu0 %538, %v531
      %v540 = vpop.permute.xlu0 %539
      %v542 = vmul.f32 %v528, %v535
      %v543 = vmul.f32 %v529, %v540
      %v544 = vld [vmem:[#allocation2] sm:$0xff]
      %v545 = vld [vmem:[#allocation2 + $0x8] sm:$0xff]
      %s546 = scalar_lea.vmem %s1, 384
      %v547 = vld [vmem:[%s546] sm:$0xff]
      %v548 = vld [vmem:[%s546 + $0x8] sm:$0xff]
      %v549 = vld [vmem:[%s546 + $0x10] sm:$0xff]
      %v550 = vld [vmem:[%s546 + $0x18] sm:$0xff]
      %v551 = vld [vmem:[%s546 + $0x20] sm:$0xff]
      %v552 = vld [vmem:[%s546 + $0x28] sm:$0xff]
      %v553 = vld [vmem:[%s546 + $0x30] sm:$0xff]
      %v554 = vld [vmem:[%s546 + $0x38] sm:$0xff]
      %v555 = vld [vmem:[%s546 + $0x40] sm:$0xff]
      %v556 = vld [vmem:[%s546 + $0x48] sm:$0xff]
      %v557 = vld [vmem:[%s546 + $0x50] sm:$0xff]
      %v558 = vld [vmem:[%s546 + $0x58] sm:$0xff]
      %v559 = vld [vmem:[%s546 + $0x60] sm:$0xff]
      %v560 = vld [vmem:[%s546 + $0x68] sm:$0xff]
      %v561 = vld [vmem:[%s546 + $0x70] sm:$0xff]
      %v562 = vld [vmem:[%s546 + $0x78] sm:$0xff]
      %563 = vmatprep.subr.mxu0 0.0
      %564 = vmatpush1.msra.mxu0 %v547
      %565 = vmatprep.subr.mxu0 0.0
      %566 = vmatpush1.msra.mxu0 %v548
      %567 = vmatprep.subr.mxu0 0.0
      %568 = vmatpush1.msra.mxu0 %v549
      %569 = vmatprep.subr.mxu0 0.0
      %570 = vmatpush1.msra.mxu0 %v550
      %571 = vmatprep.subr.mxu0 0.0
      %572 = vmatpush1.msra.mxu0 %v551
      %573 = vmatprep.subr.mxu0 0.0
      %574 = vmatpush1.msra.mxu0 %v552
      %575 = vmatprep.subr.mxu0 0.0
      %576 = vmatpush1.msra.mxu0 %v553
      %577 = vmatprep.subr.mxu0 0.0
      %578 = vmatpush1.msra.mxu0 %v554
      %579 = vmatprep.subr.mxu0 0.0
      %580 = vmatpush1.msra.mxu0 %v555
      %581 = vmatprep.subr.mxu0 0.0
      %582 = vmatpush1.msra.mxu0 %v556
      %583 = vmatprep.subr.mxu0 0.0
      %584 = vmatpush1.msra.mxu0 %v557
      %585 = vmatprep.subr.mxu0 0.0
      %586 = vmatpush1.msra.mxu0 %v558
      %587 = vmatprep.subr.mxu0 0.0
      %588 = vmatpush1.msra.mxu0 %v559
      %589 = vmatprep.subr.mxu0 0.0
      %590 = vmatpush1.msra.mxu0 %v560
      %591 = vmatprep.subr.mxu0 0.0
      %592 = vmatpush1.msra.mxu0 %v561
      %593 = vmatprep.subr.mxu0 0.0
      %594 = vmatpush1.msra.mxu0 %v562
      %595 = vmatprep.subr.mxu0 0.0
      %596 = vmatpush1.msra.mxu0 0.0
      %597 = vmatprep.subr.mxu0 0.0
      %598 = vmatpush1.msra.mxu0 0.0
      %599 = vmatprep.subr.mxu0 0.0
      %600 = vmatpush1.msra.mxu0 0.0
      %601 = vmatprep.subr.mxu0 0.0
      %602 = vmatpush1.msra.mxu0 0.0
      %603 = vmatprep.subr.mxu0 0.0
      %604 = vmatpush1.msra.mxu0 0.0
      %605 = vmatprep.subr.mxu0 0.0
      %606 = vmatpush1.msra.mxu0 0.0
      %607 = vmatprep.subr.mxu0 0.0
      %608 = vmatpush1.msra.mxu0 0.0
      %609 = vmatprep.subr.mxu0 0.0
      %610 = vmatpush1.msra.mxu0 0.0
      %611 = vmatprep.subr.mxu0 0.0
      %612 = vmatpush1.msra.mxu0 0.0
      %613 = vmatprep.subr.mxu0 0.0
      %614 = vmatpush1.msra.mxu0 0.0
      %615 = vmatprep.subr.mxu0 0.0
      %616 = vmatpush1.msra.mxu0 0.0
      %617 = vmatprep.subr.mxu0 0.0
      %618 = vmatpush1.msra.mxu0 0.0
      %619 = vmatprep.subr.mxu0 0.0
      %620 = vmatpush1.msra.mxu0 0.0
      %621 = vmatprep.subr.mxu0 0.0
      %622 = vmatpush1.msra.mxu0 0.0
      %623 = vmatprep.subr.mxu0 0.0
      %624 = vmatpush1.msra.mxu0 0.0
      %625 = vmatprep.subr.mxu0 0.0
      %626 = vmatpush1.msra.mxu0 0.0
      %627 = vmatprep.mubr.f32.mxu0 0.0
      %628 = vmatmul.mubr.f32.gmra.mrb[0].mxu0 %v542
      %v629 = vpop.f32.mrb[0].mxu0
      %v630 = vadd.f32 0.0, %v629
      %v631 = vpop.f32.mrb[0].mxu0
      %632 = vmatprep.mubr.f32.mxu0 0.0
      %633 = vmatmul.mubr.f32.gmra.mrb[0].mxu0 %v543
      %v634 = vpop.f32.mrb[0].mxu0
      %v635 = vadd.f32 0.0, %v634
      %v636 = vpop.f32.mrb[0].mxu0
      %637 = vdwg.mxu0
      %v638 = vadd.f32 %v544, %v630
      %v639 = vadd.f32 %v545, %v635
      %640 = vst [vmem:[#allocation2] sm:$0xff] %v638
      %641 = vst [vmem:[#allocation2 + $0x8] sm:$0xff] %v639
      %v642 = vld [vmem:[%s192 + $0x8] sm:$0xff]
      %v643 = vld [vmem:[%s192 + $0x10] sm:$0xff]
      %v644 = vld [vmem:[#allocation2] sm:$0xff]
      %v645 = vld [vmem:[#allocation2 + $0x8] sm:$0xff]
      %s646 = scalar_lea.vmem %s1, 512
      %v647 = vld [vmem:[%s646] sm:$0xff]
      %v648 = vld [vmem:[%s646 + $0x8] sm:$0xff]
      %v649 = vld [vmem:[%s646 + $0x10] sm:$0xff]
      %v650 = vld [vmem:[%s646 + $0x18] sm:$0xff]
      %v651 = vld [vmem:[%s646 + $0x20] sm:$0xff]
      %v652 = vld [vmem:[%s646 + $0x28] sm:$0xff]
      %v653 = vld [vmem:[%s646 + $0x30] sm:$0xff]
      %v654 = vld [vmem:[%s646 + $0x38] sm:$0xff]
      %v655 = vld [vmem:[%s646 + $0x40] sm:$0xff]
      %v656 = vld [vmem:[%s646 + $0x48] sm:$0xff]
      %v657 = vld [vmem:[%s646 + $0x50] sm:$0xff]
      %v658 = vld [vmem:[%s646 + $0x58] sm:$0xff]
      %v659 = vld [vmem:[%s646 + $0x60] sm:$0xff]
      %v660 = vld [vmem:[%s646 + $0x68] sm:$0xff]
      %v661 = vld [vmem:[%s646 + $0x70] sm:$0xff]
      %v662 = vld [vmem:[%s646 + $0x78] sm:$0xff]
      %663 = vmatprep.subr.mxu0 0.0
      %664 = vmatpush1.msra.mxu0 %v647
      %665 = vmatprep.subr.mxu0 0.0
      %666 = vmatpush1.msra.mxu0 %v648
      %667 = vmatprep.subr.mxu0 0.0
      %668 = vmatpush1.msra.mxu0 %v649
      %669 = vmatprep.subr.mxu0 0.0
      %670 = vmatpush1.msra.mxu0 %v650
      %671 = vmatprep.subr.mxu0 0.0
      %672 = vmatpush1.msra.mxu0 %v651
      %673 = vmatprep.subr.mxu0 0.0
      %674 = vmatpush1.msra.mxu0 %v652
      %675 = vmatprep.subr.mxu0 0.0
      %676 = vmatpush1.msra.mxu0 %v653
      %677 = vmatprep.subr.mxu0 0.0
      %678 = vmatpush1.msra.mxu0 %v654
      %679 = vmatprep.subr.mxu0 0.0
      %680 = vmatpush1.msra.mxu0 %v655
      %681 = vmatprep.subr.mxu0 0.0
      %682 = vmatpush1.msra.mxu0 %v656
      %683 = vmatprep.subr.mxu0 0.0
      %684 = vmatpush1.msra.mxu0 %v657
      %685 = vmatprep.subr.mxu0 0.0
      %686 = vmatpush1.msra.mxu0 %v658
      %687 = vmatprep.subr.mxu0 0.0
      %688 = vmatpush1.msra.mxu0 %v659
      %689 = vmatprep.subr.mxu0 0.0
      %690 = vmatpush1.msra.mxu0 %v660
      %691 = vmatprep.subr.mxu0 0.0
      %692 = vmatpush1.msra.mxu0 %v661
      %693 = vmatprep.subr.mxu0 0.0
      %694 = vmatpush1.msra.mxu0 %v662
      %695 = vmatprep.subr.mxu0 0.0
      %696 = vmatpush1.msra.mxu0 0.0
      %697 = vmatprep.subr.mxu0 0.0
      %698 = vmatpush1.msra.mxu0 0.0
      %699 = vmatprep.subr.mxu0 0.0
      %700 = vmatpush1.msra.mxu0 0.0
      %701 = vmatprep.subr.mxu0 0.0
      %702 = vmatpush1.msra.mxu0 0.0
      %703 = vmatprep.subr.mxu0 0.0
      %704 = vmatpush1.msra.mxu0 0.0
      %705 = vmatprep.subr.mxu0 0.0
      %706 = vmatpush1.msra.mxu0 0.0
      %707 = vmatprep.subr.mxu0 0.0
      %708 = vmatpush1.msra.mxu0 0.0
      %709 = vmatprep.subr.mxu0 0.0
      %710 = vmatpush1.msra.mxu0 0.0
      %711 = vmatprep.subr.mxu0 0.0
      %712 = vmatpush1.msra.mxu0 0.0
      %713 = vmatprep.subr.mxu0 0.0
      %714 = vmatpush1.msra.mxu0 0.0
      %715 = vmatprep.subr.mxu0 0.0
      %716 = vmatpush1.msra.mxu0 0.0
      %717 = vmatprep.subr.mxu0 0.0
      %718 = vmatpush1.msra.mxu0 0.0
      %719 = vmatprep.subr.mxu0 0.0
      %720 = vmatpush1.msra.mxu0 0.0
      %721 = vmatprep.subr.mxu0 0.0
      %722 = vmatpush1.msra.mxu0 0.0
      %723 = vmatprep.subr.mxu0 0.0
      %724 = vmatpush1.msra.mxu0 0.0
      %725 = vmatprep.subr.mxu0 0.0
      %726 = vmatpush1.msra.mxu0 0.0
      %727 = vmatprep.mubr.f32.mxu0 0.0
      %728 = vmatmul.mubr.f32.gmra.mrb[0].mxu0 %v642
      %v729 = vpop.f32.mrb[0].mxu0
      %v730 = vadd.f32 0.0, %v729
      %v731 = vpop.f32.mrb[0].mxu0
      %732 = vmatprep.mubr.f32.mxu0 0.0
      %733 = vmatmul.mubr.f32.gmra.mrb[0].mxu0 %v643
      %v734 = vpop.f32.mrb[0].mxu0
      %v735 = vadd.f32 0.0, %v734
      %v736 = vpop.f32.mrb[0].mxu0
      %737 = vdwg.mxu0
      %v738 = vadd.f32 %v644, %v730
      %v739 = vadd.f32 %v645, %v735
      %740 = vst [vmem:[#allocation2] sm:$0xff] %v738
      %741 = vst [vmem:[#allocation2 + $0x8] sm:$0xff] %v739
      %v742 = vld [vmem:[%s192 + $0x9] sm:$0xff]
      %v743 = vld [vmem:[%s192 + $0x11] sm:$0xff]
      %v744 = vld [vmem:[%s415] sm:$0xff]
      %v745 = vld [vmem:[%s415 + $0x8] sm:$0xff]
      %747 = vset.pattern.permute.xlu0 0
      %748 = vperm.xlu0 %747, %v744
      %v749 = vpop.permute.xlu0 %748
      %752 = vset.pattern.permute.xlu0 0
      %753 = vperm.xlu0 %752, %v745
      %v754 = vpop.permute.xlu0 %753
      %v756 = vmul.f32 %v742, %v749
      %v757 = vmul.f32 %v743, %v754
      %v758 = vld [vmem:[#allocation2] sm:$0xff]
      %v759 = vld [vmem:[#allocation2 + $0x8] sm:$0xff]
      %s760 = scalar_lea.vmem %s1, 640
      %v761 = vld [vmem:[%s760] sm:$0xff]
      %v762 = vld [vmem:[%s760 + $0x8] sm:$0xff]
      %v763 = vld [vmem:[%s760 + $0x10] sm:$0xff]
      %v764 = vld [vmem:[%s760 + $0x18] sm:$0xff]
      %v765 = vld [vmem:[%s760 + $0x20] sm:$0xff]
      %v766 = vld [vmem:[%s760 + $0x28] sm:$0xff]
      %v767 = vld [vmem:[%s760 + $0x30] sm:$0xff]
      %v768 = vld [vmem:[%s760 + $0x38] sm:$0xff]
      %v769 = vld [vmem:[%s760 + $0x40] sm:$0xff]
      %v770 = vld [vmem:[%s760 + $0x48] sm:$0xff]
      %v771 = vld [vmem:[%s760 + $0x50] sm:$0xff]
      %v772 = vld [vmem:[%s760 + $0x58] sm:$0xff]
      %v773 = vld [vmem:[%s760 + $0x60] sm:$0xff]
      %v774 = vld [vmem:[%s760 + $0x68] sm:$0xff]
      %v775 = vld [vmem:[%s760 + $0x70] sm:$0xff]
      %v776 = vld [vmem:[%s760 + $0x78] sm:$0xff]
      %777 = vmatprep.subr.mxu0 0.0
      %778 = vmatpush1.msra.mxu0 %v761
      %779 = vmatprep.subr.mxu0 0.0
      %780 = vmatpush1.msra.mxu0 %v762
      %781 = vmatprep.subr.mxu0 0.0
      %782 = vmatpush1.msra.mxu0 %v763
      %783 = vmatprep.subr.mxu0 0.0
      %784 = vmatpush1.msra.mxu0 %v764
      %785 = vmatprep.subr.mxu0 0.0
      %786 = vmatpush1.msra.mxu0 %v765
      %787 = vmatprep.subr.mxu0 0.0
      %788 = vmatpush1.msra.mxu0 %v766
      %789 = vmatprep.subr.mxu0 0.0
      %790 = vmatpush1.msra.mxu0 %v767
      %791 = vmatprep.subr.mxu0 0.0
      %792 = vmatpush1.msra.mxu0 %v768
      %793 = vmatprep.subr.mxu0 0.0
      %794 = vmatpush1.msra.mxu0 %v769
      %795 = vmatprep.subr.mxu0 0.0
      %796 = vmatpush1.msra.mxu0 %v770
      %797 = vmatprep.subr.mxu0 0.0
      %798 = vmatpush1.msra.mxu0 %v771
      %799 = vmatprep.subr.mxu0 0.0
      %800 = vmatpush1.msra.mxu0 %v772
      %801 = vmatprep.subr.mxu0 0.0
      %802 = vmatpush1.msra.mxu0 %v773
      %803 = vmatprep.subr.mxu0 0.0
      %804 = vmatpush1.msra.mxu0 %v774
      %805 = vmatprep.subr.mxu0 0.0
      %806 = vmatpush1.msra.mxu0 %v775
      %807 = vmatprep.subr.mxu0 0.0
      %808 = vmatpush1.msra.mxu0 %v776
      %809 = vmatprep.subr.mxu0 0.0
      %810 = vmatpush1.msra.mxu0 0.0
      %811 = vmatprep.subr.mxu0 0.0
      %812 = vmatpush1.msra.mxu0 0.0
      %813 = vmatprep.subr.mxu0 0.0
      %814 = vmatpush1.msra.mxu0 0.0
      %815 = vmatprep.subr.mxu0 0.0
      %816 = vmatpush1.msra.mxu0 0.0
      %817 = vmatprep.subr.mxu0 0.0
      %818 = vmatpush1.msra.mxu0 0.0
      %819 = vmatprep.subr.mxu0 0.0
      %820 = vmatpush1.msra.mxu0 0.0
      %821 = vmatprep.subr.mxu0 0.0
      %822 = vmatpush1.msra.mxu0 0.0
      %823 = vmatprep.subr.mxu0 0.0
      %824 = vmatpush1.msra.mxu0 0.0
      %825 = vmatprep.subr.mxu0 0.0
      %826 = vmatpush1.msra.mxu0 0.0
      %827 = vmatprep.subr.mxu0 0.0
      %828 = vmatpush1.msra.mxu0 0.0
      %829 = vmatprep.subr.mxu0 0.0
      %830 = vmatpush1.msra.mxu0 0.0
      %831 = vmatprep.subr.mxu0 0.0
      %832 = vmatpush1.msra.mxu0 0.0
      %833 = vmatprep.subr.mxu0 0.0
      %834 = vmatpush1.msra.mxu0 0.0
      %835 = vmatprep.subr.mxu0 0.0
      %836 = vmatpush1.msra.mxu0 0.0
      %837 = vmatprep.subr.mxu0 0.0
      %838 = vmatpush1.msra.mxu0 0.0
      %839 = vmatprep.subr.mxu0 0.0
      %840 = vmatpush1.msra.mxu0 0.0
      %841 = vmatprep.mubr.f32.mxu0 0.0
      %842 = vmatmul.mubr.f32.gmra.mrb[0].mxu0 %v756
      %v843 = vpop.f32.mrb[0].mxu0
      %v844 = vadd.f32 0.0, %v843
      %v845 = vpop.f32.mrb[0].mxu0
      %846 = vmatprep.mubr.f32.mxu0 0.0
      %847 = vmatmul.mubr.f32.gmra.mrb[0].mxu0 %v757
      %v848 = vpop.f32.mrb[0].mxu0
      %v849 = vadd.f32 0.0, %v848
      %v850 = vpop.f32.mrb[0].mxu0
      %851 = vdwg.mxu0
      %v852 = vadd.f32 %v758, %v844
      %v853 = vadd.f32 %v759, %v849
      %854 = vst [vmem:[#allocation2] sm:$0xff] %v852
      %855 = vst [vmem:[#allocation2 + $0x8] sm:$0xff] %v853
      %v856 = vld [vmem:[%s192 + $0xb] sm:$0xff]
      %v857 = vld [vmem:[%s192 + $0x13] sm:$0xff]
      %v858 = vld [vmem:[%s3] sm:$0xff]
      %v859 = vld [vmem:[%s3 + $0x8] sm:$0xff]
      %861 = vset.pattern.permute.xlu0 0
      %862 = vperm.xlu0 %861, %v858
      %v863 = vpop.permute.xlu0 %862
      %866 = vset.pattern.permute.xlu0 0
      %867 = vperm.xlu0 %866, %v859
      %v868 = vpop.permute.xlu0 %867
      %v870 = vmul.f32 %v856, %v863
      %v871 = vmul.f32 %v857, %v868
      %v872 = vld [vmem:[#allocation2] sm:$0xff]
      %v873 = vld [vmem:[#allocation2 + $0x8] sm:$0xff]
      %s874 = scalar_lea.vmem %s1, 768
      %v875 = vld [vmem:[%s874] sm:$0xff]
      %v876 = vld [vmem:[%s874 + $0x8] sm:$0xff]
      %v877 = vld [vmem:[%s874 + $0x10] sm:$0xff]
      %v878 = vld [vmem:[%s874 + $0x18] sm:$0xff]
      %v879 = vld [vmem:[%s874 + $0x20] sm:$0xff]
      %v880 = vld [vmem:[%s874 + $0x28] sm:$0xff]
      %v881 = vld [vmem:[%s874 + $0x30] sm:$0xff]
      %v882 = vld [vmem:[%s874 + $0x38] sm:$0xff]
      %v883 = vld [vmem:[%s874 + $0x40] sm:$0xff]
      %v884 = vld [vmem:[%s874 + $0x48] sm:$0xff]
      %v885 = vld [vmem:[%s874 + $0x50] sm:$0xff]
      %v886 = vld [vmem:[%s874 + $0x58] sm:$0xff]
      %v887 = vld [vmem:[%s874 + $0x60] sm:$0xff]
      %v888 = vld [vmem:[%s874 + $0x68] sm:$0xff]
      %v889 = vld [vmem:[%s874 + $0x70] sm:$0xff]
      %v890 = vld [vmem:[%s874 + $0x78] sm:$0xff]
      %891 = vmatprep.subr.mxu0 0.0
      %892 = vmatpush1.msra.mxu0 %v875
      %893 = vmatprep.subr.mxu0 0.0
      %894 = vmatpush1.msra.mxu0 %v876
      %895 = vmatprep.subr.mxu0 0.0
      %896 = vmatpush1.msra.mxu0 %v877
      %897 = vmatprep.subr.mxu0 0.0
      %898 = vmatpush1.msra.mxu0 %v878
      %899 = vmatprep.subr.mxu0 0.0
      %900 = vmatpush1.msra.mxu0 %v879
      %901 = vmatprep.subr.mxu0 0.0
      %902 = vmatpush1.msra.mxu0 %v880
      %903 = vmatprep.subr.mxu0 0.0
      %904 = vmatpush1.msra.mxu0 %v881
      %905 = vmatprep.subr.mxu0 0.0
      %906 = vmatpush1.msra.mxu0 %v882
      %907 = vmatprep.subr.mxu0 0.0
      %908 = vmatpush1.msra.mxu0 %v883
      %909 = vmatprep.subr.mxu0 0.0
      %910 = vmatpush1.msra.mxu0 %v884
      %911 = vmatprep.subr.mxu0 0.0
      %912 = vmatpush1.msra.mxu0 %v885
      %913 = vmatprep.subr.mxu0 0.0
      %914 = vmatpush1.msra.mxu0 %v886
      %915 = vmatprep.subr.mxu0 0.0
      %916 = vmatpush1.msra.mxu0 %v887
      %917 = vmatprep.subr.mxu0 0.0
      %918 = vmatpush1.msra.mxu0 %v888
      %919 = vmatprep.subr.mxu0 0.0
      %920 = vmatpush1.msra.mxu0 %v889
      %921 = vmatprep.subr.mxu0 0.0
      %922 = vmatpush1.msra.mxu0 %v890
      %923 = vmatprep.subr.mxu0 0.0
      %924 = vmatpush1.msra.mxu0 0.0
      %925 = vmatprep.subr.mxu0 0.0
      %926 = vmatpush1.msra.mxu0 0.0
      %927 = vmatprep.subr.mxu0 0.0
      %928 = vmatpush1.msra.mxu0 0.0
      %929 = vmatprep.subr.mxu0 0.0
      %930 = vmatpush1.msra.mxu0 0.0
      %931 = vmatprep.subr.mxu0 0.0
      %932 = vmatpush1.msra.mxu0 0.0
      %933 = vmatprep.subr.mxu0 0.0
      %934 = vmatpush1.msra.mxu0 0.0
      %935 = vmatprep.subr.mxu0 0.0
      %936 = vmatpush1.msra.mxu0 0.0
      %937 = vmatprep.subr.mxu0 0.0
      %938 = vmatpush1.msra.mxu0 0.0
      %939 = vmatprep.subr.mxu0 0.0
      %940 = vmatpush1.msra.mxu0 0.0
      %941 = vmatprep.subr.mxu0 0.0
      %942 = vmatpush1.msra.mxu0 0.0
      %943 = vmatprep.subr.mxu0 0.0
      %944 = vmatpush1.msra.mxu0 0.0
      %945 = vmatprep.subr.mxu0 0.0
      %946 = vmatpush1.msra.mxu0 0.0
      %947 = vmatprep.subr.mxu0 0.0
      %948 = vmatpush1.msra.mxu0 0.0
      %949 = vmatprep.subr.mxu0 0.0
      %950 = vmatpush1.msra.mxu0 0.0
      %951 = vmatprep.subr.mxu0 0.0
      %952 = vmatpush1.msra.mxu0 0.0
      %953 = vmatprep.subr.mxu0 0.0
      %954 = vmatpush1.msra.mxu0 0.0
      %955 = vmatprep.mubr.f32.mxu0 0.0
      %956 = vmatmul.mubr.f32.gmra.mrb[0].mxu0 %v870
      %v957 = vpop.f32.mrb[0].mxu0
      %v958 = vadd.f32 0.0, %v957
      %v959 = vpop.f32.mrb[0].mxu0
      %960 = vmatprep.mubr.f32.mxu0 0.0
      %961 = vmatmul.mubr.f32.gmra.mrb[0].mxu0 %v871
      %v962 = vpop.f32.mrb[0].mxu0
      %v963 = vadd.f32 0.0, %v962
      %v964 = vpop.f32.mrb[0].mxu0
      %965 = vdwg.mxu0
      %v966 = vadd.f32 %v872, %v958
      %v967 = vadd.f32 %v873, %v963
      %968 = vst [vmem:[#allocation2] sm:$0xff] %v966
      %969 = vst [vmem:[#allocation2 + $0x8] sm:$0xff] %v967
      %v970 = vld [vmem:[%s192 + $0xc] sm:$0xff]
      %v971 = vld [vmem:[%s192 + $0x14] sm:$0xff]
      %v972 = vld [vmem:[#allocation2] sm:$0xff]
      %v973 = vld [vmem:[#allocation2 + $0x8] sm:$0xff]
      %s974 = scalar_lea.vmem %s1, 896
      %v975 = vld [vmem:[%s974] sm:$0xff]
      %v976 = vld [vmem:[%s974 + $0x8] sm:$0xff]
      %v977 = vld [vmem:[%s974 + $0x10] sm:$0xff]
      %v978 = vld [vmem:[%s974 + $0x18] sm:$0xff]
      %v979 = vld [vmem:[%s974 + $0x20] sm:$0xff]
      %v980 = vld [vmem:[%s974 + $0x28] sm:$0xff]
      %v981 = vld [vmem:[%s974 + $0x30] sm:$0xff]
      %v982 = vld [vmem:[%s974 + $0x38] sm:$0xff]
      %v983 = vld [vmem:[%s974 + $0x40] sm:$0xff]
      %v984 = vld [vmem:[%s974 + $0x48] sm:$0xff]
      %v985 = vld [vmem:[%s974 + $0x50] sm:$0xff]
      %v986 = vld [vmem:[%s974 + $0x58] sm:$0xff]
      %v987 = vld [vmem:[%s974 + $0x60] sm:$0xff]
      %v988 = vld [vmem:[%s974 + $0x68] sm:$0xff]
      %v989 = vld [vmem:[%s974 + $0x70] sm:$0xff]
      %v990 = vld [vmem:[%s974 + $0x78] sm:$0xff]
      %991 = vmatprep.subr.mxu0 0.0
      %992 = vmatpush1.msra.mxu0 %v975
      %993 = vmatprep.subr.mxu0 0.0
      %994 = vmatpush1.msra.mxu0 %v976
      %995 = vmatprep.subr.mxu0 0.0
      %996 = vmatpush1.msra.mxu0 %v977
      %997 = vmatprep.subr.mxu0 0.0
      %998 = vmatpush1.msra.mxu0 %v978
      %999 = vmatprep.subr.mxu0 0.0
      %1000 = vmatpush1.msra.mxu0 %v979
      %1001 = vmatprep.subr.mxu0 0.0
      %1002 = vmatpush1.msra.mxu0 %v980
      %1003 = vmatprep.subr.mxu0 0.0
      %1004 = vmatpush1.msra.mxu0 %v981
      %1005 = vmatprep.subr.mxu0 0.0
      %1006 = vmatpush1.msra.mxu0 %v982
      %1007 = vmatprep.subr.mxu0 0.0
      %1008 = vmatpush1.msra.mxu0 %v983
      %1009 = vmatprep.subr.mxu0 0.0
      %1010 = vmatpush1.msra.mxu0 %v984
      %1011 = vmatprep.subr.mxu0 0.0
      %1012 = vmatpush1.msra.mxu0 %v985
      %1013 = vmatprep.subr.mxu0 0.0
      %1014 = vmatpush1.msra.mxu0 %v986
      %1015 = vmatprep.subr.mxu0 0.0
      %1016 = vmatpush1.msra.mxu0 %v987
      %1017 = vmatprep.subr.mxu0 0.0
      %1018 = vmatpush1.msra.mxu0 %v988
      %1019 = vmatprep.subr.mxu0 0.0
      %1020 = vmatpush1.msra.mxu0 %v989
      %1021 = vmatprep.subr.mxu0 0.0
      %1022 = vmatpush1.msra.mxu0 %v990
      %1023 = vmatprep.subr.mxu0 0.0
      %1024 = vmatpush1.msra.mxu0 0.0
      %1025 = vmatprep.subr.mxu0 0.0
      %1026 = vmatpush1.msra.mxu0 0.0
      %1027 = vmatprep.subr.mxu0 0.0
      %1028 = vmatpush1.msra.mxu0 0.0
      %1029 = vmatprep.subr.mxu0 0.0
      %1030 = vmatpush1.msra.mxu0 0.0
      %1031 = vmatprep.subr.mxu0 0.0
      %1032 = vmatpush1.msra.mxu0 0.0
      %1033 = vmatprep.subr.mxu0 0.0
      %1034 = vmatpush1.msra.mxu0 0.0
      %1035 = vmatprep.subr.mxu0 0.0
      %1036 = vmatpush1.msra.mxu0 0.0
      %1037 = vmatprep.subr.mxu0 0.0
      %1038 = vmatpush1.msra.mxu0 0.0
      %1039 = vmatprep.subr.mxu0 0.0
      %1040 = vmatpush1.msra.mxu0 0.0
      %1041 = vmatprep.subr.mxu0 0.0
      %1042 = vmatpush1.msra.mxu0 0.0
      %1043 = vmatprep.subr.mxu0 0.0
      %1044 = vmatpush1.msra.mxu0 0.0
      %1045 = vmatprep.subr.mxu0 0.0
      %1046 = vmatpush1.msra.mxu0 0.0
      %1047 = vmatprep.subr.mxu0 0.0
      %1048 = vmatpush1.msra.mxu0 0.0
      %1049 = vmatprep.subr.mxu0 0.0
      %1050 = vmatpush1.msra.mxu0 0.0
      %1051 = vmatprep.subr.mxu0 0.0
      %1052 = vmatpush1.msra.mxu0 0.0
      %1053 = vmatprep.subr.mxu0 0.0
      %1054 = vmatpush1.msra.mxu0 0.0
      %1055 = vmatprep.mubr.f32.mxu0 0.0
      %1056 = vmatmul.mubr.f32.gmra.mrb[0].mxu0 %v970
      %v1057 = vpop.f32.mrb[0].mxu0
      %v1058 = vadd.f32 0.0, %v1057
      %v1059 = vpop.f32.mrb[0].mxu0
      %1060 = vmatprep.mubr.f32.mxu0 0.0
      %1061 = vmatmul.mubr.f32.gmra.mrb[0].mxu0 %v971
      %v1062 = vpop.f32.mrb[0].mxu0
      %v1063 = vadd.f32 0.0, %v1062
      %v1064 = vpop.f32.mrb[0].mxu0
      %1065 = vdwg.mxu0
      %v1066 = vadd.f32 %v972, %v1058
      %v1067 = vadd.f32 %v973, %v1063
      %1068 = vst [vmem:[#allocation2] sm:$0xff] %v1066
      %1069 = vst [vmem:[#allocation2 + $0x8] sm:$0xff] %v1067
      %v1070 = vld [vmem:[%s192 + $0xd] sm:$0xff]
      %v1071 = vld [vmem:[%s192 + $0x15] sm:$0xff]
      %v1072 = vld [vmem:[%s415] sm:$0xff]
      %v1073 = vld [vmem:[%s415 + $0x8] sm:$0xff]
      %1075 = vset.pattern.permute.xlu0 0
      %1076 = vperm.xlu0 %1075, %v1072
      %v1077 = vpop.permute.xlu0 %1076
      %1080 = vset.pattern.permute.xlu0 0
      %1081 = vperm.xlu0 %1080, %v1073
      %v1082 = vpop.permute.xlu0 %1081
      %v1084 = vmul.f32 %v1070, %v1077
      %v1085 = vmul.f32 %v1071, %v1082
      %v1086 = vld [vmem:[#allocation2] sm:$0xff]
      %v1087 = vld [vmem:[#allocation2 + $0x8] sm:$0xff]
      %s1088 = scalar_lea.vmem %s1, 1024
      %v1089 = vld [vmem:[%s1088] sm:$0xff]
      %v1090 = vld [vmem:[%s1088 + $0x8] sm:$0xff]
      %v1091 = vld [vmem:[%s1088 + $0x10] sm:$0xff]
      %v1092 = vld [vmem:[%s1088 + $0x18] sm:$0xff]
      %v1093 = vld [vmem:[%s1088 + $0x20] sm:$0xff]
      %v1094 = vld [vmem:[%s1088 + $0x28] sm:$0xff]
      %v1095 = vld [vmem:[%s1088 + $0x30] sm:$0xff]
      %v1096 = vld [vmem:[%s1088 + $0x38] sm:$0xff]
      %v1097 = vld [vmem:[%s1088 + $0x40] sm:$0xff]
      %v1098 = vld [vmem:[%s1088 + $0x48] sm:$0xff]
      %v1099 = vld [vmem:[%s1088 + $0x50] sm:$0xff]
      %v1100 = vld [vmem:[%s1088 + $0x58] sm:$0xff]
      %v1101 = vld [vmem:[%s1088 + $0x60] sm:$0xff]
      %v1102 = vld [vmem:[%s1088 + $0x68] sm:$0xff]
      %v1103 = vld [vmem:[%s1088 + $0x70] sm:$0xff]
      %v1104 = vld [vmem:[%s1088 + $0x78] sm:$0xff]
      %1105 = vmatprep.subr.mxu0 0.0
      %1106 = vmatpush1.msra.mxu0 %v1089
      %1107 = vmatprep.subr.mxu0 0.0
      %1108 = vmatpush1.msra.mxu0 %v1090
      %1109 = vmatprep.subr.mxu0 0.0
      %1110 = vmatpush1.msra.mxu0 %v1091
      %1111 = vmatprep.subr.mxu0 0.0
      %1112 = vmatpush1.msra.mxu0 %v1092
      %1113 = vmatprep.subr.mxu0 0.0
      %1114 = vmatpush1.msra.mxu0 %v1093
      %1115 = vmatprep.subr.mxu0 0.0
      %1116 = vmatpush1.msra.mxu0 %v1094
      %1117 = vmatprep.subr.mxu0 0.0
      %1118 = vmatpush1.msra.mxu0 %v1095
      %1119 = vmatprep.subr.mxu0 0.0
      %1120 = vmatpush1.msra.mxu0 %v1096
      %1121 = vmatprep.subr.mxu0 0.0
      %1122 = vmatpush1.msra.mxu0 %v1097
      %1123 = vmatprep.subr.mxu0 0.0
      %1124 = vmatpush1.msra.mxu0 %v1098
      %1125 = vmatprep.subr.mxu0 0.0
      %1126 = vmatpush1.msra.mxu0 %v1099
      %1127 = vmatprep.subr.mxu0 0.0
      %1128 = vmatpush1.msra.mxu0 %v1100
      %1129 = vmatprep.subr.mxu0 0.0
      %1130 = vmatpush1.msra.mxu0 %v1101
      %1131 = vmatprep.subr.mxu0 0.0
      %1132 = vmatpush1.msra.mxu0 %v1102
      %1133 = vmatprep.subr.mxu0 0.0
      %1134 = vmatpush1.msra.mxu0 %v1103
      %1135 = vmatprep.subr.mxu0 0.0
      %1136 = vmatpush1.msra.mxu0 %v1104
      %1137 = vmatprep.subr.mxu0 0.0
      %1138 = vmatpush1.msra.mxu0 0.0
      %1139 = vmatprep.subr.mxu0 0.0
      %1140 = vmatpush1.msra.mxu0 0.0
      %1141 = vmatprep.subr.mxu0 0.0
      %1142 = vmatpush1.msra.mxu0 0.0
      %1143 = vmatprep.subr.mxu0 0.0
      %1144 = vmatpush1.msra.mxu0 0.0
      %1145 = vmatprep.subr.mxu0 0.0
      %1146 = vmatpush1.msra.mxu0 0.0
      %1147 = vmatprep.subr.mxu0 0.0
      %1148 = vmatpush1.msra.mxu0 0.0
      %1149 = vmatprep.subr.mxu0 0.0
      %1150 = vmatpush1.msra.mxu0 0.0
      %1151 = vmatprep.subr.mxu0 0.0
      %1152 = vmatpush1.msra.mxu0 0.0
      %1153 = vmatprep.subr.mxu0 0.0
      %1154 = vmatpush1.msra.mxu0 0.0
      %1155 = vmatprep.subr.mxu0 0.0
      %1156 = vmatpush1.msra.mxu0 0.0
      %1157 = vmatprep.subr.mxu0 0.0
      %1158 = vmatpush1.msra.mxu0 0.0
      %1159 = vmatprep.subr.mxu0 0.0
      %1160 = vmatpush1.msra.mxu0 0.0
      %1161 = vmatprep.subr.mxu0 0.0
      %1162 = vmatpush1.msra.mxu0 0.0
      %1163 = vmatprep.subr.mxu0 0.0
      %1164 = vmatpush1.msra.mxu0 0.0
      %1165 = vmatprep.subr.mxu0 0.0
      %1166 = vmatpush1.msra.mxu0 0.0
      %1167 = vmatprep.subr.mxu0 0.0
      %1168 = vmatpush1.msra.mxu0 0.0
      %1169 = vmatprep.mubr.f32.mxu0 0.0
      %1170 = vmatmul.mubr.f32.gmra.mrb[0].mxu0 %v1084
      %v1171 = vpop.f32.mrb[0].mxu0
      %v1172 = vadd.f32 0.0, %v1171
      %v1173 = vpop.f32.mrb[0].mxu0
      %1174 = vmatprep.mubr.f32.mxu0 0.0
      %1175 = vmatmul.mubr.f32.gmra.mrb[0].mxu0 %v1085
      %v1176 = vpop.f32.mrb[0].mxu0
      %v1177 = vadd.f32 0.0, %v1176
      %v1178 = vpop.f32.mrb[0].mxu0
      %1179 = vdwg.mxu0
      %v1180 = vadd.f32 %v1086, %v1172
      %v1181 = vadd.f32 %v1087, %v1177
      %1182 = vst [vmem:[#allocation2] sm:$0xff] %v1180
      %1183 = vst [vmem:[#allocation2 + $0x8] sm:$0xff] %v1181
      %v1184 = vld [vmem:[#allocation2] sm:$0xff]
      %v1185 = vld [vmem:[#allocation2 + $0x8] sm:$0xff]
      %v1186 = vld [vmem:[%s2] sm:$0x1]
      %v1188 = vlaneseq
      %v1189 = vshrl.u32 %v1188, 7
      %v1190 = vsub.s32 0, %v1189
      %v1191 = vrot.slane %v1186, %v1190
      %v1193 = vadd.f32 %v1184, %v1191
      %v1194 = vadd.f32 %v1185, %v1191
      %v1195 = vmax.f32 %v1193, 0.0
      %v1196 = vmax.f32 %v1194, 0.0
      %1197 = vst [vmem:[%s197] sm:$0xff] %v1195
      %1198 = vst [vmem:[%s197 + $0x8] sm:$0xff] %v1196
      %p1199 = scmp.lt.s32.totalorder %s15, 1
      %s1200 = scalar_select %p1199, %s15, 1
      %s1201 = smul.addr %s1200, 2
      %s1202 = smul.addr %s1201, 8
      %s1203 = scalar_lea.vmem %s4, %s1202
      // Predicated region
      $region37: #{cnn_forward.5} parent=35 // pred_check
        %p1204 = pneg %p122
      $region38: #{cnn_forward.5} parent=35 // pred_check_branch
        %1206 = sbr.rel (%p1204) target = $region40
      $region39: #{cnn_forward.5} parent=35 // pred_region
        _
      $region40: #{cnn_forward.5} parent=35 // pred_fallthru
        _
    $region36: #{cnn_forward.5} parent=5 // pred_fallthru
      _
    %p1207 = scmp.le.s32.totalorder 2, %s10
    // Predicated region
    $region41: #{cnn_forward.5} parent=5 // pred_check
      %p1208 = pneg %p1207
    $region42: #{cnn_forward.5} parent=5 // pred_check_branch
      %1210 = sbr.rel (%p1208) target = $region44
    $region43: #{cnn_forward.5} parent=5 // pred_region
      %s1211 = ssub.s32 %s10, 2
      // Predicated region
      $region45: #{cnn_forward.5} parent=43 // pred_check
        %p1212 = pneg %p128
      $region46: #{cnn_forward.5} parent=43 // pred_check_branch
        %1214 = sbr.rel (%p1212) target = $region48
      $region47: #{cnn_forward.5} parent=43 // pred_region
        %p1215 = scmp.lt.s32.totalorder %s16, 1
        %s1216 = scalar_select %p1215, %s16, 1
        %s1217 = smul.addr %s1216, 2
        %s1218 = smul.addr %s1217, 8
        %s1219 = scalar_lea.vmem %s4, %s1218
      $region48: #{cnn_forward.5} parent=43 // pred_fallthru
        _
    $region44: #{cnn_forward.5} parent=5 // pred_fallthru
      _
  $region6: #{cnn_forward.5} parent=0 // loop_footer
    %s14 = sadd.s32 1, %s10
  $region7: #{cnn_forward.5} parent=0 // loop_footer_branch
    %9 = sbr.rel target = $region3
  $region8: #{cnn_forward.5} parent=0 // loop_exit
    _

// kernel: cnn_forward.4
$region0: #{cnn_forward.4}
  #allocation0 [shape = 'u32[]', space=smem, size = 0x4, offset = 0x4, fixed_abs, tag = 'smem constant byte address 0x4 - core index']
  #allocation1 [shape = 'u32[144,128]{1,0:T(1,128)}', space=vmem, size = 0x12000, scoped, tag = 'internal scratch']
  #allocation2 [shape = 'f32[64,128]{1,0:T(8,128)}', space=vmem, size = 0x8000, scoped, tag = 'scratch operand']
  %s0 = inlined_call_operand.vmem [shape: f32[2,96,8], index: 0, kind: input, shape index: {}]
  %s1 = inlined_call_operand.vmem [shape: f32[9,8,128], index: 1, kind: input, shape index: {}]
  %s2 = inlined_call_operand.vmem [shape: f32[1,128], index: 2, kind: input, shape index: {}]
  %s3 = inlined_call_operand.vmem [shape: f32[2,64,1], index: 3, kind: input, shape index: {}]
  %s4 = inlined_call_operand.vmem [shape: f32[2,64,128], index: 4, kind: output, shape index: {}]
  %s5 = sld [smem:[#allocation0]]
  $region49: #{cnn_forward.4} parent=0
    _
  %s7 = ssub.s32 1, %s5
  %s8 = scalar_select 0, %s7, %s5
  loop: start=0, step=1, limit=4
  $region2: #{cnn_forward.4} parent=0 // loop_pre_header
    _
  $region3: #{cnn_forward.4} parent=0 // loop_header
    %s10 = sphi 0, %s14
    %p11 = scmp.ge.s32.totalorder %s10, 4
    %s20 = sphi 0, %s22
    %s23 = sphi 0, %s20
    %s24 = sphi 0, %s23
    %s40 = sphi 0, %s24
    %s44 = sphi 0, %s44
    %s46 = sphi 0, %s44
    %s47 = sphi 0, %s46
    %s61 = sphi 0, %s47
    %s65 = sphi 0, %s65
    %s67 = sphi 0, %s65
    %s68 = sphi 0, %s67
    %s82 = sphi 0, %s68
    %s86 = sphi 0, %s86
    %s88 = sphi 0, %s86
    %s89 = sphi 0, %s88
    %s103 = sphi 0, %s89
    %s109 = sphi 0, %s111
    %s112 = sphi 0, %s109
    %s113 = sphi 0, %s112
    %s129 = sphi 0, %s113
  $region4: #{cnn_forward.4} parent=0 // loop_header_branch
    %13 = sbr.rel (%p11) target = $region8
  $region5: #{cnn_forward.4} parent=0 // loop_body
    %s15 = ssub.s32 %s10, 1
    %s16 = ssub.s32 %s10, 2
    %s17 = sadd.s32 %s10, 1
    %s18 = ssub.s32 %s10, %s17
    %p19 = scmp.eq.s32.totalorder %s18, 0
    %s21 = sadd.s32 %s20, 1
    %s22 = scalar_select %p19, %s20, %s21
    %p25 = pneg %p19
    %p26 = scmp.eq.s32.totalorder %s10, 1
    %p27 = por %p25, %p26
    %p28 = scmp.ne.s32.totalorder %s20, %s23
    %p29 = scmp.eq.s32.totalorder %s10, 0
    %p30 = por %p28, %p29
    %p31 = scmp.ne.s32.totalorder %s20, %s23
    %p32 = scmp.eq.s32.totalorder %s15, 1
    %p33 = por %p31, %p32
    %p34 = scmp.ne.s32.totalorder %s23, %s24
    %p35 = scmp.eq.s32.totalorder %s15, 0
    %p36 = por %p34, %p35
    %p37 = scmp.ne.s32.totalorder %s23, %s24
    %p38 = scmp.eq.s32.totalorder %s16, 1
    %p39 = por %p37, %p38
    %p41 = scmp.ne.s32.totalorder %s24, %s40
    %p42 = scmp.eq.s32.totalorder %s16, 0
    %p43 = por %p41, %p42
    %s45 = sadd.s32 %s44, 1
    %p48 = scmp.eq.s32.totalorder %s10, 1
    %p49 = scmp.ne.s32.totalorder %s44, %s46
    %p50 = scmp.eq.s32.totalorder %s10, 0
    %p51 = por %p49, %p50
    %p52 = scmp.ne.s32.totalorder %s44, %s46
    %p53 = scmp.eq.s32.totalorder %s15, 1
    %p54 = por %p52, %p53
    %p55 = scmp.ne.s32.totalorder %s46, %s47
    %p56 = scmp.eq.s32.totalorder %s15, 0
    %p57 = por %p55, %p56
    %p58 = scmp.ne.s32.totalorder %s46, %s47
    %p59 = scmp.eq.s32.totalorder %s16, 1
    %p60 = por %p58, %p59
    %p62 = scmp.ne.s32.totalorder %s47, %s61
    %p63 = scmp.eq.s32.totalorder %s16, 0
    %p64 = por %p62, %p63
    %s66 = sadd.s32 %s65, 1
    %p69 = scmp.eq.s32.totalorder %s10, 1
    %p70 = scmp.ne.s32.totalorder %s65, %s67
    %p71 = scmp.eq.s32.totalorder %s10, 0
    %p72 = por %p70, %p71
    %p73 = scmp.ne.s32.totalorder %s65, %s67
    %p74 = scmp.eq.s32.totalorder %s15, 1
    %p75 = por %p73, %p74
    %p76 = scmp.ne.s32.totalorder %s67, %s68
    %p77 = scmp.eq.s32.totalorder %s15, 0
    %p78 = por %p76, %p77
    %p79 = scmp.ne.s32.totalorder %s67, %s68
    %p80 = scmp.eq.s32.totalorder %s16, 1
    %p81 = por %p79, %p80
    %p83 = scmp.ne.s32.totalorder %s68, %s82
    %p84 = scmp.eq.s32.totalorder %s16, 0
    %p85 = por %p83, %p84
    %s87 = sadd.s32 %s86, 1
    %p90 = scmp.eq.s32.totalorder %s10, 1
    %p91 = scmp.ne.s32.totalorder %s86, %s88
    %p92 = scmp.eq.s32.totalorder %s10, 0
    %p93 = por %p91, %p92
    %p94 = scmp.ne.s32.totalorder %s86, %s88
    %p95 = scmp.eq.s32.totalorder %s15, 1
    %p96 = por %p94, %p95
    %p97 = scmp.ne.s32.totalorder %s88, %s89
    %p98 = scmp.eq.s32.totalorder %s15, 0
    %p99 = por %p97, %p98
    %p100 = scmp.ne.s32.totalorder %s88, %s89
    %p101 = scmp.eq.s32.totalorder %s16, 1
    %p102 = por %p100, %p101
    %p104 = scmp.ne.s32.totalorder %s89, %s103
    %p105 = scmp.eq.s32.totalorder %s16, 0
    %p106 = por %p104, %p105
    %s107 = ssub.s32 %s10, %s17
    %p108 = scmp.eq.s32.totalorder %s107, 0
    %s110 = sadd.s32 %s109, 1
    %s111 = scalar_select %p108, %s109, %s110
    %p114 = pneg %p108
    %p115 = scmp.eq.s32.totalorder %s10, 1
    %p116 = por %p114, %p115
    %p117 = scmp.ne.s32.totalorder %s109, %s112
    %p118 = scmp.eq.s32.totalorder %s10, 0
    %p119 = por %p117, %p118
    %p120 = scmp.ne.s32.totalorder %s109, %s112
    %p121 = scmp.eq.s32.totalorder %s15, 1
    %p122 = por %p120, %p121
    %p123 = scmp.ne.s32.totalorder %s112, %s113
    %p124 = scmp.eq.s32.totalorder %s15, 0
    %p125 = por %p123, %p124
    %p126 = scmp.ne.s32.totalorder %s112, %s113
    %p127 = scmp.eq.s32.totalorder %s16, 1
    %p128 = por %p126, %p127
    %p130 = scmp.ne.s32.totalorder %s113, %s129
    %p131 = scmp.eq.s32.totalorder %s16, 0
    %p132 = por %p130, %p131
    %p133 = scmp.le.s32.totalorder 1, %s10
    %p134 = scmp.lt.s32.totalorder %s10, 3
    %p135 = pnand %p133, %p134
    %p136 = pneg %p135
    // Predicated region
    $region9: #{cnn_forward.4} parent=5 // pred_check
      _
    $region10: #{cnn_forward.4} parent=5 // pred_check_branch
      %138 = sbr.rel (%p135) target = $region12
    $region11: #{cnn_forward.4} parent=5 // pred_region
      %s139 = ssub.s32 %s10, 1
      // Predicated region
      $region13: #{cnn_forward.4} parent=11 // pred_check
        %p140 = pneg %p57
      $region14: #{cnn_forward.4} parent=11 // pred_check_branch
        %142 = sbr.rel (%p140) target = $region16
      $region15: #{cnn_forward.4} parent=11 // pred_region
        _
      $region16: #{cnn_forward.4} parent=11 // pred_fallthru
        _
      // Predicated region
      $region17: #{cnn_forward.4} parent=11 // pred_check
        %p143 = pneg %p78
      $region18: #{cnn_forward.4} parent=11 // pred_check_branch
        %145 = sbr.rel (%p143) target = $region20
      $region19: #{cnn_forward.4} parent=11 // pred_region
        _
      $region20: #{cnn_forward.4} parent=11 // pred_fallthru
        _
      // Predicated region
      $region21: #{cnn_forward.4} parent=11 // pred_check
        %p146 = pneg %p99
      $region22: #{cnn_forward.4} parent=11 // pred_check_branch
        %148 = sbr.rel (%p146) target = $region24
      $region23: #{cnn_forward.4} parent=11 // pred_region
        _
      $region24: #{cnn_forward.4} parent=11 // pred_fallthru
        _
    $region12: #{cnn_forward.4} parent=5 // pred_fallthru
      _
    %p149 = scmp.lt.s32.totalorder %s10, 2
    // Predicated region
    $region25: #{cnn_forward.4} parent=5 // pred_check
      %p150 = pneg %p149
    $region26: #{cnn_forward.4} parent=5 // pred_check_branch
      %152 = sbr.rel (%p150) target = $region28
    $region27: #{cnn_forward.4} parent=5 // pred_region
      // Predicated region
      $region29: #{cnn_forward.4} parent=27 // pred_check
        %p153 = pneg %p30
      $region30: #{cnn_forward.4} parent=27 // pred_check_branch
        %155 = sbr.rel (%p153) target = $region32
      $region31: #{cnn_forward.4} parent=27 // pred_region
        %p156 = scmp.lt.s32.totalorder %s10, 1
        %s157 = scalar_select %p156, %s10, 1
        %s158 = smul.addr %s157, 12
        %s159 = smul.addr %s158, 8
        %s160 = scalar_lea.vmem %s0, %s159
      $region32: #{cnn_forward.4} parent=27 // pred_fallthru
        _
    $region28: #{cnn_forward.4} parent=5 // pred_fallthru
      _
    %p161 = scmp.le.s32.totalorder 1, %s10
    %p162 = scmp.lt.s32.totalorder %s10, 3
    %p163 = pnand %p161, %p162
    %p164 = pneg %p163
    // Predicated region
    $region33: #{cnn_forward.4} parent=5 // pred_check
      _
    $region34: #{cnn_forward.4} parent=5 // pred_check_branch
      %166 = sbr.rel (%p163) target = $region36
    $region35: #{cnn_forward.4} parent=5 // pred_region
      %s167 = ssub.s32 %s10, 1
      %p168 = scmp.lt.s32.totalorder %s15, 1
      %s169 = scalar_select %p168, %s15, 1
      %s170 = smul.addr %s169, 12
      %s171 = smul.addr %s170, 8
      %s172 = scalar_lea.vmem %s0, %s171
      %p173 = pneg %p36
      %p174 = pneg %p33
      %p175 = pneg %p57
      %p176 = pneg %p54
      %p177 = pneg %p78
      %p178 = pneg %p75
      %p179 = pneg %p99
      %p180 = pneg %p96
      %p181 = pneg %p125
      %p182 = pneg %p122
      %p183 = scmp.lt.s32.totalorder %s15, 1
      %s184 = scalar_select %p183, %s15, 1
      %s185 = smul.addr %s184, 8
      %s186 = smul.addr %s185, 8
      %s187 = scalar_lea.vmem %s4, %s186
      %p188 = scmp.lt.s32.totalorder %s15, 1
      %s189 = scalar_select %p188, %s15, 1
      %s190 = smul.addr %s189, 12
      %s191 = smul.addr %s190, 8
      %s192 = scalar_lea.vmem %s0, %s191
      %p193 = scmp.lt.s32.totalorder %s15, 1
      %s194 = scalar_select %p193, %s15, 1
      %s195 = smul.addr %s194, 8
      %s196 = smul.addr %s195, 8
      %s197 = scalar_lea.vmem %s4, %s196
      %198 = vst [vmem:[#allocation2] sm:$0xff] 0.0
      %199 = vst [vmem:[#allocation2 + $0x8] sm:$0xff] 0.0
      %200 = vst [vmem:[#allocation2 + $0x10] sm:$0xff] 0.0
      %201 = vst [vmem:[#allocation2 + $0x18] sm:$0xff] 0.0
      %202 = vst [vmem:[#allocation2 + $0x20] sm:$0xff] 0.0
      %203 = vst [vmem:[#allocation2 + $0x28] sm:$0xff] 0.0
      %204 = vst [vmem:[#allocation2 + $0x30] sm:$0xff] 0.0
      %205 = vst [vmem:[#allocation2 + $0x38] sm:$0xff] 0.0
      %v206 = vld [vmem:[%s192 + $0x7] sm:$0xff]
      %v207 = vld [vmem:[%s192 + $0xf] sm:$0xff]
      %v208 = vld [vmem:[%s192 + $0x17] sm:$0xff]
      %v209 = vld [vmem:[%s192 + $0x1f] sm:$0xff]
      %v210 = vld [vmem:[%s192 + $0x27] sm:$0xff]
      %v211 = vld [vmem:[%s192 + $0x2f] sm:$0xff]
      %v212 = vld [vmem:[%s192 + $0x37] sm:$0xff]
      %v213 = vld [vmem:[%s192 + $0x3f] sm:$0xff]
      %v214 = vld [vmem:[%s3] sm:$0xff]
      %v215 = vld [vmem:[%s3 + $0x8] sm:$0xff]
      %v216 = vld [vmem:[%s3 + $0x10] sm:$0xff]
      %v217 = vld [vmem:[%s3 + $0x18] sm:$0xff]
      %v218 = vld [vmem:[%s3 + $0x20] sm:$0xff]
      %v219 = vld [vmem:[%s3 + $0x28] sm:$0xff]
      %v220 = vld [vmem:[%s3 + $0x30] sm:$0xff]
      %v221 = vld [vmem:[%s3 + $0x38] sm:$0xff]
      %223 = vset.pattern.permute.xlu0 0
      %224 = vperm.xlu0 %223, %v214
      %v225 = vpop.permute.xlu0 %224
      %228 = vset.pattern.permute.xlu0 0
      %229 = vperm.xlu0 %228, %v215
      %v230 = vpop.permute.xlu0 %229
      %233 = vset.pattern.permute.xlu0 0
      %234 = vperm.xlu0 %233, %v216
      %v235 = vpop.permute.xlu0 %234
      %238 = vset.pattern.permute.xlu0 0
      %239 = vperm.xlu0 %238, %v217
      %v240 = vpop.permute.xlu0 %239
      %243 = vset.pattern.permute.xlu0 0
      %244 = vperm.xlu0 %243, %v218
      %v245 = vpop.permute.xlu0 %244
      %248 = vset.pattern.permute.xlu0 0
      %249 = vperm.xlu0 %248, %v219
      %v250 = vpop.permute.xlu0 %249
      %253 = vset.pattern.permute.xlu0 0
      %254 = vperm.xlu0 %253, %v220
      %v255 = vpop.permute.xlu0 %254
      %258 = vset.pattern.permute.xlu0 0
      %259 = vperm.xlu0 %258, %v221
      %v260 = vpop.permute.xlu0 %259
      %v262 = vmul.f32 %v206, %v225
      %v263 = vmul.f32 %v207, %v230
      %v264 = vmul.f32 %v208, %v235
      %v265 = vmul.f32 %v209, %v240
      %v266 = vmul.f32 %v210, %v245
      %v267 = vmul.f32 %v211, %v250
      %v268 = vmul.f32 %v212, %v255
      %v269 = vmul.f32 %v213, %v260
      %v270 = vld [vmem:[#allocation2] sm:$0xff]
      %v271 = vld [vmem:[#allocation2 + $0x8] sm:$0xff]
      %v272 = vld [vmem:[#allocation2 + $0x10] sm:$0xff]
      %v273 = vld [vmem:[#allocation2 + $0x18] sm:$0xff]
      %v274 = vld [vmem:[#allocation2 + $0x20] sm:$0xff]
      %v275 = vld [vmem:[#allocation2 + $0x28] sm:$0xff]
      %v276 = vld [vmem:[#allocation2 + $0x30] sm:$0xff]
      %v277 = vld [vmem:[#allocation2 + $0x38] sm:$0xff]
      %v278 = vld [vmem:[%s1] sm:$0xff]
      %vm279 = vcmask 64512
      %v281 = vsel %vm279, %v262, 0
      %v284 = vsel %vm279, %v263, 0
      %v287 = vsel %vm279, %v264, 0
      %v290 = vsel %vm279, %v265, 0
      %v293 = vsel %vm279, %v266, 0
      %v296 = vsel %vm279, %v267, 0
      %v299 = vsel %vm279, %v268, 0
      %v302 = vsel %vm279, %v269, 0
      %304 = vmatprep.subr.mxu0 0.0
      %305 = vmatpush1.msra.mxu0 %v278
      %306 = vmatprep.subr.mxu0 0.0
      %307 = vmatpush1.msra.mxu0 0.0
      %308 = vmatprep.subr.mxu0 0.0
      %309 = vmatpush1.msra.mxu0 0.0
      %310 = vmatprep.subr.mxu0 0.0
      %311 = vmatpush1.msra.mxu0 0.0
      %312 = vmatprep.subr.mxu0 0.0
      %313 = vmatpush1.msra.mxu0 0.0
      %314 = vmatprep.subr.mxu0 0.0
      %315 = vmatpush1.msra.mxu0 0.0
      %316 = vmatprep.subr.mxu0 0.0
      %317 = vmatpush1.msra.mxu0 0.0
      %318 = vmatprep.subr.mxu0 0.0
      %319 = vmatpush1.msra.mxu0 0.0
      %320 = vmatprep.subr.mxu0 0.0
      %321 = vmatpush1.msra.mxu0 0.0
      %322 = vmatprep.subr.mxu0 0.0
      %323 = vmatpush1.msra.mxu0 0.0
      %324 = vmatprep.subr.mxu0 0.0
      %325 = vmatpush1.msra.mxu0 0.0
      %326 = vmatprep.subr.mxu0 0.0
      %327 = vmatpush1.msra.mxu0 0.0
      %328 = vmatprep.subr.mxu0 0.0
      %329 = vmatpush1.msra.mxu0 0.0
      %330 = vmatprep.subr.mxu0 0.0
      %331 = vmatpush1.msra.mxu0 0.0
      %332 = vmatprep.subr.mxu0 0.0
      %333 = vmatpush1.msra.mxu0 0.0
      %334 = vmatprep.subr.mxu0 0.0
      %335 = vmatpush1.msra.mxu0 0.0
      %336 = vmatprep.subr.mxu0 0.0
      %337 = vmatpush1.msra.mxu0 0.0
      %338 = vmatprep.subr.mxu0 0.0
      %339 = vmatpush1.msra.mxu0 0.0
      %340 = vmatprep.subr.mxu0 0.0
      %341 = vmatpush1.msra.mxu0 0.0
      %342 = vmatprep.subr.mxu0 0.0
      %343 = vmatpush1.msra.mxu0 0.0
      %344 = vmatprep.subr.mxu0 0.0
      %345 = vmatpush1.msra.mxu0 0.0
      %346 = vmatprep.subr.mxu0 0.0
      %347 = vmatpush1.msra.mxu0 0.0
      %348 = vmatprep.subr.mxu0 0.0
      %349 = vmatpush1.msra.mxu0 0.0
      %350 = vmatprep.subr.mxu0 0.0
      %351 = vmatpush1.msra.mxu0 0.0
      %352 = vmatprep.subr.mxu0 0.0
      %353 = vmatpush1.msra.mxu0 0.0
      %354 = vmatprep.subr.mxu0 0.0
      %355 = vmatpush1.msra.mxu0 0.0
      %356 = vmatprep.subr.mxu0 0.0
      %357 = vmatpush1.msra.mxu0 0.0
      %358 = vmatprep.subr.mxu0 0.0
      %359 = vmatpush1.msra.mxu0 0.0
      %360 = vmatprep.subr.mxu0 0.0
      %361 = vmatpush1.msra.mxu0 0.0
      %362 = vmatprep.subr.mxu0 0.0
      %363 = vmatpush1.msra.mxu0 0.0
      %364 = vmatprep.subr.mxu0 0.0
      %365 = vmatpush1.msra.mxu0 0.0
      %366 = vmatprep.subr.mxu0 0.0
      %367 = vmatpush1.msra.mxu0 0.0
      %368 = vmatprep.mubr.f32.mxu0 0.0
      %369 = vmatmul.mubr.f32.gmra.mrb[0].mxu0 %v281
      %v370 = vpop.f32.mrb[0].mxu0
      %v371 = vadd.f32 0.0, %v370
      %v372 = vpop.f32.mrb[0].mxu0
      %373 = vmatprep.mubr.f32.mxu0 0.0
      %374 = vmatmul.mubr.f32.gmra.mrb[0].mxu0 %v284
      %v375 = vpop.f32.mrb[0].mxu0
      %v376 = vadd.f32 0.0, %v375
      %v377 = vpop.f32.mrb[0].mxu0
      %378 = vmatprep.mubr.f32.mxu0 0.0
      %379 = vmatmul.mubr.f32.gmra.mrb[0].mxu0 %v287
      %v380 = vpop.f32.mrb[0].mxu0
      %v381 = vadd.f32 0.0, %v380
      %v382 = vpop.f32.mrb[0].mxu0
      %383 = vmatprep.mubr.f32.mxu0 0.0
      %384 = vmatmul.mubr.f32.gmra.mrb[0].mxu0 %v290
      %v385 = vpop.f32.mrb[0].mxu0
      %v386 = vadd.f32 0.0, %v385
      %v387 = vpop.f32.mrb[0].mxu0
      %388 = vmatprep.mubr.f32.mxu0 0.0
      %389 = vmatmul.mubr.f32.gmra.mrb[0].mxu0 %v293
      %v390 = vpop.f32.mrb[0].mxu0
      %v391 = vadd.f32 0.0, %v390
      %v392 = vpop.f32.mrb[0].mxu0
      %393 = vmatprep.mubr.f32.mxu0 0.0
      %394 = vmatmul.mubr.f32.gmra.mrb[0].mxu0 %v296
      %v395 = vpop.f32.mrb[0].mxu0
      %v396 = vadd.f32 0.0, %v395
      %v397 = vpop.f32.mrb[0].mxu0
      %398 = vmatprep.mubr.f32.mxu0 0.0
      %399 = vmatmul.mubr.f32.gmra.mrb[0].mxu0 %v299
      %v400 = vpop.f32.mrb[0].mxu0
      %v401 = vadd.f32 0.0, %v400
      %v402 = vpop.f32.mrb[0].mxu0
      %403 = vmatprep.mubr.f32.mxu0 0.0
      %404 = vmatmul.mubr.f32.gmra.mrb[0].mxu0 %v302
      %v405 = vpop.f32.mrb[0].mxu0
      %v406 = vadd.f32 0.0, %v405
      %v407 = vpop.f32.mrb[0].mxu0
      %408 = vdwg.mxu0
      %v409 = vadd.f32 %v270, %v371
      %v410 = vadd.f32 %v271, %v376
      %v411 = vadd.f32 %v272, %v381
      %v412 = vadd.f32 %v273, %v386
      %v413 = vadd.f32 %v274, %v391
      %v414 = vadd.f32 %v275, %v396
      %v415 = vadd.f32 %v276, %v401
      %v416 = vadd.f32 %v277, %v406
      %417 = vst [vmem:[#allocation2] sm:$0xff] %v409
      %418 = vst [vmem:[#allocation2 + $0x8] sm:$0xff] %v410
      %419 = vst [vmem:[#allocation2 + $0x10] sm:$0xff] %v411
      %420 = vst [vmem:[#allocation2 + $0x18] sm:$0xff] %v412
      %421 = vst [vmem:[#allocation2 + $0x20] sm:$0xff] %v413
      %422 = vst [vmem:[#allocation2 + $0x28] sm:$0xff] %v414
      %423 = vst [vmem:[#allocation2 + $0x30] sm:$0xff] %v415
      %424 = vst [vmem:[#allocation2 + $0x38] sm:$0xff] %v416
      %v425 = vld [vmem:[%s192 + $0x8] sm:$0xff]
      %v426 = vld [vmem:[%s192 + $0x10] sm:$0xff]
      %v427 = vld [vmem:[%s192 + $0x18] sm:$0xff]
      %v428 = vld [vmem:[%s192 + $0x20] sm:$0xff]
      %v429 = vld [vmem:[%s192 + $0x28] sm:$0xff]
      %v430 = vld [vmem:[%s192 + $0x30] sm:$0xff]
      %v431 = vld [vmem:[%s192 + $0x38] sm:$0xff]
      %v432 = vld [vmem:[%s192 + $0x40] sm:$0xff]
      %v433 = vld [vmem:[#allocation2] sm:$0xff]
      %v434 = vld [vmem:[#allocation2 + $0x8] sm:$0xff]
      %v435 = vld [vmem:[#allocation2 + $0x10] sm:$0xff]
      %v436 = vld [vmem:[#allocation2 + $0x18] sm:$0xff]
      %v437 = vld [vmem:[#allocation2 + $0x20] sm:$0xff]
      %v438 = vld [vmem:[#allocation2 + $0x28] sm:$0xff]
      %v439 = vld [vmem:[#allocation2 + $0x30] sm:$0xff]
      %v440 = vld [vmem:[#allocation2 + $0x38] sm:$0xff]
      %s441 = scalar_lea.vmem %s1, 8
      %v442 = vld [vmem:[%s441] sm:$0xff]
      %v444 = vsel %vm279, %v425, 0
      %v447 = vsel %vm279, %v426, 0
      %v450 = vsel %vm279, %v427, 0
      %v453 = vsel %vm279, %v428, 0
      %v456 = vsel %vm279, %v429, 0
      %v459 = vsel %vm279, %v430, 0
      %v462 = vsel %vm279, %v431, 0
      %v465 = vsel %vm279, %v432, 0
      %467 = vmatprep.subr.mxu0 0.0
      %468 = vmatpush1.msra.mxu0 %v442
      %469 = vmatprep.subr.mxu0 0.0
      %470 = vmatpush1.msra.mxu0 0.0
      %471 = vmatprep.subr.mxu0 0.0
      %472 = vmatpush1.msra.mxu0 0.0
      %473 = vmatprep.subr.mxu0 0.0
      %474 = vmatpush1.msra.mxu0 0.0
      %475 = vmatprep.subr.mxu0 0.0
      %476 = vmatpush1.msra.mxu0 0.0
      %477 = vmatprep.subr.mxu0 0.0
      %478 = vmatpush1.msra.mxu0 0.0
      %479 = vmatprep.subr.mxu0 0.0
      %480 = vmatpush1.msra.mxu0 0.0
      %481 = vmatprep.subr.mxu0 0.0
      %482 = vmatpush1.msra.mxu0 0.0
      %483 = vmatprep.subr.mxu0 0.0
      %484 = vmatpush1.msra.mxu0 0.0
      %485 = vmatprep.subr.mxu0 0.0
      %486 = vmatpush1.msra.mxu0 0.0
      %487 = vmatprep.subr.mxu0 0.0
      %488 = vmatpush1.msra.mxu0 0.0
      %489 = vmatprep.subr.mxu0 0.0
      %490 = vmatpush1.msra.mxu0 0.0
      %491 = vmatprep.subr.mxu0 0.0
      %492 = vmatpush1.msra.mxu0 0.0
      %493 = vmatprep.subr.mxu0 0.0
      %494 = vmatpush1.msra.mxu0 0.0
      %495 = vmatprep.subr.mxu0 0.0
      %496 = vmatpush1.msra.mxu0 0.0
      %497 = vmatprep.subr.mxu0 0.0
      %498 = vmatpush1.msra.mxu0 0.0
      %499 = vmatprep.subr.mxu0 0.0
      %500 = vmatpush1.msra.mxu0 0.0
      %501 = vmatprep.subr.mxu0 0.0
      %502 = vmatpush1.msra.mxu0 0.0
      %503 = vmatprep.subr.mxu0 0.0
      %504 = vmatpush1.msra.mxu0 0.0
      %505 = vmatprep.subr.mxu0 0.0
      %506 = vmatpush1.msra.mxu0 0.0
      %507 = vmatprep.subr.mxu0 0.0
      %508 = vmatpush1.msra.mxu0 0.0
      %509 = vmatprep.subr.mxu0 0.0
      %510 = vmatpush1.msra.mxu0 0.0
      %511 = vmatprep.subr.mxu0 0.0
      %512 = vmatpush1.msra.mxu0 0.0
      %513 = vmatprep.subr.mxu0 0.0
      %514 = vmatpush1.msra.mxu0 0.0
      %515 = vmatprep.subr.mxu0 0.0
      %516 = vmatpush1.msra.mxu0 0.0
      %517 = vmatprep.subr.mxu0 0.0
      %518 = vmatpush1.msra.mxu0 0.0
      %519 = vmatprep.subr.mxu0 0.0
      %520 = vmatpush1.msra.mxu0 0.0
      %521 = vmatprep.subr.mxu0 0.0
      %522 = vmatpush1.msra.mxu0 0.0
      %523 = vmatprep.subr.mxu0 0.0
      %524 = vmatpush1.msra.mxu0 0.0
      %525 = vmatprep.subr.mxu0 0.0
      %526 = vmatpush1.msra.mxu0 0.0
      %527 = vmatprep.subr.mxu0 0.0
      %528 = vmatpush1.msra.mxu0 0.0
      %529 = vmatprep.subr.mxu0 0.0
      %530 = vmatpush1.msra.mxu0 0.0
      %531 = vmatprep.mubr.f32.mxu0 0.0
      %532 = vmatmul.mubr.f32.gmra.mrb[0].mxu0 %v444
      %v533 = vpop.f32.mrb[0].mxu0
      %v534 = vadd.f32 0.0, %v533
      %v535 = vpop.f32.mrb[0].mxu0
      %536 = vmatprep.mubr.f32.mxu0 0.0
      %537 = vmatmul.mubr.f32.gmra.mrb[0].mxu0 %v447
      %v538 = vpop.f32.mrb[0].mxu0
      %v539 = vadd.f32 0.0, %v538
      %v540 = vpop.f32.mrb[0].mxu0
      %541 = vmatprep.mubr.f32.mxu0 0.0
      %542 = vmatmul.mubr.f32.gmra.mrb[0].mxu0 %v450
      %v543 = vpop.f32.mrb[0].mxu0
      %v544 = vadd.f32 0.0, %v543
      %v545 = vpop.f32.mrb[0].mxu0
      %546 = vmatprep.mubr.f32.mxu0 0.0
      %547 = vmatmul.mubr.f32.gmra.mrb[0].mxu0 %v453
      %v548 = vpop.f32.mrb[0].mxu0
      %v549 = vadd.f32 0.0, %v548
      %v550 = vpop.f32.mrb[0].mxu0
      %551 = vmatprep.mubr.f32.mxu0 0.0
      %552 = vmatmul.mubr.f32.gmra.mrb[0].mxu0 %v456
      %v553 = vpop.f32.mrb[0].mxu0
      %v554 = vadd.f32 0.0, %v553
      %v555 = vpop.f32.mrb[0].mxu0
      %556 = vmatprep.mubr.f32.mxu0 0.0
      %557 = vmatmul.mubr.f32.gmra.mrb[0].mxu0 %v459
      %v558 = vpop.f32.mrb[0].mxu0
      %v559 = vadd.f32 0.0, %v558
      %v560 = vpop.f32.mrb[0].mxu0
      %561 = vmatprep.mubr.f32.mxu0 0.0
      %562 = vmatmul.mubr.f32.gmra.mrb[0].mxu0 %v462
      %v563 = vpop.f32.mrb[0].mxu0
      %v564 = vadd.f32 0.0, %v563
      %v565 = vpop.f32.mrb[0].mxu0
      %566 = vmatprep.mubr.f32.mxu0 0.0
      %567 = vmatmul.mubr.f32.gmra.mrb[0].mxu0 %v465
      %v568 = vpop.f32.mrb[0].mxu0
      %v569 = vadd.f32 0.0, %v568
      %v570 = vpop.f32.mrb[0].mxu0
      %571 = vdwg.mxu0
      %v572 = vadd.f32 %v433, %v534
      %v573 = vadd.f32 %v434, %v539
      %v574 = vadd.f32 %v435, %v544
      %v575 = vadd.f32 %v436, %v549
      %v576 = vadd.f32 %v437, %v554
      %v577 = vadd.f32 %v438, %v559
      %v578 = vadd.f32 %v439, %v564
      %v579 = vadd.f32 %v440, %v569
      %580 = vst [vmem:[#allocation2] sm:$0xff] %v572
      %581 = vst [vmem:[#allocation2 + $0x8] sm:$0xff] %v573
      %582 = vst [vmem:[#allocation2 + $0x10] sm:$0xff] %v574
      %583 = vst [vmem:[#allocation2 + $0x18] sm:$0xff] %v575
      %584 = vst [vmem:[#allocation2 + $0x20] sm:$0xff] %v576
      %585 = vst [vmem:[#allocation2 + $0x28] sm:$0xff] %v577
      %586 = vst [vmem:[#allocation2 + $0x30] sm:$0xff] %v578
      %587 = vst [vmem:[#allocation2 + $0x38] sm:$0xff] %v579
      %v588 = vld [vmem:[%s192 + $0x9] sm:$0xff]
      %v589 = vld [vmem:[%s192 + $0x11] sm:$0xff]
      %v590 = vld [vmem:[%s192 + $0x19] sm:$0xff]
      %v591 = vld [vmem:[%s192 + $0x21] sm:$0xff]
      %v592 = vld [vmem:[%s192 + $0x29] sm:$0xff]
      %v593 = vld [vmem:[%s192 + $0x31] sm:$0xff]
      %v594 = vld [vmem:[%s192 + $0x39] sm:$0xff]
      %v595 = vld [vmem:[%s192 + $0x41] sm:$0xff]
      %s596 = scalar_lea.vmem %s3, 64
      %v597 = vld [vmem:[%s596] sm:$0xff]
      %v598 = vld [vmem:[%s596 + $0x8] sm:$0xff]
      %v599 = vld [vmem:[%s596 + $0x10] sm:$0xff]
      %v600 = vld [vmem:[%s596 + $0x18] sm:$0xff]
      %v601 = vld [vmem:[%s596 + $0x20] sm:$0xff]
      %v602 = vld [vmem:[%s596 + $0x28] sm:$0xff]
      %v603 = vld [vmem:[%s596 + $0x30] sm:$0xff]
      %v604 = vld [vmem:[%s596 + $0x38] sm:$0xff]
      %606 = vset.pattern.permute.xlu0 0
      %607 = vperm.xlu0 %606, %v597
      %v608 = vpop.permute.xlu0 %607
      %611 = vset.pattern.permute.xlu0 0
      %612 = vperm.xlu0 %611, %v598
      %v613 = vpop.permute.xlu0 %612
      %616 = vset.pattern.permute.xlu0 0
      %617 = vperm.xlu0 %616, %v599
      %v618 = vpop.permute.xlu0 %617
      %621 = vset.pattern.permute.xlu0 0
      %622 = vperm.xlu0 %621, %v600
      %v623 = vpop.permute.xlu0 %622
      %626 = vset.pattern.permute.xlu0 0
      %627 = vperm.xlu0 %626, %v601
      %v628 = vpop.permute.xlu0 %627
      %631 = vset.pattern.permute.xlu0 0
      %632 = vperm.xlu0 %631, %v602
      %v633 = vpop.permute.xlu0 %632
      %636 = vset.pattern.permute.xlu0 0
      %637 = vperm.xlu0 %636, %v603
      %v638 = vpop.permute.xlu0 %637
      %641 = vset.pattern.permute.xlu0 0
      %642 = vperm.xlu0 %641, %v604
      %v643 = vpop.permute.xlu0 %642
      %v645 = vmul.f32 %v588, %v608
      %v646 = vmul.f32 %v589, %v613
      %v647 = vmul.f32 %v590, %v618
      %v648 = vmul.f32 %v591, %v623
      %v649 = vmul.f32 %v592, %v628
      %v650 = vmul.f32 %v593, %v633
      %v651 = vmul.f32 %v594, %v638
      %v652 = vmul.f32 %v595, %v643
      %v653 = vld [vmem:[#allocation2] sm:$0xff]
      %v654 = vld [vmem:[#allocation2 + $0x8] sm:$0xff]
      %v655 = vld [vmem:[#allocation2 + $0x10] sm:$0xff]
      %v656 = vld [vmem:[#allocation2 + $0x18] sm:$0xff]
      %v657 = vld [vmem:[#allocation2 + $0x20] sm:$0xff]
      %v658 = vld [vmem:[#allocation2 + $0x28] sm:$0xff]
      %v659 = vld [vmem:[#allocation2 + $0x30] sm:$0xff]
      %v660 = vld [vmem:[#allocation2 + $0x38] sm:$0xff]
      %s661 = scalar_lea.vmem %s1, 16
      %v662 = vld [vmem:[%s661] sm:$0xff]
      %v664 = vsel %vm279, %v645, 0
      %v667 = vsel %vm279, %v646, 0
      %v670 = vsel %vm279, %v647, 0
      %v673 = vsel %vm279, %v648, 0
      %v676 = vsel %vm279, %v649, 0
      %v679 = vsel %vm279, %v650, 0
      %v682 = vsel %vm279, %v651, 0
      %v685 = vsel %vm279, %v652, 0
      %687 = vmatprep.subr.mxu0 0.0
      %688 = vmatpush1.msra.mxu0 %v662
      %689 = vmatprep.subr.mxu0 0.0
      %690 = vmatpush1.msra.mxu0 0.0
      %691 = vmatprep.subr.mxu0 0.0
      %692 = vmatpush1.msra.mxu0 0.0
      %693 = vmatprep.subr.mxu0 0.0
      %694 = vmatpush1.msra.mxu0 0.0
      %695 = vmatprep.subr.mxu0 0.0
      %696 = vmatpush1.msra.mxu0 0.0
      %697 = vmatprep.subr.mxu0 0.0
      %698 = vmatpush1.msra.mxu0 0.0
      %699 = vmatprep.subr.mxu0 0.0
      %700 = vmatpush1.msra.mxu0 0.0
      %701 = vmatprep.subr.mxu0 0.0
      %702 = vmatpush1.msra.mxu0 0.0
      %703 = vmatprep.subr.mxu0 0.0
      %704 = vmatpush1.msra.mxu0 0.0
      %705 = vmatprep.subr.mxu0 0.0
      %706 = vmatpush1.msra.mxu0 0.0
      %707 = vmatprep.subr.mxu0 0.0
      %708 = vmatpush1.msra.mxu0 0.0
      %709 = vmatprep.subr.mxu0 0.0
      %710 = vmatpush1.msra.mxu0 0.0
      %711 = vmatprep.subr.mxu0 0.0
      %712 = vmatpush1.msra.mxu0 0.0
      %713 = vmatprep.subr.mxu0 0.0
      %714 = vmatpush1.msra.mxu0 0.0
      %715 = vmatprep.subr.mxu0 0.0
      %716 = vmatpush1.msra.mxu0 0.0
      %717 = vmatprep.subr.mxu0 0.0
      %718 = vmatpush1.msra.mxu0 0.0
      %719 = vmatprep.subr.mxu0 0.0
      %720 = vmatpush1.msra.mxu0 0.0
      %721 = vmatprep.subr.mxu0 0.0
      %722 = vmatpush1.msra.mxu0 0.0
      %723 = vmatprep.subr.mxu0 0.0
      %724 = vmatpush1.msra.mxu0 0.0
      %725 = vmatprep.subr.mxu0 0.0
      %726 = vmatpush1.msra.mxu0 0.0
      %727 = vmatprep.subr.mxu0 0.0
      %728 = vmatpush1.msra.mxu0 0.0
      %729 = vmatprep.subr.mxu0 0.0
      %730 = vmatpush1.msra.mxu0 0.0
      %731 = vmatprep.subr.mxu0 0.0
      %732 = vmatpush1.msra.mxu0 0.0
      %733 = vmatprep.subr.mxu0 0.0
      %734 = vmatpush1.msra.mxu0 0.0
      %735 = vmatprep.subr.mxu0 0.0
      %736 = vmatpush1.msra.mxu0 0.0
      %737 = vmatprep.subr.mxu0 0.0
      %738 = vmatpush1.msra.mxu0 0.0
      %739 = vmatprep.subr.mxu0 0.0
      %740 = vmatpush1.msra.mxu0 0.0
      %741 = vmatprep.subr.mxu0 0.0
      %742 = vmatpush1.msra.mxu0 0.0
      %743 = vmatprep.subr.mxu0 0.0
      %744 = vmatpush1.msra.mxu0 0.0
      %745 = vmatprep.subr.mxu0 0.0
      %746 = vmatpush1.msra.mxu0 0.0
      %747 = vmatprep.subr.mxu0 0.0
      %748 = vmatpush1.msra.mxu0 0.0
      %749 = vmatprep.subr.mxu0 0.0
      %750 = vmatpush1.msra.mxu0 0.0
      %751 = vmatprep.mubr.f32.mxu0 0.0
      %752 = vmatmul.mubr.f32.gmra.mrb[0].mxu0 %v664
      %v753 = vpop.f32.mrb[0].mxu0
      %v754 = vadd.f32 0.0, %v753
      %v755 = vpop.f32.mrb[0].mxu0
      %756 = vmatprep.mubr.f32.mxu0 0.0
      %757 = vmatmul.mubr.f32.gmra.mrb[0].mxu0 %v667
      %v758 = vpop.f32.mrb[0].mxu0
      %v759 = vadd.f32 0.0, %v758
      %v760 = vpop.f32.mrb[0].mxu0
      %761 = vmatprep.mubr.f32.mxu0 0.0
      %762 = vmatmul.mubr.f32.gmra.mrb[0].mxu0 %v670
      %v763 = vpop.f32.mrb[0].mxu0
      %v764 = vadd.f32 0.0, %v763
      %v765 = vpop.f32.mrb[0].mxu0
      %766 = vmatprep.mubr.f32.mxu0 0.0
      %767 = vmatmul.mubr.f32.gmra.mrb[0].mxu0 %v673
      %v768 = vpop.f32.mrb[0].mxu0
      %v769 = vadd.f32 0.0, %v768
      %v770 = vpop.f32.mrb[0].mxu0
      %771 = vmatprep.mubr.f32.mxu0 0.0
      %772 = vmatmul.mubr.f32.gmra.mrb[0].mxu0 %v676
      %v773 = vpop.f32.mrb[0].mxu0
      %v774 = vadd.f32 0.0, %v773
      %v775 = vpop.f32.mrb[0].mxu0
      %776 = vmatprep.mubr.f32.mxu0 0.0
      %777 = vmatmul.mubr.f32.gmra.mrb[0].mxu0 %v679
      %v778 = vpop.f32.mrb[0].mxu0
      %v779 = vadd.f32 0.0, %v778
      %v780 = vpop.f32.mrb[0].mxu0
      %781 = vmatprep.mubr.f32.mxu0 0.0
      %782 = vmatmul.mubr.f32.gmra.mrb[0].mxu0 %v682
      %v783 = vpop.f32.mrb[0].mxu0
      %v784 = vadd.f32 0.0, %v783
      %v785 = vpop.f32.mrb[0].mxu0
      %786 = vmatprep.mubr.f32.mxu0 0.0
      %787 = vmatmul.mubr.f32.gmra.mrb[0].mxu0 %v685
      %v788 = vpop.f32.mrb[0].mxu0
      %v789 = vadd.f32 0.0, %v788
      %v790 = vpop.f32.mrb[0].mxu0
      %791 = vdwg.mxu0
      %v792 = vadd.f32 %v653, %v754
      %v793 = vadd.f32 %v654, %v759
      %v794 = vadd.f32 %v655, %v764
      %v795 = vadd.f32 %v656, %v769
      %v796 = vadd.f32 %v657, %v774
      %v797 = vadd.f32 %v658, %v779
      %v798 = vadd.f32 %v659, %v784
      %v799 = vadd.f32 %v660, %v789
      %800 = vst [vmem:[#allocation2] sm:$0xff] %v792
      %801 = vst [vmem:[#allocation2 + $0x8] sm:$0xff] %v793
      %802 = vst [vmem:[#allocation2 + $0x10] sm:$0xff] %v794
      %803 = vst [vmem:[#allocation2 + $0x18] sm:$0xff] %v795
      %804 = vst [vmem:[#allocation2 + $0x20] sm:$0xff] %v796
      %805 = vst [vmem:[#allocation2 + $0x28] sm:$0xff] %v797
      %806 = vst [vmem:[#allocation2 + $0x30] sm:$0xff] %v798
      %807 = vst [vmem:[#allocation2 + $0x38] sm:$0xff] %v799
      %v808 = vld [vmem:[%s192 + $0xf] sm:$0xff]
      %v809 = vld [vmem:[%s192 + $0x17] sm:$0xff]
      %v810 = vld [vmem:[%s192 + $0x1f] sm:$0xff]
      %v811 = vld [vmem:[%s192 + $0x27] sm:$0xff]
      %v812 = vld [vmem:[%s192 + $0x2f] sm:$0xff]
      %v813 = vld [vmem:[%s192 + $0x37] sm:$0xff]
      %v814 = vld [vmem:[%s192 + $0x3f] sm:$0xff]
      %v815 = vld [vmem:[%s192 + $0x47] sm:$0xff]
      %v816 = vld [vmem:[%s3] sm:$0xff]
      %v817 = vld [vmem:[%s3 + $0x8] sm:$0xff]
      %v818 = vld [vmem:[%s3 + $0x10] sm:$0xff]
      %v819 = vld [vmem:[%s3 + $0x18] sm:$0xff]
      %v820 = vld [vmem:[%s3 + $0x20] sm:$0xff]
      %v821 = vld [vmem:[%s3 + $0x28] sm:$0xff]
      %v822 = vld [vmem:[%s3 + $0x30] sm:$0xff]
      %v823 = vld [vmem:[%s3 + $0x38] sm:$0xff]
      %825 = vset.pattern.permute.xlu0 0
      %826 = vperm.xlu0 %825, %v816
      %v827 = vpop.permute.xlu0 %826
      %830 = vset.pattern.permute.xlu0 0
      %831 = vperm.xlu0 %830, %v817
      %v832 = vpop.permute.xlu0 %831
      %835 = vset.pattern.permute.xlu0 0
      %836 = vperm.xlu0 %835, %v818
      %v837 = vpop.permute.xlu0 %836
      %840 = vset.pattern.permute.xlu0 0
      %841 = vperm.xlu0 %840, %v819
      %v842 = vpop.permute.xlu0 %841
      %845 = vset.pattern.permute.xlu0 0
      %846 = vperm.xlu0 %845, %v820
      %v847 = vpop.permute.xlu0 %846
      %850 = vset.pattern.permute.xlu0 0
      %851 = vperm.xlu0 %850, %v821
      %v852 = vpop.permute.xlu0 %851
      %855 = vset.pattern.permute.xlu0 0
      %856 = vperm.xlu0 %855, %v822
      %v857 = vpop.permute.xlu0 %856
      %860 = vset.pattern.permute.xlu0 0
      %861 = vperm.xlu0 %860, %v823
      %v862 = vpop.permute.xlu0 %861
      %v864 = vmul.f32 %v808, %v827
      %v865 = vmul.f32 %v809, %v832
      %v866 = vmul.f32 %v810, %v837
      %v867 = vmul.f32 %v811, %v842
      %v868 = vmul.f32 %v812, %v847
      %v869 = vmul.f32 %v813, %v852
      %v870 = vmul.f32 %v814, %v857
      %v871 = vmul.f32 %v815, %v862
      %v872 = vld [vmem:[#allocation2] sm:$0xff]
      %v873 = vld [vmem:[#allocation2 + $0x8] sm:$0xff]
      %v874 = vld [vmem:[#allocation2 + $0x10] sm:$0xff]
      %v875 = vld [vmem:[#allocation2 + $0x18] sm:$0xff]
      %v876 = vld [vmem:[#allocation2 + $0x20] sm:$0xff]
      %v877 = vld [vmem:[#allocation2 + $0x28] sm:$0xff]
      %v878 = vld [vmem:[#allocation2 + $0x30] sm:$0xff]
      %v879 = vld [vmem:[#allocation2 + $0x38] sm:$0xff]
      %s880 = scalar_lea.vmem %s1, 24
      %v881 = vld [vmem:[%s880] sm:$0xff]
      %v883 = vsel %vm279, %v864, 0
      %v886 = vsel %vm279, %v865, 0
      %v889 = vsel %vm279, %v866, 0
      %v892 = vsel %vm279, %v867, 0
      %v895 = vsel %vm279, %v868, 0
      %v898 = vsel %vm279, %v869, 0
      %v901 = vsel %vm279, %v870, 0
      %v904 = vsel %vm279, %v871, 0
      %906 = vmatprep.subr.mxu0 0.0
      %907 = vmatpush1.msra.mxu0 %v881
      %908 = vmatprep.subr.mxu0 0.0
      %909 = vmatpush1.msra.mxu0 0.0
      %910 = vmatprep.subr.mxu0 0.0
      %911 = vmatpush1.msra.mxu0 0.0
      %912 = vmatprep.subr.mxu0 0.0
      %913 = vmatpush1.msra.mxu0 0.0
      %914 = vmatprep.subr.mxu0 0.0
      %915 = vmatpush1.msra.mxu0 0.0
      %916 = vmatprep.subr.mxu0 0.0
      %917 = vmatpush1.msra.mxu0 0.0
      %918 = vmatprep.subr.mxu0 0.0
      %919 = vmatpush1.msra.mxu0 0.0
      %920 = vmatprep.subr.mxu0 0.0
      %921 = vmatpush1.msra.mxu0 0.0
      %922 = vmatprep.subr.mxu0 0.0
      %923 = vmatpush1.msra.mxu0 0.0
      %924 = vmatprep.subr.mxu0 0.0
      %925 = vmatpush1.msra.mxu0 0.0
      %926 = vmatprep.subr.mxu0 0.0
      %927 = vmatpush1.msra.mxu0 0.0
      %928 = vmatprep.subr.mxu0 0.0
      %929 = vmatpush1.msra.mxu0 0.0
      %930 = vmatprep.subr.mxu0 0.0
      %931 = vmatpush1.msra.mxu0 0.0
      %932 = vmatprep.subr.mxu0 0.0
      %933 = vmatpush1.msra.mxu0 0.0
      %934 = vmatprep.subr.mxu0 0.0
      %935 = vmatpush1.msra.mxu0 0.0
      %936 = vmatprep.subr.mxu0 0.0
      %937 = vmatpush1.msra.mxu0 0.0
      %938 = vmatprep.subr.mxu0 0.0
      %939 = vmatpush1.msra.mxu0 0.0
      %940 = vmatprep.subr.mxu0 0.0
      %941 = vmatpush1.msra.mxu0 0.0
      %942 = vmatprep.subr.mxu0 0.0
      %943 = vmatpush1.msra.mxu0 0.0
      %944 = vmatprep.subr.mxu0 0.0
      %945 = vmatpush1.msra.mxu0 0.0
      %946 = vmatprep.subr.mxu0 0.0
      %947 = vmatpush1.msra.mxu0 0.0
      %948 = vmatprep.subr.mxu0 0.0
      %949 = vmatpush1.msra.mxu0 0.0
      %950 = vmatprep.subr.mxu0 0.0
      %951 = vmatpush1.msra.mxu0 0.0
      %952 = vmatprep.subr.mxu0 0.0
      %953 = vmatpush1.msra.mxu0 0.0
      %954 = vmatprep.subr.mxu0 0.0
      %955 = vmatpush1.msra.mxu0 0.0
      %956 = vmatprep.subr.mxu0 0.0
      %957 = vmatpush1.msra.mxu0 0.0
      %958 = vmatprep.subr.mxu0 0.0
      %959 = vmatpush1.msra.mxu0 0.0
      %960 = vmatprep.subr.mxu0 0.0
      %961 = vmatpush1.msra.mxu0 0.0
      %962 = vmatprep.subr.mxu0 0.0
      %963 = vmatpush1.msra.mxu0 0.0
      %964 = vmatprep.subr.mxu0 0.0
      %965 = vmatpush1.msra.mxu0 0.0
      %966 = vmatprep.subr.mxu0 0.0
      %967 = vmatpush1.msra.mxu0 0.0
      %968 = vmatprep.subr.mxu0 0.0
      %969 = vmatpush1.msra.mxu0 0.0
      %970 = vmatprep.mubr.f32.mxu0 0.0
      %971 = vmatmul.mubr.f32.gmra.mrb[0].mxu0 %v883
      %v972 = vpop.f32.mrb[0].mxu0
      %v973 = vadd.f32 0.0, %v972
      %v974 = vpop.f32.mrb[0].mxu0
      %975 = vmatprep.mubr.f32.mxu0 0.0
      %976 = vmatmul.mubr.f32.gmra.mrb[0].mxu0 %v886
      %v977 = vpop.f32.mrb[0].mxu0
      %v978 = vadd.f32 0.0, %v977
      %v979 = vpop.f32.mrb[0].mxu0
      %980 = vmatprep.mubr.f32.mxu0 0.0
      %981 = vmatmul.mubr.f32.gmra.mrb[0].mxu0 %v889
      %v982 = vpop.f32.mrb[0].mxu0
      %v983 = vadd.f32 0.0, %v982
      %v984 = vpop.f32.mrb[0].mxu0
      %985 = vmatprep.mubr.f32.mxu0 0.0
      %986 = vmatmul.mubr.f32.gmra.mrb[0].mxu0 %v892
      %v987 = vpop.f32.mrb[0].mxu0
      %v988 = vadd.f32 0.0, %v987
      %v989 = vpop.f32.mrb[0].mxu0
      %990 = vmatprep.mubr.f32.mxu0 0.0
      %991 = vmatmul.mubr.f32.gmra.mrb[0].mxu0 %v895
      %v992 = vpop.f32.mrb[0].mxu0
      %v993 = vadd.f32 0.0, %v992
      %v994 = vpop.f32.mrb[0].mxu0
      %995 = vmatprep.mubr.f32.mxu0 0.0
      %996 = vmatmul.mubr.f32.gmra.mrb[0].mxu0 %v898
      %v997 = vpop.f32.mrb[0].mxu0
      %v998 = vadd.f32 0.0, %v997
      %v999 = vpop.f32.mrb[0].mxu0
      %1000 = vmatprep.mubr.f32.mxu0 0.0
      %1001 = vmatmul.mubr.f32.gmra.mrb[0].mxu0 %v901
      %v1002 = vpop.f32.mrb[0].mxu0
      %v1003 = vadd.f32 0.0, %v1002
      %v1004 = vpop.f32.mrb[0].mxu0
      %1005 = vmatprep.mubr.f32.mxu0 0.0
      %1006 = vmatmul.mubr.f32.gmra.mrb[0].mxu0 %v904
      %v1007 = vpop.f32.mrb[0].mxu0
      %v1008 = vadd.f32 0.0, %v1007
      %v1009 = vpop.f32.mrb[0].mxu0
      %1010 = vdwg.mxu0
      %v1011 = vadd.f32 %v872, %v973
      %v1012 = vadd.f32 %v873, %v978
      %v1013 = vadd.f32 %v874, %v983
      %v1014 = vadd.f32 %v875, %v988
      %v1015 = vadd.f32 %v876, %v993
      %v1016 = vadd.f32 %v877, %v998
      %v1017 = vadd.f32 %v878, %v1003
      %v1018 = vadd.f32 %v879, %v1008
      %1019 = vst [vmem:[#allocation2] sm:$0xff] %v1011
      %1020 = vst [vmem:[#allocation2 + $0x8] sm:$0xff] %v1012
      %1021 = vst [vmem:[#allocation2 + $0x10] sm:$0xff] %v1013
      %1022 = vst [vmem:[#allocation2 + $0x18] sm:$0xff] %v1014
      %1023 = vst [vmem:[#allocation2 + $0x20] sm:$0xff] %v1015
      %1024 = vst [vmem:[#allocation2 + $0x28] sm:$0xff] %v1016
      %1025 = vst [vmem:[#allocation2 + $0x30] sm:$0xff] %v1017
      %1026 = vst [vmem:[#allocation2 + $0x38] sm:$0xff] %v1018
      %v1027 = vld [vmem:[%s192 + $0x10] sm:$0xff]
      %v1028 = vld [vmem:[%s192 + $0x18] sm:$0xff]
      %v1029 = vld [vmem:[%s192 + $0x20] sm:$0xff]
      %v1030 = vld [vmem:[%s192 + $0x28] sm:$0xff]
      %v1031 = vld [vmem:[%s192 + $0x30] sm:$0xff]
      %v1032 = vld [vmem:[%s192 + $0x38] sm:$0xff]
      %v1033 = vld [vmem:[%s192 + $0x40] sm:$0xff]
      %v1034 = vld [vmem:[%s192 + $0x48] sm:$0xff]
      %v1035 = vld [vmem:[#allocation2] sm:$0xff]
      %v1036 = vld [vmem:[#allocation2 + $0x8] sm:$0xff]
      %v1037 = vld [vmem:[#allocation2 + $0x10] sm:$0xff]
      %v1038 = vld [vmem:[#allocation2 + $0x18] sm:$0xff]
      %v1039 = vld [vmem:[#allocation2 + $0x20] sm:$0xff]
      %v1040 = vld [vmem:[#allocation2 + $0x28] sm:$0xff]
      %v1041 = vld [vmem:[#allocation2 + $0x30] sm:$0xff]
      %v1042 = vld [vmem:[#allocation2 + $0x38] sm:$0xff]
      %s1043 = scalar_lea.vmem %s1, 32
      %v1044 = vld [vmem:[%s1043] sm:$0xff]
      %v1046 = vsel %vm279, %v1027, 0
      %v1049 = vsel %vm279, %v1028, 0
      %v1052 = vsel %vm279, %v1029, 0
      %v1055 = vsel %vm279, %v1030, 0
      %v1058 = vsel %vm279, %v1031, 0
      %v1061 = vsel %vm279, %v1032, 0
      %v1064 = vsel %vm279, %v1033, 0
      %v1067 = vsel %vm279, %v1034, 0
      %1069 = vmatprep.subr.mxu0 0.0
      %1070 = vmatpush1.msra.mxu0 %v1044
      %1071 = vmatprep.subr.mxu0 0.0
      %1072 = vmatpush1.msra.mxu0 0.0
      %1073 = vmatprep.subr.mxu0 0.0
      %1074 = vmatpush1.msra.mxu0 0.0
      %1075 = vmatprep.subr.mxu0 0.0
      %1076 = vmatpush1.msra.mxu0 0.0
      %1077 = vmatprep.subr.mxu0 0.0
      %1078 = vmatpush1.msra.mxu0 0.0
      %1079 = vmatprep.subr.mxu0 0.0
      %1080 = vmatpush1.msra.mxu0 0.0
      %1081 = vmatprep.subr.mxu0 0.0
      %1082 = vmatpush1.msra.mxu0 0.0
      %1083 = vmatprep.subr.mxu0 0.0
      %1084 = vmatpush1.msra.mxu0 0.0
      %1085 = vmatprep.subr.mxu0 0.0
      %1086 = vmatpush1.msra.mxu0 0.0
      %1087 = vmatprep.subr.mxu0 0.0
      %1088 = vmatpush1.msra.mxu0 0.0
      %1089 = vmatprep.subr.mxu0 0.0
      %1090 = vmatpush1.msra.mxu0 0.0
      %1091 = vmatprep.subr.mxu0 0.0
      %1092 = vmatpush1.msra.mxu0 0.0
      %1093 = vmatprep.subr.mxu0 0.0
      %1094 = vmatpush1.msra.mxu0 0.0
      %1095 = vmatprep.subr.mxu0 0.0
      %1096 = vmatpush1.msra.mxu0 0.0
      %1097 = vmatprep.subr.mxu0 0.0
      %1098 = vmatpush1.msra.mxu0 0.0
      %1099 = vmatprep.subr.mxu0 0.0
      %1100 = vmatpush1.msra.mxu0 0.0
      %1101 = vmatprep.subr.mxu0 0.0
      %1102 = vmatpush1.msra.mxu0 0.0
      %1103 = vmatprep.subr.mxu0 0.0
      %1104 = vmatpush1.msra.mxu0 0.0
      %1105 = vmatprep.subr.mxu0 0.0
      %1106 = vmatpush1.msra.mxu0 0.0
      %1107 = vmatprep.subr.mxu0 0.0
      %1108 = vmatpush1.msra.mxu0 0.0
      %1109 = vmatprep.subr.mxu0 0.0
      %1110 = vmatpush1.msra.mxu0 0.0
      %1111 = vmatprep.subr.mxu0 0.0
      %1112 = vmatpush1.msra.mxu0 0.0
      %1113 = vmatprep.subr.mxu0 0.0
      %1114 = vmatpush1.msra.mxu0 0.0
      %1115 = vmatprep.subr.mxu0 0.0
      %1116 = vmatpush1.msra.mxu0 0.0
      %1117 = vmatprep.subr.mxu0 0.0
      %1118 = vmatpush1.msra.mxu0 0.0
      %1119 = vmatprep.subr.mxu0 0.0
      %1120 = vmatpush1.msra.mxu0 0.0
      %1121 = vmatprep.subr.mxu0 0.0
      %1122 = vmatpush1.msra.mxu0 0.0
      %1123 = vmatprep.subr.mxu0 0.0
      %1124 = vmatpush1.msra.mxu0 0.0
      %1125 = vmatprep.subr.mxu0 0.0
      %1126 = vmatpush1.msra.mxu0 0.0
      %1127 = vmatprep.subr.mxu0 0.0
      %1128 = vmatpush1.msra.mxu0 0.0
      %1129 = vmatprep.subr.mxu0 0.0
      %1130 = vmatpush1.msra.mxu0 0.0
      %1131 = vmatprep.subr.mxu0 0.0
      %1132 = vmatpush1.msra.mxu0 0.0
      %1133 = vmatprep.mubr.f32.mxu0 0.0
      %1134 = vmatmul.mubr.f32.gmra.mrb[0].mxu0 %v1046
      %v1135 = vpop.f32.mrb[0].mxu0
      %v1136 = vadd.f32 0.0, %v1135
      %v1137 = vpop.f32.mrb[0].mxu0
      %1138 = vmatprep.mubr.f32.mxu0 0.0
      %1139 = vmatmul.mubr.f32.gmra.mrb[0].mxu0 %v1049
      %v1140 = vpop.f32.mrb[0].mxu0
      %v1141 = vadd.f32 0.0, %v1140
      %v1142 = vpop.f32.mrb[0].mxu0
      %1143 = vmatprep.mubr.f32.mxu0 0.0
      %1144 = vmatmul.mubr.f32.gmra.mrb[0].mxu0 %v1052
      %v1145 = vpop.f32.mrb[0].mxu0
      %v1146 = vadd.f32 0.0, %v1145
      %v1147 = vpop.f32.mrb[0].mxu0
      %1148 = vmatprep.mubr.f32.mxu0 0.0
      %1149 = vmatmul.mubr.f32.gmra.mrb[0].mxu0 %v1055
      %v1150 = vpop.f32.mrb[0].mxu0
      %v1151 = vadd.f32 0.0, %v1150
      %v1152 = vpop.f32.mrb[0].mxu0
      %1153 = vmatprep.mubr.f32.mxu0 0.0
      %1154 = vmatmul.mubr.f32.gmra.mrb[0].mxu0 %v1058
      %v1155 = vpop.f32.mrb[0].mxu0
      %v1156 = vadd.f32 0.0, %v1155
      %v1157 = vpop.f32.mrb[0].mxu0
      %1158 = vmatprep.mubr.f32.mxu0 0.0
      %1159 = vmatmul.mubr.f32.gmra.mrb[0].mxu0 %v1061
      %v1160 = vpop.f32.mrb[0].mxu0
      %v1161 = vadd.f32 0.0, %v1160
      %v1162 = vpop.f32.mrb[0].mxu0
      %1163 = vmatprep.mubr.f32.mxu0 0.0
      %1164 = vmatmul.mubr.f32.gmra.mrb[0].mxu0 %v1064
      %v1165 = vpop.f32.mrb[0].mxu0
      %v1166 = vadd.f32 0.0, %v1165
      %v1167 = vpop.f32.mrb[0].mxu0
      %1168 = vmatprep.mubr.f32.mxu0 0.0
      %1169 = vmatmul.mubr.f32.gmra.mrb[0].mxu0 %v1067
      %v1170 = vpop.f32.mrb[0].mxu0
      %v1171 = vadd.f32 0.0, %v1170
      %v1172 = vpop.f32.mrb[0].mxu0
      %1173 = vdwg.mxu0
      %v1174 = vadd.f32 %v1035, %v1136
      %v1175 = vadd.f32 %v1036, %v1141
      %v1176 = vadd.f32 %v1037, %v1146
      %v1177 = vadd.f32 %v1038, %v1151
      %v1178 = vadd.f32 %v1039, %v1156
      %v1179 = vadd.f32 %v1040, %v1161
      %v1180 = vadd.f32 %v1041, %v1166
      %v1181 = vadd.f32 %v1042, %v1171
      %1182 = vst [vmem:[#allocation2] sm:$0xff] %v1174
      %1183 = vst [vmem:[#allocation2 + $0x8] sm:$0xff] %v1175
      %1184 = vst [vmem:[#allocation2 + $0x10] sm:$0xff] %v1176
      %1185 = vst [vmem:[#allocation2 + $0x18] sm:$0xff] %v1177
      %1186 = vst [vmem:[#allocation2 + $0x20] sm:$0xff] %v1178
      %1187 = vst [vmem:[#allocation2 + $0x28] sm:$0xff] %v1179
      %1188 = vst [vmem:[#allocation2 + $0x30] sm:$0xff] %v1180
      %1189 = vst [vmem:[#allocation2 + $0x38] sm:$0xff] %v1181
      %v1190 = vld [vmem:[%s192 + $0x11] sm:$0xff]
      %v1191 = vld [vmem:[%s192 + $0x19] sm:$0xff]
      %v1192 = vld [vmem:[%s192 + $0x21] sm:$0xff]
      %v1193 = vld [vmem:[%s192 + $0x29] sm:$0xff]
      %v1194 = vld [vmem:[%s192 + $0x31] sm:$0xff]
      %v1195 = vld [vmem:[%s192 + $0x39] sm:$0xff]
      %v1196 = vld [vmem:[%s192 + $0x41] sm:$0xff]
      %v1197 = vld [vmem:[%s192 + $0x49] sm:$0xff]
      %v1198 = vld [vmem:[%s596] sm:$0xff]
      %v1199 = vld [vmem:[%s596 + $0x8] sm:$0xff]
      %v1200 = vld [vmem:[%s596 + $0x10] sm:$0xff]
      %v1201 = vld [vmem:[%s596 + $0x18] sm:$0xff]
      %v1202 = vld [vmem:[%s596 + $0x20] sm:$0xff]
      %v1203 = vld [vmem:[%s596 + $0x28] sm:$0xff]
      %v1204 = vld [vmem:[%s596 + $0x30] sm:$0xff]
      %v1205 = vld [vmem:[%s596 + $0x38] sm:$0xff]
      %1207 = vset.pattern.permute.xlu0 0
      %1208 = vperm.xlu0 %1207, %v1198
      %v1209 = vpop.permute.xlu0 %1208
      %1212 = vset.pattern.permute.xlu0 0
      %1213 = vperm.xlu0 %1212, %v1199
      %v1214 = vpop.permute.xlu0 %1213
      %1217 = vset.pattern.permute.xlu0 0
      %1218 = vperm.xlu0 %1217, %v1200
      %v1219 = vpop.permute.xlu0 %1218
      %1222 = vset.pattern.permute.xlu0 0
      %1223 = vperm.xlu0 %1222, %v1201
      %v1224 = vpop.permute.xlu0 %1223
      %1227 = vset.pattern.permute.xlu0 0
      %1228 = vperm.xlu0 %1227, %v1202
      %v1229 = vpop.permute.xlu0 %1228
      %1232 = vset.pattern.permute.xlu0 0
      %1233 = vperm.xlu0 %1232, %v1203
      %v1234 = vpop.permute.xlu0 %1233
      %1237 = vset.pattern.permute.xlu0 0
      %1238 = vperm.xlu0 %1237, %v1204
      %v1239 = vpop.permute.xlu0 %1238
      %1242 = vset.pattern.permute.xlu0 0
      %1243 = vperm.xlu0 %1242, %v1205
      %v1244 = vpop.permute.xlu0 %1243
      %v1246 = vmul.f32 %v1190, %v1209
      %v1247 = vmul.f32 %v1191, %v1214
      %v1248 = vmul.f32 %v1192, %v1219
      %v1249 = vmul.f32 %v1193, %v1224
      %v1250 = vmul.f32 %v1194, %v1229
      %v1251 = vmul.f32 %v1195, %v1234
      %v1252 = vmul.f32 %v1196, %v1239
      %v1253 = vmul.f32 %v1197, %v1244
      %v1254 = vld [vmem:[#allocation2] sm:$0xff]
      %v1255 = vld [vmem:[#allocation2 + $0x8] sm:$0xff]
      %v1256 = vld [vmem:[#allocation2 + $0x10] sm:$0xff]
      %v1257 = vld [vmem:[#allocation2 + $0x18] sm:$0xff]
      %v1258 = vld [vmem:[#allocation2 + $0x20] sm:$0xff]
      %v1259 = vld [vmem:[#allocation2 + $0x28] sm:$0xff]
      %v1260 = vld [vmem:[#allocation2 + $0x30] sm:$0xff]
      %v1261 = vld [vmem:[#allocation2 + $0x38] sm:$0xff]
      %s1262 = scalar_lea.vmem %s1, 40
      %v1263 = vld [vmem:[%s1262] sm:$0xff]
      %v1265 = vsel %vm279, %v1246, 0
      %v1268 = vsel %vm279, %v1247, 0
      %v1271 = vsel %vm279, %v1248, 0
      %v1274 = vsel %vm279, %v1249, 0
      %v1277 = vsel %vm279, %v1250, 0
      %v1280 = vsel %vm279, %v1251, 0
      %v1283 = vsel %vm279, %v1252, 0
      %v1286 = vsel %vm279, %v1253, 0
      %1288 = vmatprep.subr.mxu0 0.0
      %1289 = vmatpush1.msra.mxu0 %v1263
      %1290 = vmatprep.subr.mxu0 0.0
      %1291 = vmatpush1.msra.mxu0 0.0
      %1292 = vmatprep.subr.mxu0 0.0
      %1293 = vmatpush1.msra.mxu0 0.0
      %1294 = vmatprep.subr.mxu0 0.0
      %1295 = vmatpush1.msra.mxu0 0.0
      %1296 = vmatprep.subr.mxu0 0.0
      %1297 = vmatpush1.msra.mxu0 0.0
      %1298 = vmatprep.subr.mxu0 0.0
      %1299 = vmatpush1.msra.mxu0 0.0
      %1300 = vmatprep.subr.mxu0 0.0
      %1301 = vmatpush1.msra.mxu0 0.0
      %1302 = vmatprep.subr.mxu0 0.0
      %1303 = vmatpush1.msra.mxu0 0.0
      %1304 = vmatprep.subr.mxu0 0.0
      %1305 = vmatpush1.msra.mxu0 0.0
      %1306 = vmatprep.subr.mxu0 0.0
      %1307 = vmatpush1.msra.mxu0 0.0
      %1308 = vmatprep.subr.mxu0 0.0
      %1309 = vmatpush1.msra.mxu0 0.0
      %1310 = vmatprep.subr.mxu0 0.0
      %1311 = vmatpush1.msra.mxu0 0.0
      %1312 = vmatprep.subr.mxu0 0.0
      %1313 = vmatpush1.msra.mxu0 0.0
      %1314 = vmatprep.subr.mxu0 0.0
      %1315 = vmatpush1.msra.mxu0 0.0
      %1316 = vmatprep.subr.mxu0 0.0
      %1317 = vmatpush1.msra.mxu0 0.0
      %1318 = vmatprep.subr.mxu0 0.0
      %1319 = vmatpush1.msra.mxu0 0.0
      %1320 = vmatprep.subr.mxu0 0.0
      %1321 = vmatpush1.msra.mxu0 0.0
      %1322 = vmatprep.subr.mxu0 0.0
      %1323 = vmatpush1.msra.mxu0 0.0
      %1324 = vmatprep.subr.mxu0 0.0
      %1325 = vmatpush1.msra.mxu0 0.0
      %1326 = vmatprep.subr.mxu0 0.0
      %1327 = vmatpush1.msra.mxu0 0.0
      %1328 = vmatprep.subr.mxu0 0.0
      %1329 = vmatpush1.msra.mxu0 0.0
      %1330 = vmatprep.subr.mxu0 0.0
      %1331 = vmatpush1.msra.mxu0 0.0
      %1332 = vmatprep.subr.mxu0 0.0
      %1333 = vmatpush1.msra.mxu0 0.0
      %1334 = vmatprep.subr.mxu0 0.0
      %1335 = vmatpush1.msra.mxu0 0.0
      %1336 = vmatprep.subr.mxu0 0.0
      %1337 = vmatpush1.msra.mxu0 0.0
      %1338 = vmatprep.subr.mxu0 0.0
      %1339 = vmatpush1.msra.mxu0 0.0
      %1340 = vmatprep.subr.mxu0 0.0
      %1341 = vmatpush1.msra.mxu0 0.0
      %1342 = vmatprep.subr.mxu0 0.0
      %1343 = vmatpush1.msra.mxu0 0.0
      %1344 = vmatprep.subr.mxu0 0.0
      %1345 = vmatpush1.msra.mxu0 0.0
      %1346 = vmatprep.subr.mxu0 0.0
      %1347 = vmatpush1.msra.mxu0 0.0
      %1348 = vmatprep.subr.mxu0 0.0
      %1349 = vmatpush1.msra.mxu0 0.0
      %1350 = vmatprep.subr.mxu0 0.0
      %1351 = vmatpush1.msra.mxu0 0.0
      %1352 = vmatprep.mubr.f32.mxu0 0.0
      %1353 = vmatmul.mubr.f32.gmra.mrb[0].mxu0 %v1265
      %v1354 = vpop.f32.mrb[0].mxu0
      %v1355 = vadd.f32 0.0, %v1354
      %v1356 = vpop.f32.mrb[0].mxu0
      %1357 = vmatprep.mubr.f32.mxu0 0.0
      %1358 = vmatmul.mubr.f32.gmra.mrb[0].mxu0 %v1268
      %v1359 = vpop.f32.mrb[0].mxu0
      %v1360 = vadd.f32 0.0, %v1359
      %v1361 = vpop.f32.mrb[0].mxu0
      %1362 = vmatprep.mubr.f32.mxu0 0.0
      %1363 = vmatmul.mubr.f32.gmra.mrb[0].mxu0 %v1271
      %v1364 = vpop.f32.mrb[0].mxu0
      %v1365 = vadd.f32 0.0, %v1364
      %v1366 = vpop.f32.mrb[0].mxu0
      %1367 = vmatprep.mubr.f32.mxu0 0.0
      %1368 = vmatmul.mubr.f32.gmra.mrb[0].mxu0 %v1274
      %v1369 = vpop.f32.mrb[0].mxu0
      %v1370 = vadd.f32 0.0, %v1369
      %v1371 = vpop.f32.mrb[0].mxu0
      %1372 = vmatprep.mubr.f32.mxu0 0.0
      %1373 = vmatmul.mubr.f32.gmra.mrb[0].mxu0 %v1277
      %v1374 = vpop.f32.mrb[0].mxu0
      %v1375 = vadd.f32 0.0, %v1374
      %v1376 = vpop.f32.mrb[0].mxu0
      %1377 = vmatprep.mubr.f32.mxu0 0.0
      %1378 = vmatmul.mubr.f32.gmra.mrb[0].mxu0 %v1280
      %v1379 = vpop.f32.mrb[0].mxu0
      %v1380 = vadd.f32 0.0, %v1379
      %v1381 = vpop.f32.mrb[0].mxu0
      %1382 = vmatprep.mubr.f32.mxu0 0.0
      %1383 = vmatmul.mubr.f32.gmra.mrb[0].mxu0 %v1283
      %v1384 = vpop.f32.mrb[0].mxu0
      %v1385 = vadd.f32 0.0, %v1384
      %v1386 = vpop.f32.mrb[0].mxu0
      %1387 = vmatprep.mubr.f32.mxu0 0.0
      %1388 = vmatmul.mubr.f32.gmra.mrb[0].mxu0 %v1286
      %v1389 = vpop.f32.mrb[0].mxu0
      %v1390 = vadd.f32 0.0, %v1389
      %v1391 = vpop.f32.mrb[0].mxu0
      %1392 = vdwg.mxu0
      %v1393 = vadd.f32 %v1254, %v1355
      %v1394 = vadd.f32 %v1255, %v1360
      %v1395 = vadd.f32 %v1256, %v1365
      %v1396 = vadd.f32 %v1257, %v1370
      %v1397 = vadd.f32 %v1258, %v1375
      %v1398 = vadd.f32 %v1259, %v1380
      %v1399 = vadd.f32 %v1260, %v1385
      %v1400 = vadd.f32 %v1261, %v1390
      %1401 = vst [vmem:[#allocation2] sm:$0xff] %v1393
      %1402 = vst [vmem:[#allocation2 + $0x8] sm:$0xff] %v1394
      %1403 = vst [vmem:[#allocation2 + $0x10] sm:$0xff] %v1395
      %1404 = vst [vmem:[#allocation2 + $0x18] sm:$0xff] %v1396
      %1405 = vst [vmem:[#allocation2 + $0x20] sm:$0xff] %v1397
      %1406 = vst [vmem:[#allocation2 + $0x28] sm:$0xff] %v1398
      %1407 = vst [vmem:[#allocation2 + $0x30] sm:$0xff] %v1399
      %1408 = vst [vmem:[#allocation2 + $0x38] sm:$0xff] %v1400
      %v1409 = vld [vmem:[%s192 + $0x17] sm:$0xff]
      %v1410 = vld [vmem:[%s192 + $0x1f] sm:$0xff]
      %v1411 = vld [vmem:[%s192 + $0x27] sm:$0xff]
      %v1412 = vld [vmem:[%s192 + $0x2f] sm:$0xff]
      %v1413 = vld [vmem:[%s192 + $0x37] sm:$0xff]
      %v1414 = vld [vmem:[%s192 + $0x3f] sm:$0xff]
      %v1415 = vld [vmem:[%s192 + $0x47] sm:$0xff]
      %v1416 = vld [vmem:[%s192 + $0x4f] sm:$0xff]
      %v1417 = vld [vmem:[%s3] sm:$0xff]
      %v1418 = vld [vmem:[%s3 + $0x8] sm:$0xff]
      %v1419 = vld [vmem:[%s3 + $0x10] sm:$0xff]
      %v1420 = vld [vmem:[%s3 + $0x18] sm:$0xff]
      %v1421 = vld [vmem:[%s3 + $0x20] sm:$0xff]
      %v1422 = vld [vmem:[%s3 + $0x28] sm:$0xff]
      %v1423 = vld [vmem:[%s3 + $0x30] sm:$0xff]
      %v1424 = vld [vmem:[%s3 + $0x38] sm:$0xff]
      %1426 = vset.pattern.permute.xlu0 0
      %1427 = vperm.xlu0 %1426, %v1417
      %v1428 = vpop.permute.xlu0 %1427
      %1431 = vset.pattern.permute.xlu0 0
      %1432 = vperm.xlu0 %1431, %v1418
      %v1433 = vpop.permute.xlu0 %1432
      %1436 = vset.pattern.permute.xlu0 0
      %1437 = vperm.xlu0 %1436, %v1419
      %v1438 = vpop.permute.xlu0 %1437
      %1441 = vset.pattern.permute.xlu0 0
      %1442 = vperm.xlu0 %1441, %v1420
      %v1443 = vpop.permute.xlu0 %1442
      %1446 = vset.pattern.permute.xlu0 0
      %1447 = vperm.xlu0 %1446, %v1421
      %v1448 = vpop.permute.xlu0 %1447
      %1451 = vset.pattern.permute.xlu0 0
      %1452 = vperm.xlu0 %1451, %v1422
      %v1453 = vpop.permute.xlu0 %1452
      %1456 = vset.pattern.permute.xlu0 0
      %1457 = vperm.xlu0 %1456, %v1423
      %v1458 = vpop.permute.xlu0 %1457
      %1461 = vset.pattern.permute.xlu0 0
      %1462 = vperm.xlu0 %1461, %v1424
      %v1463 = vpop.permute.xlu0 %1462
      %v1465 = vmul.f32 %v1409, %v1428
      %v1466 = vmul.f32 %v1410, %v1433
      %v1467 = vmul.f32 %v1411, %v1438
      %v1468 = vmul.f32 %v1412, %v1443
      %v1469 = vmul.f32 %v1413, %v1448
      %v1470 = vmul.f32 %v1414, %v1453
      %v1471 = vmul.f32 %v1415, %v1458
      %v1472 = vmul.f32 %v1416, %v1463
      %v1473 = vld [vmem:[#allocation2] sm:$0xff]
      %v1474 = vld [vmem:[#allocation2 + $0x8] sm:$0xff]
      %v1475 = vld [vmem:[#allocation2 + $0x10] sm:$0xff]
      %v1476 = vld [vmem:[#allocation2 + $0x18] sm:$0xff]
      %v1477 = vld [vmem:[#allocation2 + $0x20] sm:$0xff]
      %v1478 = vld [vmem:[#allocation2 + $0x28] sm:$0xff]
      %v1479 = vld [vmem:[#allocation2 + $0x30] sm:$0xff]
      %v1480 = vld [vmem:[#allocation2 + $0x38] sm:$0xff]
      %s1481 = scalar_lea.vmem %s1, 48
      %v1482 = vld [vmem:[%s1481] sm:$0xff]
      %v1484 = vsel %vm279, %v1465, 0
      %v1487 = vsel %vm279, %v1466, 0
      %v1490 = vsel %vm279, %v1467, 0
      %v1493 = vsel %vm279, %v1468, 0
      %v1496 = vsel %vm279, %v1469, 0
      %v1499 = vsel %vm279, %v1470, 0
      %v1502 = vsel %vm279, %v1471, 0
      %v1505 = vsel %vm279, %v1472, 0
      %1507 = vmatprep.subr.mxu0 0.0
      %1508 = vmatpush1.msra.mxu0 %v1482
      %1509 = vmatprep.subr.mxu0 0.0
      %1510 = vmatpush1.msra.mxu0 0.0
      %1511 = vmatprep.subr.mxu0 0.0
      %1512 = vmatpush1.msra.mxu0 0.0
      %1513 = vmatprep.subr.mxu0 0.0
      %1514 = vmatpush1.msra.mxu0 0.0
      %1515 = vmatprep.subr.mxu0 0.0
      %1516 = vmatpush1.msra.mxu0 0.0
      %1517 = vmatprep.subr.mxu0 0.0
      %1518 = vmatpush1.msra.mxu0 0.0
      %1519 = vmatprep.subr.mxu0 0.0
      %1520 = vmatpush1.msra.mxu0 0.0
      %1521 = vmatprep.subr.mxu0 0.0
      %1522 = vmatpush1.msra.mxu0 0.0
      %1523 = vmatprep.subr.mxu0 0.0
      %1524 = vmatpush1.msra.mxu0 0.0
      %1525 = vmatprep.subr.mxu0 0.0
      %1526 = vmatpush1.msra.mxu0 0.0
      %1527 = vmatprep.subr.mxu0 0.0
      %1528 = vmatpush1.msra.mxu0 0.0
      %1529 = vmatprep.subr.mxu0 0.0
      %1530 = vmatpush1.msra.mxu0 0.0
      %1531 = vmatprep.subr.mxu0 0.0
      %1532 = vmatpush1.msra.mxu0 0.0
      %1533 = vmatprep.subr.mxu0 0.0
      %1534 = vmatpush1.msra.mxu0 0.0
      %1535 = vmatprep.subr.mxu0 0.0
      %1536 = vmatpush1.msra.mxu0 0.0
      %1537 = vmatprep.subr.mxu0 0.0
      %1538 = vmatpush1.msra.mxu0 0.0
      %1539 = vmatprep.subr.mxu0 0.0
      %1540 = vmatpush1.msra.mxu0 0.0
      %1541 = vmatprep.subr.mxu0 0.0
      %1542 = vmatpush1.msra.mxu0 0.0
      %1543 = vmatprep.subr.mxu0 0.0
      %1544 = vmatpush1.msra.mxu0 0.0
      %1545 = vmatprep.subr.mxu0 0.0
      %1546 = vmatpush1.msra.mxu0 0.0
      %1547 = vmatprep.subr.mxu0 0.0
      %1548 = vmatpush1.msra.mxu0 0.0
      %1549 = vmatprep.subr.mxu0 0.0
      %1550 = vmatpush1.msra.mxu0 0.0
      %1551 = vmatprep.subr.mxu0 0.0
      %1552 = vmatpush1.msra.mxu0 0.0
      %1553 = vmatprep.subr.mxu0 0.0
      %1554 = vmatpush1.msra.mxu0 0.0
      %1555 = vmatprep.subr.mxu0 0.0
      %1556 = vmatpush1.msra.mxu0 0.0
      %1557 = vmatprep.subr.mxu0 0.0
      %1558 = vmatpush1.msra.mxu0 0.0
      %1559 = vmatprep.subr.mxu0 0.0
      %1560 = vmatpush1.msra.mxu0 0.0
      %1561 = vmatprep.subr.mxu0 0.0
      %1562 = vmatpush1.msra.mxu0 0.0
      %1563 = vmatprep.subr.mxu0 0.0
      %1564 = vmatpush1.msra.mxu0 0.0
      %1565 = vmatprep.subr.mxu0 0.0
      %1566 = vmatpush1.msra.mxu0 0.0
      %1567 = vmatprep.subr.mxu0 0.0
      %1568 = vmatpush1.msra.mxu0 0.0
      %1569 = vmatprep.subr.mxu0 0.0
      %1570 = vmatpush1.msra.mxu0 0.0
      %1571 = vmatprep.mubr.f32.mxu0 0.0
      %1572 = vmatmul.mubr.f32.gmra.mrb[0].mxu0 %v1484
      %v1573 = vpop.f32.mrb[0].mxu0
      %v1574 = vadd.f32 0.0, %v1573
      %v1575 = vpop.f32.mrb[0].mxu0
      %1576 = vmatprep.mubr.f32.mxu0 0.0
      %1577 = vmatmul.mubr.f32.gmra.mrb[0].mxu0 %v1487
      %v1578 = vpop.f32.mrb[0].mxu0
      %v1579 = vadd.f32 0.0, %v1578
      %v1580 = vpop.f32.mrb[0].mxu0
      %1581 = vmatprep.mubr.f32.mxu0 0.0
      %1582 = vmatmul.mubr.f32.gmra.mrb[0].mxu0 %v1490
      %v1583 = vpop.f32.mrb[0].mxu0
      %v1584 = vadd.f32 0.0, %v1583
      %v1585 = vpop.f32.mrb[0].mxu0
      %1586 = vmatprep.mubr.f32.mxu0 0.0
      %1587 = vmatmul.mubr.f32.gmra.mrb[0].mxu0 %v1493
      %v1588 = vpop.f32.mrb[0].mxu0
      %v1589 = vadd.f32 0.0, %v1588
      %v1590 = vpop.f32.mrb[0].mxu0
      %1591 = vmatprep.mubr.f32.mxu0 0.0
      %1592 = vmatmul.mubr.f32.gmra.mrb[0].mxu0 %v1496
      %v1593 = vpop.f32.mrb[0].mxu0
      %v1594 = vadd.f32 0.0, %v1593
      %v1595 = vpop.f32.mrb[0].mxu0
      %1596 = vmatprep.mubr.f32.mxu0 0.0
      %1597 = vmatmul.mubr.f32.gmra.mrb[0].mxu0 %v1499
      %v1598 = vpop.f32.mrb[0].mxu0
      %v1599 = vadd.f32 0.0, %v1598
      %v1600 = vpop.f32.mrb[0].mxu0
      %1601 = vmatprep.mubr.f32.mxu0 0.0
      %1602 = vmatmul.mubr.f32.gmra.mrb[0].mxu0 %v1502
      %v1603 = vpop.f32.mrb[0].mxu0
      %v1604 = vadd.f32 0.0, %v1603
      %v1605 = vpop.f32.mrb[0].mxu0
      %1606 = vmatprep.mubr.f32.mxu0 0.0
      %1607 = vmatmul.mubr.f32.gmra.mrb[0].mxu0 %v1505
      %v1608 = vpop.f32.mrb[0].mxu0
      %v1609 = vadd.f32 0.0, %v1608
      %v1610 = vpop.f32.mrb[0].mxu0
      %1611 = vdwg.mxu0
      %v1612 = vadd.f32 %v1473, %v1574
      %v1613 = vadd.f32 %v1474, %v1579
      %v1614 = vadd.f32 %v1475, %v1584
      %v1615 = vadd.f32 %v1476, %v1589
      %v1616 = vadd.f32 %v1477, %v1594
      %v1617 = vadd.f32 %v1478, %v1599
      %v1618 = vadd.f32 %v1479, %v1604
      %v1619 = vadd.f32 %v1480, %v1609
      %1620 = vst [vmem:[#allocation2] sm:$0xff] %v1612
      %1621 = vst [vmem:[#allocation2 + $0x8] sm:$0xff] %v1613
      %1622 = vst [vmem:[#allocation2 + $0x10] sm:$0xff] %v1614
      %1623 = vst [vmem:[#allocation2 + $0x18] sm:$0xff] %v1615
      %1624 = vst [vmem:[#allocation2 + $0x20] sm:$0xff] %v1616
      %1625 = vst [vmem:[#allocation2 + $0x28] sm:$0xff] %v1617
      %1626 = vst [vmem:[#allocation2 + $0x30] sm:$0xff] %v1618
      %1627 = vst [vmem:[#allocation2 + $0x38] sm:$0xff] %v1619
      %v1628 = vld [vmem:[%s192 + $0x18] sm:$0xff]
      %v1629 = vld [vmem:[%s192 + $0x20] sm:$0xff]
      %v1630 = vld [vmem:[%s192 + $0x28] sm:$0xff]
      %v1631 = vld [vmem:[%s192 + $0x30] sm:$0xff]
      %v1632 = vld [vmem:[%s192 + $0x38] sm:$0xff]
      %v1633 = vld [vmem:[%s192 + $0x40] sm:$0xff]
      %v1634 = vld [vmem:[%s192 + $0x48] sm:$0xff]
      %v1635 = vld [vmem:[%s192 + $0x50] sm:$0xff]
      %v1636 = vld [vmem:[#allocation2] sm:$0xff]
      %v1637 = vld [vmem:[#allocation2 + $0x8] sm:$0xff]
      %v1638 = vld [vmem:[#allocation2 + $0x10] sm:$0xff]
      %v1639 = vld [vmem:[#allocation2 + $0x18] sm:$0xff]
      %v1640 = vld [vmem:[#allocation2 + $0x20] sm:$0xff]
      %v1641 = vld [vmem:[#allocation2 + $0x28] sm:$0xff]
      %v1642 = vld [vmem:[#allocation2 + $0x30] sm:$0xff]
      %v1643 = vld [vmem:[#allocation2 + $0x38] sm:$0xff]
      %s1644 = scalar_lea.vmem %s1, 56
      %v1645 = vld [vmem:[%s1644] sm:$0xff]
      %v1647 = vsel %vm279, %v1628, 0
      %v1650 = vsel %vm279, %v1629, 0
      %v1653 = vsel %vm279, %v1630, 0
      %v1656 = vsel %vm279, %v1631, 0
      %v1659 = vsel %vm279, %v1632, 0
      %v1662 = vsel %vm279, %v1633, 0
      %v1665 = vsel %vm279, %v1634, 0
      %v1668 = vsel %vm279, %v1635, 0
      %1670 = vmatprep.subr.mxu0 0.0
      %1671 = vmatpush1.msra.mxu0 %v1645
      %1672 = vmatprep.subr.mxu0 0.0
      %1673 = vmatpush1.msra.mxu0 0.0
      %1674 = vmatprep.subr.mxu0 0.0
      %1675 = vmatpush1.msra.mxu0 0.0
      %1676 = vmatprep.subr.mxu0 0.0
      %1677 = vmatpush1.msra.mxu0 0.0
      %1678 = vmatprep.subr.mxu0 0.0
      %1679 = vmatpush1.msra.mxu0 0.0
      %1680 = vmatprep.subr.mxu0 0.0
      %1681 = vmatpush1.msra.mxu0 0.0
      %1682 = vmatprep.subr.mxu0 0.0
      %1683 = vmatpush1.msra.mxu0 0.0
      %1684 = vmatprep.subr.mxu0 0.0
      %1685 = vmatpush1.msra.mxu0 0.0
      %1686 = vmatprep.subr.mxu0 0.0
      %1687 = vmatpush1.msra.mxu0 0.0
      %1688 = vmatprep.subr.mxu0 0.0
      %1689 = vmatpush1.msra.mxu0 0.0
      %1690 = vmatprep.subr.mxu0 0.0
      %1691 = vmatpush1.msra.mxu0 0.0
      %1692 = vmatprep.subr.mxu0 0.0
      %1693 = vmatpush1.msra.mxu0 0.0
      %1694 = vmatprep.subr.mxu0 0.0
      %1695 = vmatpush1.msra.mxu0 0.0
      %1696 = vmatprep.subr.mxu0 0.0
      %1697 = vmatpush1.msra.mxu0 0.0
      %1698 = vmatprep.subr.mxu0 0.0
      %1699 = vmatpush1.msra.mxu0 0.0
      %1700 = vmatprep.subr.mxu0 0.0
      %1701 = vmatpush1.msra.mxu0 0.0
      %1702 = vmatprep.subr.mxu0 0.0
      %1703 = vmatpush1.msra.mxu0 0.0
      %1704 = vmatprep.subr.mxu0 0.0
      %1705 = vmatpush1.msra.mxu0 0.0
      %1706 = vmatprep.subr.mxu0 0.0
      %1707 = vmatpush1.msra.mxu0 0.0
      %1708 = vmatprep.subr.mxu0 0.0
      %1709 = vmatpush1.msra.mxu0 0.0
      %1710 = vmatprep.subr.mxu0 0.0
      %1711 = vmatpush1.msra.mxu0 0.0
      %1712 = vmatprep.subr.mxu0 0.0
      %1713 = vmatpush1.msra.mxu0 0.0
      %1714 = vmatprep.subr.mxu0 0.0
      %1715 = vmatpush1.msra.mxu0 0.0
      %1716 = vmatprep.subr.mxu0 0.0
      %1717 = vmatpush1.msra.mxu0 0.0
      %1718 = vmatprep.subr.mxu0 0.0
      %1719 = vmatpush1.msra.mxu0 0.0
      %1720 = vmatprep.subr.mxu0 0.0
      %1721 = vmatpush1.msra.mxu0 0.0
      %1722 = vmatprep.subr.mxu0 0.0
      %1723 = vmatpush1.msra.mxu0 0.0
      %1724 = vmatprep.subr.mxu0 0.0
      %1725 = vmatpush1.msra.mxu0 0.0
      %1726 = vmatprep.subr.mxu0 0.0
      %1727 = vmatpush1.msra.mxu0 0.0
      %1728 = vmatprep.subr.mxu0 0.0
      %1729 = vmatpush1.msra.mxu0 0.0
      %1730 = vmatprep.subr.mxu0 0.0
      %1731 = vmatpush1.msra.mxu0 0.0
      %1732 = vmatprep.subr.mxu0 0.0
      %1733 = vmatpush1.msra.mxu0 0.0
      %1734 = vmatprep.mubr.f32.mxu0 0.0
      %1735 = vmatmul.mubr.f32.gmra.mrb[0].mxu0 %v1647
      %v1736 = vpop.f32.mrb[0].mxu0
      %v1737 = vadd.f32 0.0, %v1736
      %v1738 = vpop.f32.mrb[0].mxu0
      %1739 = vmatprep.mubr.f32.mxu0 0.0
      %1740 = vmatmul.mubr.f32.gmra.mrb[0].mxu0 %v1650
      %v1741 = vpop.f32.mrb[0].mxu0
      %v1742 = vadd.f32 0.0, %v1741
      %v1743 = vpop.f32.mrb[0].mxu0
      %1744 = vmatprep.mubr.f32.mxu0 0.0
      %1745 = vmatmul.mubr.f32.gmra.mrb[0].mxu0 %v1653
      %v1746 = vpop.f32.mrb[0].mxu0
      %v1747 = vadd.f32 0.0, %v1746
      %v1748 = vpop.f32.mrb[0].mxu0
      %1749 = vmatprep.mubr.f32.mxu0 0.0
      %1750 = vmatmul.mubr.f32.gmra.mrb[0].mxu0 %v1656
      %v1751 = vpop.f32.mrb[0].mxu0
      %v1752 = vadd.f32 0.0, %v1751
      %v1753 = vpop.f32.mrb[0].mxu0
      %1754 = vmatprep.mubr.f32.mxu0 0.0
      %1755 = vmatmul.mubr.f32.gmra.mrb[0].mxu0 %v1659
      %v1756 = vpop.f32.mrb[0].mxu0
      %v1757 = vadd.f32 0.0, %v1756
      %v1758 = vpop.f32.mrb[0].mxu0
      %1759 = vmatprep.mubr.f32.mxu0 0.0
      %1760 = vmatmul.mubr.f32.gmra.mrb[0].mxu0 %v1662
      %v1761 = vpop.f32.mrb[0].mxu0
      %v1762 = vadd.f32 0.0, %v1761
      %v1763 = vpop.f32.mrb[0].mxu0
      %1764 = vmatprep.mubr.f32.mxu0 0.0
      %1765 = vmatmul.mubr.f32.gmra.mrb[0].mxu0 %v1665
      %v1766 = vpop.f32.mrb[0].mxu0
      %v1767 = vadd.f32 0.0, %v1766
      %v1768 = vpop.f32.mrb[0].mxu0
      %1769 = vmatprep.mubr.f32.mxu0 0.0
      %1770 = vmatmul.mubr.f32.gmra.mrb[0].mxu0 %v1668
      %v1771 = vpop.f32.mrb[0].mxu0
      %v1772 = vadd.f32 0.0, %v1771
      %v1773 = vpop.f32.mrb[0].mxu0
      %1774 = vdwg.mxu0
      %v1775 = vadd.f32 %v1636, %v1737
      %v1776 = vadd.f32 %v1637, %v1742
      %v1777 = vadd.f32 %v1638, %v1747
      %v1778 = vadd.f32 %v1639, %v1752
      %v1779 = vadd.f32 %v1640, %v1757
      %v1780 = vadd.f32 %v1641, %v1762
      %v1781 = vadd.f32 %v1642, %v1767
      %v1782 = vadd.f32 %v1643, %v1772
      %1783 = vst [vmem:[#allocation2] sm:$0xff] %v1775
      %1784 = vst [vmem:[#allocation2 + $0x8] sm:$0xff] %v1776
      %1785 = vst [vmem:[#allocation2 + $0x10] sm:$0xff] %v1777
      %1786 = vst [vmem:[#allocation2 + $0x18] sm:$0xff] %v1778
      %1787 = vst [vmem:[#allocation2 + $0x20] sm:$0xff] %v1779
      %1788 = vst [vmem:[#allocation2 + $0x28] sm:$0xff] %v1780
      %1789 = vst [vmem:[#allocation2 + $0x30] sm:$0xff] %v1781
      %1790 = vst [vmem:[#allocation2 + $0x38] sm:$0xff] %v1782
      %v1791 = vld [vmem:[%s192 + $0x19] sm:$0xff]
      %v1792 = vld [vmem:[%s192 + $0x21] sm:$0xff]
      %v1793 = vld [vmem:[%s192 + $0x29] sm:$0xff]
      %v1794 = vld [vmem:[%s192 + $0x31] sm:$0xff]
      %v1795 = vld [vmem:[%s192 + $0x39] sm:$0xff]
      %v1796 = vld [vmem:[%s192 + $0x41] sm:$0xff]
      %v1797 = vld [vmem:[%s192 + $0x49] sm:$0xff]
      %v1798 = vld [vmem:[%s192 + $0x51] sm:$0xff]
      %v1799 = vld [vmem:[%s596] sm:$0xff]
      %v1800 = vld [vmem:[%s596 + $0x8] sm:$0xff]
      %v1801 = vld [vmem:[%s596 + $0x10] sm:$0xff]
      %v1802 = vld [vmem:[%s596 + $0x18] sm:$0xff]
      %v1803 = vld [vmem:[%s596 + $0x20] sm:$0xff]
      %v1804 = vld [vmem:[%s596 + $0x28] sm:$0xff]
      %v1805 = vld [vmem:[%s596 + $0x30] sm:$0xff]
      %v1806 = vld [vmem:[%s596 + $0x38] sm:$0xff]
      %1808 = vset.pattern.permute.xlu0 0
      %1809 = vperm.xlu0 %1808, %v1799
      %v1810 = vpop.permute.xlu0 %1809
      %1813 = vset.pattern.permute.xlu0 0
      %1814 = vperm.xlu0 %1813, %v1800
      %v1815 = vpop.permute.xlu0 %1814
      %1818 = vset.pattern.permute.xlu0 0
      %1819 = vperm.xlu0 %1818, %v1801
      %v1820 = vpop.permute.xlu0 %1819
      %1823 = vset.pattern.permute.xlu0 0
      %1824 = vperm.xlu0 %1823, %v1802
      %v1825 = vpop.permute.xlu0 %1824
      %1828 = vset.pattern.permute.xlu0 0
      %1829 = vperm.xlu0 %1828, %v1803
      %v1830 = vpop.permute.xlu0 %1829
      %1833 = vset.pattern.permute.xlu0 0
      %1834 = vperm.xlu0 %1833, %v1804
      %v1835 = vpop.permute.xlu0 %1834
      %1838 = vset.pattern.permute.xlu0 0
      %1839 = vperm.xlu0 %1838, %v1805
      %v1840 = vpop.permute.xlu0 %1839
      %1843 = vset.pattern.permute.xlu0 0
      %1844 = vperm.xlu0 %1843, %v1806
      %v1845 = vpop.permute.xlu0 %1844
      %v1847 = vmul.f32 %v1791, %v1810
      %v1848 = vmul.f32 %v1792, %v1815
      %v1849 = vmul.f32 %v1793, %v1820
      %v1850 = vmul.f32 %v1794, %v1825
      %v1851 = vmul.f32 %v1795, %v1830
      %v1852 = vmul.f32 %v1796, %v1835
      %v1853 = vmul.f32 %v1797, %v1840
      %v1854 = vmul.f32 %v1798, %v1845
      %v1855 = vld [vmem:[#allocation2] sm:$0xff]
      %v1856 = vld [vmem:[#allocation2 + $0x8] sm:$0xff]
      %v1857 = vld [vmem:[#allocation2 + $0x10] sm:$0xff]
      %v1858 = vld [vmem:[#allocation2 + $0x18] sm:$0xff]
      %v1859 = vld [vmem:[#allocation2 + $0x20] sm:$0xff]
      %v1860 = vld [vmem:[#allocation2 + $0x28] sm:$0xff]
      %v1861 = vld [vmem:[#allocation2 + $0x30] sm:$0xff]
      %v1862 = vld [vmem:[#allocation2 + $0x38] sm:$0xff]
      %s1863 = scalar_lea.vmem %s1, 64
      %v1864 = vld [vmem:[%s1863] sm:$0xff]
      %v1866 = vsel %vm279, %v1847, 0
      %v1869 = vsel %vm279, %v1848, 0
      %v1872 = vsel %vm279, %v1849, 0
      %v1875 = vsel %vm279, %v1850, 0
      %v1878 = vsel %vm279, %v1851, 0
      %v1881 = vsel %vm279, %v1852, 0
      %v1884 = vsel %vm279, %v1853, 0
      %v1887 = vsel %vm279, %v1854, 0
      %1889 = vmatprep.subr.mxu0 0.0
      %1890 = vmatpush1.msra.mxu0 %v1864
      %1891 = vmatprep.subr.mxu0 0.0
      %1892 = vmatpush1.msra.mxu0 0.0
      %1893 = vmatprep.subr.mxu0 0.0
      %1894 = vmatpush1.msra.mxu0 0.0
      %1895 = vmatprep.subr.mxu0 0.0
      %1896 = vmatpush1.msra.mxu0 0.0
      %1897 = vmatprep.subr.mxu0 0.0
      %1898 = vmatpush1.msra.mxu0 0.0
      %1899 = vmatprep.subr.mxu0 0.0
      %1900 = vmatpush1.msra.mxu0 0.0
      %1901 = vmatprep.subr.mxu0 0.0
      %1902 = vmatpush1.msra.mxu0 0.0
      %1903 = vmatprep.subr.mxu0 0.0
      %1904 = vmatpush1.msra.mxu0 0.0
      %1905 = vmatprep.subr.mxu0 0.0
      %1906 = vmatpush1.msra.mxu0 0.0
      %1907 = vmatprep.subr.mxu0 0.0
      %1908 = vmatpush1.msra.mxu0 0.0
      %1909 = vmatprep.subr.mxu0 0.0
      %1910 = vmatpush1.msra.mxu0 0.0
      %1911 = vmatprep.subr.mxu0 0.0
      %1912 = vmatpush1.msra.mxu0 0.0
      %1913 = vmatprep.subr.mxu0 0.0
      %1914 = vmatpush1.msra.mxu0 0.0
      %1915 = vmatprep.subr.mxu0 0.0
      %1916 = vmatpush1.msra.mxu0 0.0
      %1917 = vmatprep.subr.mxu0 0.0
      %1918 = vmatpush1.msra.mxu0 0.0
      %1919 = vmatprep.subr.mxu0 0.0
      %1920 = vmatpush1.msra.mxu0 0.0
      %1921 = vmatprep.subr.mxu0 0.0
      %1922 = vmatpush1.msra.mxu0 0.0
      %1923 = vmatprep.subr.mxu0 0.0
      %1924 = vmatpush1.msra.mxu0 0.0
      %1925 = vmatprep.subr.mxu0 0.0
      %1926 = vmatpush1.msra.mxu0 0.0
      %1927 = vmatprep.subr.mxu0 0.0
      %1928 = vmatpush1.msra.mxu0 0.0
      %1929 = vmatprep.subr.mxu0 0.0
      %1930 = vmatpush1.msra.mxu0 0.0
      %1931 = vmatprep.subr.mxu0 0.0
      %1932 = vmatpush1.msra.mxu0 0.0
      %1933 = vmatprep.subr.mxu0 0.0
      %1934 = vmatpush1.msra.mxu0 0.0
      %1935 = vmatprep.subr.mxu0 0.0
      %1936 = vmatpush1.msra.mxu0 0.0
      %1937 = vmatprep.subr.mxu0 0.0
      %1938 = vmatpush1.msra.mxu0 0.0
      %1939 = vmatprep.subr.mxu0 0.0
      %1940 = vmatpush1.msra.mxu0 0.0
      %1941 = vmatprep.subr.mxu0 0.0
      %1942 = vmatpush1.msra.mxu0 0.0
      %1943 = vmatprep.subr.mxu0 0.0
      %1944 = vmatpush1.msra.mxu0 0.0
      %1945 = vmatprep.subr.mxu0 0.0
      %1946 = vmatpush1.msra.mxu0 0.0
      %1947 = vmatprep.subr.mxu0 0.0
      %1948 = vmatpush1.msra.mxu0 0.0
      %1949 = vmatprep.subr.mxu0 0.0
      %1950 = vmatpush1.msra.mxu0 0.0
      %1951 = vmatprep.subr.mxu0 0.0
      %1952 = vmatpush1.msra.mxu0 0.0
      %1953 = vmatprep.mubr.f32.mxu0 0.0
      %1954 = vmatmul.mubr.f32.gmra.mrb[0].mxu0 %v1866
      %v1955 = vpop.f32.mrb[0].mxu0
      %v1956 = vadd.f32 0.0, %v1955
      %v1957 = vpop.f32.mrb[0].mxu0
      %1958 = vmatprep.mubr.f32.mxu0 0.0
      %1959 = vmatmul.mubr.f32.gmra.mrb[0].mxu0 %v1869
      %v1960 = vpop.f32.mrb[0].mxu0
      %v1961 = vadd.f32 0.0, %v1960
      %v1962 = vpop.f32.mrb[0].mxu0
      %1963 = vmatprep.mubr.f32.mxu0 0.0
      %1964 = vmatmul.mubr.f32.gmra.mrb[0].mxu0 %v1872
      %v1965 = vpop.f32.mrb[0].mxu0
      %v1966 = vadd.f32 0.0, %v1965
      %v1967 = vpop.f32.mrb[0].mxu0
      %1968 = vmatprep.mubr.f32.mxu0 0.0
      %1969 = vmatmul.mubr.f32.gmra.mrb[0].mxu0 %v1875
      %v1970 = vpop.f32.mrb[0].mxu0
      %v1971 = vadd.f32 0.0, %v1970
      %v1972 = vpop.f32.mrb[0].mxu0
      %1973 = vmatprep.mubr.f32.mxu0 0.0
      %1974 = vmatmul.mubr.f32.gmra.mrb[0].mxu0 %v1878
      %v1975 = vpop.f32.mrb[0].mxu0
      %v1976 = vadd.f32 0.0, %v1975
      %v1977 = vpop.f32.mrb[0].mxu0
      %1978 = vmatprep.mubr.f32.mxu0 0.0
      %1979 = vmatmul.mubr.f32.gmra.mrb[0].mxu0 %v1881
      %v1980 = vpop.f32.mrb[0].mxu0
      %v1981 = vadd.f32 0.0, %v1980
      %v1982 = vpop.f32.mrb[0].mxu0
      %1983 = vmatprep.mubr.f32.mxu0 0.0
      %1984 = vmatmul.mubr.f32.gmra.mrb[0].mxu0 %v1884
      %v1985 = vpop.f32.mrb[0].mxu0
      %v1986 = vadd.f32 0.0, %v1985
      %v1987 = vpop.f32.mrb[0].mxu0
      %1988 = vmatprep.mubr.f32.mxu0 0.0
      %1989 = vmatmul.mubr.f32.gmra.mrb[0].mxu0 %v1887
      %v1990 = vpop.f32.mrb[0].mxu0
      %v1991 = vadd.f32 0.0, %v1990
      %v1992 = vpop.f32.mrb[0].mxu0
      %1993 = vdwg.mxu0
      %v1994 = vadd.f32 %v1855, %v1956
      %v1995 = vadd.f32 %v1856, %v1961
      %v1996 = vadd.f32 %v1857, %v1966
      %v1997 = vadd.f32 %v1858, %v1971
      %v1998 = vadd.f32 %v1859, %v1976
      %v1999 = vadd.f32 %v1860, %v1981
      %v2000 = vadd.f32 %v1861, %v1986
      %v2001 = vadd.f32 %v1862, %v1991
      %2002 = vst [vmem:[#allocation2] sm:$0xff] %v1994
      %2003 = vst [vmem:[#allocation2 + $0x8] sm:$0xff] %v1995
      %2004 = vst [vmem:[#allocation2 + $0x10] sm:$0xff] %v1996
      %2005 = vst [vmem:[#allocation2 + $0x18] sm:$0xff] %v1997
      %2006 = vst [vmem:[#allocation2 + $0x20] sm:$0xff] %v1998
      %2007 = vst [vmem:[#allocation2 + $0x28] sm:$0xff] %v1999
      %2008 = vst [vmem:[#allocation2 + $0x30] sm:$0xff] %v2000
      %2009 = vst [vmem:[#allocation2 + $0x38] sm:$0xff] %v2001
      %v2010 = vld [vmem:[#allocation2] sm:$0xff]
      %v2011 = vld [vmem:[#allocation2 + $0x8] sm:$0xff]
      %v2012 = vld [vmem:[#allocation2 + $0x10] sm:$0xff]
      %v2013 = vld [vmem:[#allocation2 + $0x18] sm:$0xff]
      %v2014 = vld [vmem:[#allocation2 + $0x20] sm:$0xff]
      %v2015 = vld [vmem:[#allocation2 + $0x28] sm:$0xff]
      %v2016 = vld [vmem:[#allocation2 + $0x30] sm:$0xff]
      %v2017 = vld [vmem:[#allocation2 + $0x38] sm:$0xff]
      %v2018 = vld [vmem:[%s2] sm:$0x1]
      %v2020 = vlaneseq
      %v2021 = vshrl.u32 %v2020, 7
      %v2022 = vsub.s32 0, %v2021
      %v2023 = vrot.slane %v2018, %v2022
      %v2025 = vadd.f32 %v2010, %v2023
      %v2026 = vadd.f32 %v2011, %v2023
      %v2027 = vadd.f32 %v2012, %v2023
      %v2028 = vadd.f32 %v2013, %v2023
      %v2029 = vadd.f32 %v2014, %v2023
      %v2030 = vadd.f32 %v2015, %v2023
      %v2031 = vadd.f32 %v2016, %v2023
      %v2032 = vadd.f32 %v2017, %v2023
      %v2033 = vmax.f32 %v2025, 0.0
      %v2034 = vmax.f32 %v2026, 0.0
      %v2035 = vmax.f32 %v2027, 0.0
      %v2036 = vmax.f32 %v2028, 0.0
      %v2037 = vmax.f32 %v2029, 0.0
      %v2038 = vmax.f32 %v2030, 0.0
      %v2039 = vmax.f32 %v2031, 0.0
      %v2040 = vmax.f32 %v2032, 0.0
      %2041 = vst [vmem:[%s197] sm:$0xff] %v2033
      %2042 = vst [vmem:[%s197 + $0x8] sm:$0xff] %v2034
      %2043 = vst [vmem:[%s197 + $0x10] sm:$0xff] %v2035
      %2044 = vst [vmem:[%s197 + $0x18] sm:$0xff] %v2036
      %2045 = vst [vmem:[%s197 + $0x20] sm:$0xff] %v2037
      %2046 = vst [vmem:[%s197 + $0x28] sm:$0xff] %v2038
      %2047 = vst [vmem:[%s197 + $0x30] sm:$0xff] %v2039
      %2048 = vst [vmem:[%s197 + $0x38] sm:$0xff] %v2040
      %p2049 = scmp.lt.s32.totalorder %s15, 1
      %s2050 = scalar_select %p2049, %s15, 1
      %s2051 = smul.addr %s2050, 8
      %s2052 = smul.addr %s2051, 8
      %s2053 = scalar_lea.vmem %s4, %s2052
      // Predicated region
      $region37: #{cnn_forward.4} parent=35 // pred_check
        %p2054 = pneg %p122
      $region38: #{cnn_forward.4} parent=35 // pred_check_branch
        %2056 = sbr.rel (%p2054) target = $region40
      $region39: #{cnn_forward.4} parent=35 // pred_region
        _
      $region40: #{cnn_forward.4} parent=35 // pred_fallthru
        _
    $region36: #{cnn_forward.4} parent=5 // pred_fallthru
      _
    %p2057 = scmp.le.s32.totalorder 2, %s10
    // Predicated region
    $region41: #{cnn_forward.4} parent=5 // pred_check
      %p2058 = pneg %p2057
    $region42: #{cnn_forward.4} parent=5 // pred_check_branch
      %2060 = sbr.rel (%p2058) target = $region44
    $region43: #{cnn_forward.4} parent=5 // pred_region
      %s2061 = ssub.s32 %s10, 2
      // Predicated region
      $region45: #{cnn_forward.4} parent=43 // pred_check
        %p2062 = pneg %p128
      $region46: #{cnn_forward.4} parent=43 // pred_check_branch
        %2064 = sbr.rel (%p2062) target = $region48
      $region47: #{cnn_forward.4} parent=43 // pred_region
        %p2065 = scmp.lt.s32.totalorder %s16, 1
        %s2066 = scalar_select %p2065, %s16, 1
        %s2067 = smul.addr %s2066, 8
        %s2068 = smul.addr %s2067, 8
        %s2069 = scalar_lea.vmem %s4, %s2068
      $region48: #{cnn_forward.4} parent=43 // pred_fallthru
        _
    $region44: #{cnn_forward.4} parent=5 // pred_fallthru
      _
  $region6: #{cnn_forward.4} parent=0 // loop_footer
    %s14 = sadd.s32 1, %s10
  $region7: #{cnn_forward.4} parent=0 // loop_footer_branch
    %9 = sbr.rel target = $region3
  $region8: #{cnn_forward.4} parent=0 // loop_exit
    _

// kernel: cnn_forward.6
$region0: #{cnn_forward.6}
  #allocation0 [shape = 'u32[]', space=smem, size = 0x4, offset = 0x4, fixed_abs, tag = 'smem constant byte address 0x4 - core index']
  #allocation1 [shape = 'u32[144,128]{1,0:T(1,128)}', space=vmem, size = 0x12000, scoped, tag = 'internal scratch']
  #allocation2 [shape = 'f32[4,128]{1,0:T(4,128)}', space=vmem, size = 0x800, scoped, tag = 'scratch operand']
  %s0 = inlined_call_operand.vmem [shape: f32[2,12,128], index: 0, kind: input, shape index: {}]
  %s1 = inlined_call_operand.vmem [shape: f32[9,128,128], index: 1, kind: input, shape index: {}]
  %s2 = inlined_call_operand.vmem [shape: f32[1,128], index: 2, kind: input, shape index: {}]
  %s3 = inlined_call_operand.vmem [shape: f32[2,4,1], index: 3, kind: input, shape index: {}]
  %s4 = inlined_call_operand.vmem [shape: f32[2,4,128], index: 4, kind: output, shape index: {}]
  %s5 = sld [smem:[#allocation0]]
  $region49: #{cnn_forward.6} parent=0
    _
  %s7 = ssub.s32 1, %s5
  %s8 = scalar_select 0, %s7, %s5
  loop: start=0, step=1, limit=4
  $region2: #{cnn_forward.6} parent=0 // loop_pre_header
    _
  $region3: #{cnn_forward.6} parent=0 // loop_header
    %s10 = sphi 0, %s14
    %p11 = scmp.ge.s32.totalorder %s10, 4
    %s20 = sphi 0, %s22
    %s23 = sphi 0, %s20
    %s24 = sphi 0, %s23
    %s40 = sphi 0, %s24
    %s44 = sphi 0, %s44
    %s46 = sphi 0, %s44
    %s47 = sphi 0, %s46
    %s61 = sphi 0, %s47
    %s65 = sphi 0, %s65
    %s67 = sphi 0, %s65
    %s68 = sphi 0, %s67
    %s82 = sphi 0, %s68
    %s86 = sphi 0, %s86
    %s88 = sphi 0, %s86
    %s89 = sphi 0, %s88
    %s103 = sphi 0, %s89
    %s109 = sphi 0, %s111
    %s112 = sphi 0, %s109
    %s113 = sphi 0, %s112
    %s129 = sphi 0, %s113
  $region4: #{cnn_forward.6} parent=0 // loop_header_branch
    %13 = sbr.rel (%p11) target = $region8
  $region5: #{cnn_forward.6} parent=0 // loop_body
    %s15 = ssub.s32 %s10, 1
    %s16 = ssub.s32 %s10, 2
    %s17 = sadd.s32 %s10, 1
    %s18 = ssub.s32 %s10, %s17
    %p19 = scmp.eq.s32.totalorder %s18, 0
    %s21 = sadd.s32 %s20, 1
    %s22 = scalar_select %p19, %s20, %s21
    %p25 = pneg %p19
    %p26 = scmp.eq.s32.totalorder %s10, 1
    %p27 = por %p25, %p26
    %p28 = scmp.ne.s32.totalorder %s20, %s23
    %p29 = scmp.eq.s32.totalorder %s10, 0
    %p30 = por %p28, %p29
    %p31 = scmp.ne.s32.totalorder %s20, %s23
    %p32 = scmp.eq.s32.totalorder %s15, 1
    %p33 = por %p31, %p32
    %p34 = scmp.ne.s32.totalorder %s23, %s24
    %p35 = scmp.eq.s32.totalorder %s15, 0
    %p36 = por %p34, %p35
    %p37 = scmp.ne.s32.totalorder %s23, %s24
    %p38 = scmp.eq.s32.totalorder %s16, 1
    %p39 = por %p37, %p38
    %p41 = scmp.ne.s32.totalorder %s24, %s40
    %p42 = scmp.eq.s32.totalorder %s16, 0
    %p43 = por %p41, %p42
    %s45 = sadd.s32 %s44, 1
    %p48 = scmp.eq.s32.totalorder %s10, 1
    %p49 = scmp.ne.s32.totalorder %s44, %s46
    %p50 = scmp.eq.s32.totalorder %s10, 0
    %p51 = por %p49, %p50
    %p52 = scmp.ne.s32.totalorder %s44, %s46
    %p53 = scmp.eq.s32.totalorder %s15, 1
    %p54 = por %p52, %p53
    %p55 = scmp.ne.s32.totalorder %s46, %s47
    %p56 = scmp.eq.s32.totalorder %s15, 0
    %p57 = por %p55, %p56
    %p58 = scmp.ne.s32.totalorder %s46, %s47
    %p59 = scmp.eq.s32.totalorder %s16, 1
    %p60 = por %p58, %p59
    %p62 = scmp.ne.s32.totalorder %s47, %s61
    %p63 = scmp.eq.s32.totalorder %s16, 0
    %p64 = por %p62, %p63
    %s66 = sadd.s32 %s65, 1
    %p69 = scmp.eq.s32.totalorder %s10, 1
    %p70 = scmp.ne.s32.totalorder %s65, %s67
    %p71 = scmp.eq.s32.totalorder %s10, 0
    %p72 = por %p70, %p71
    %p73 = scmp.ne.s32.totalorder %s65, %s67
    %p74 = scmp.eq.s32.totalorder %s15, 1
    %p75 = por %p73, %p74
    %p76 = scmp.ne.s32.totalorder %s67, %s68
    %p77 = scmp.eq.s32.totalorder %s15, 0
    %p78 = por %p76, %p77
    %p79 = scmp.ne.s32.totalorder %s67, %s68
    %p80 = scmp.eq.s32.totalorder %s16, 1
    %p81 = por %p79, %p80
    %p83 = scmp.ne.s32.totalorder %s68, %s82
    %p84 = scmp.eq.s32.totalorder %s16, 0
    %p85 = por %p83, %p84
    %s87 = sadd.s32 %s86, 1
    %p90 = scmp.eq.s32.totalorder %s10, 1
    %p91 = scmp.ne.s32.totalorder %s86, %s88
    %p92 = scmp.eq.s32.totalorder %s10, 0
    %p93 = por %p91, %p92
    %p94 = scmp.ne.s32.totalorder %s86, %s88
    %p95 = scmp.eq.s32.totalorder %s15, 1
    %p96 = por %p94, %p95
    %p97 = scmp.ne.s32.totalorder %s88, %s89
    %p98 = scmp.eq.s32.totalorder %s15, 0
    %p99 = por %p97, %p98
    %p100 = scmp.ne.s32.totalorder %s88, %s89
    %p101 = scmp.eq.s32.totalorder %s16, 1
    %p102 = por %p100, %p101
    %p104 = scmp.ne.s32.totalorder %s89, %s103
    %p105 = scmp.eq.s32.totalorder %s16, 0
    %p106 = por %p104, %p105
    %s107 = ssub.s32 %s10, %s17
    %p108 = scmp.eq.s32.totalorder %s107, 0
    %s110 = sadd.s32 %s109, 1
    %s111 = scalar_select %p108, %s109, %s110
    %p114 = pneg %p108
    %p115 = scmp.eq.s32.totalorder %s10, 1
    %p116 = por %p114, %p115
    %p117 = scmp.ne.s32.totalorder %s109, %s112
    %p118 = scmp.eq.s32.totalorder %s10, 0
    %p119 = por %p117, %p118
    %p120 = scmp.ne.s32.totalorder %s109, %s112
    %p121 = scmp.eq.s32.totalorder %s15, 1
    %p122 = por %p120, %p121
    %p123 = scmp.ne.s32.totalorder %s112, %s113
    %p124 = scmp.eq.s32.totalorder %s15, 0
    %p125 = por %p123, %p124
    %p126 = scmp.ne.s32.totalorder %s112, %s113
    %p127 = scmp.eq.s32.totalorder %s16, 1
    %p128 = por %p126, %p127
    %p130 = scmp.ne.s32.totalorder %s113, %s129
    %p131 = scmp.eq.s32.totalorder %s16, 0
    %p132 = por %p130, %p131
    %p133 = scmp.le.s32.totalorder 1, %s10
    %p134 = scmp.lt.s32.totalorder %s10, 3
    %p135 = pnand %p133, %p134
    %p136 = pneg %p135
    // Predicated region
    $region9: #{cnn_forward.6} parent=5 // pred_check
      _
    $region10: #{cnn_forward.6} parent=5 // pred_check_branch
      %138 = sbr.rel (%p135) target = $region12
    $region11: #{cnn_forward.6} parent=5 // pred_region
      %s139 = ssub.s32 %s10, 1
      // Predicated region
      $region13: #{cnn_forward.6} parent=11 // pred_check
        %p140 = pneg %p57
      $region14: #{cnn_forward.6} parent=11 // pred_check_branch
        %142 = sbr.rel (%p140) target = $region16
      $region15: #{cnn_forward.6} parent=11 // pred_region
        _
      $region16: #{cnn_forward.6} parent=11 // pred_fallthru
        _
      // Predicated region
      $region17: #{cnn_forward.6} parent=11 // pred_check
        %p143 = pneg %p78
      $region18: #{cnn_forward.6} parent=11 // pred_check_branch
        %145 = sbr.rel (%p143) target = $region20
      $region19: #{cnn_forward.6} parent=11 // pred_region
        _
      $region20: #{cnn_forward.6} parent=11 // pred_fallthru
        _
      // Predicated region
      $region21: #{cnn_forward.6} parent=11 // pred_check
        %p146 = pneg %p99
      $region22: #{cnn_forward.6} parent=11 // pred_check_branch
        %148 = sbr.rel (%p146) target = $region24
      $region23: #{cnn_forward.6} parent=11 // pred_region
        _
      $region24: #{cnn_forward.6} parent=11 // pred_fallthru
        _
    $region12: #{cnn_forward.6} parent=5 // pred_fallthru
      _
    %p149 = scmp.lt.s32.totalorder %s10, 2
    // Predicated region
    $region25: #{cnn_forward.6} parent=5 // pred_check
      %p150 = pneg %p149
    $region26: #{cnn_forward.6} parent=5 // pred_check_branch
      %152 = sbr.rel (%p150) target = $region28
    $region27: #{cnn_forward.6} parent=5 // pred_region
      // Predicated region
      $region29: #{cnn_forward.6} parent=27 // pred_check
        %p153 = pneg %p30
      $region30: #{cnn_forward.6} parent=27 // pred_check_branch
        %155 = sbr.rel (%p153) target = $region32
      $region31: #{cnn_forward.6} parent=27 // pred_region
        %p156 = scmp.lt.s32.totalorder %s10, 1
        %s157 = scalar_select %p156, %s10, 1
        %s158 = smul.addr %s157, 2
        %s159 = smul.addr %s158, 8
        %s160 = scalar_lea.vmem %s0, %s159
      $region32: #{cnn_forward.6} parent=27 // pred_fallthru
        _
    $region28: #{cnn_forward.6} parent=5 // pred_fallthru
      _
    %p161 = scmp.le.s32.totalorder 1, %s10
    %p162 = scmp.lt.s32.totalorder %s10, 3
    %p163 = pnand %p161, %p162
    %p164 = pneg %p163
    // Predicated region
    $region33: #{cnn_forward.6} parent=5 // pred_check
      _
    $region34: #{cnn_forward.6} parent=5 // pred_check_branch
      %166 = sbr.rel (%p163) target = $region36
    $region35: #{cnn_forward.6} parent=5 // pred_region
      %s167 = ssub.s32 %s10, 1
      %p168 = scmp.lt.s32.totalorder %s15, 1
      %s169 = scalar_select %p168, %s15, 1
      %s170 = smul.addr %s169, 2
      %s171 = smul.addr %s170, 8
      %s172 = scalar_lea.vmem %s0, %s171
      %p173 = pneg %p36
      %p174 = pneg %p33
      %p175 = pneg %p57
      %p176 = pneg %p54
      %p177 = pneg %p78
      %p178 = pneg %p75
      %p179 = pneg %p99
      %p180 = pneg %p96
      %p181 = pneg %p125
      %p182 = pneg %p122
      %p183 = scmp.lt.s32.totalorder %s15, 1
      %s184 = scalar_select %p183, %s15, 1
      %s185 = smul.addr %s184, 4
      %s186 = scalar_lea.vmem %s4, %s185
      %p187 = scmp.lt.s32.totalorder %s15, 1
      %s188 = scalar_select %p187, %s15, 1
      %s189 = smul.addr %s188, 2
      %s190 = smul.addr %s189, 8
      %s191 = scalar_lea.vmem %s0, %s190
      %p192 = scmp.lt.s32.totalorder %s15, 1
      %s193 = scalar_select %p192, %s15, 1
      %s194 = smul.addr %s193, 4
      %s195 = scalar_lea.vmem %s4, %s194
      %196 = vst [vmem:[#allocation2] sm:$0xf] 0.0
      %v197 = vld [vmem:[%s191 + $0x1] sm:$0xf]
      %v198 = vld [vmem:[%s3] sm:$0xf]
      %200 = vset.pattern.permute.xlu0 0
      %201 = vperm.xlu0 %200, %v198
      %v202 = vpop.permute.xlu0 %201
      %v204 = vmul.f32 %v197, %v202
      %v205 = vld [vmem:[#allocation2] sm:$0xf]
      %v206 = vld [vmem:[%s1] sm:$0xff]
      %v207 = vld [vmem:[%s1 + $0x8] sm:$0xff]
      %v208 = vld [vmem:[%s1 + $0x10] sm:$0xff]
      %v209 = vld [vmem:[%s1 + $0x18] sm:$0xff]
      %v210 = vld [vmem:[%s1 + $0x20] sm:$0xff]
      %v211 = vld [vmem:[%s1 + $0x28] sm:$0xff]
      %v212 = vld [vmem:[%s1 + $0x30] sm:$0xff]
      %v213 = vld [vmem:[%s1 + $0x38] sm:$0xff]
      %v214 = vld [vmem:[%s1 + $0x40] sm:$0xff]
      %v215 = vld [vmem:[%s1 + $0x48] sm:$0xff]
      %v216 = vld [vmem:[%s1 + $0x50] sm:$0xff]
      %v217 = vld [vmem:[%s1 + $0x58] sm:$0xff]
      %v218 = vld [vmem:[%s1 + $0x60] sm:$0xff]
      %v219 = vld [vmem:[%s1 + $0x68] sm:$0xff]
      %v220 = vld [vmem:[%s1 + $0x70] sm:$0xff]
      %v221 = vld [vmem:[%s1 + $0x78] sm:$0xff]
      %222 = vmatprep.subr.mxu0 0.0
      %223 = vmatpush1.msra.mxu0 %v206
      %224 = vmatprep.subr.mxu0 0.0
      %225 = vmatpush1.msra.mxu0 %v207
      %226 = vmatprep.subr.mxu0 0.0
      %227 = vmatpush1.msra.mxu0 %v208
      %228 = vmatprep.subr.mxu0 0.0
      %229 = vmatpush1.msra.mxu0 %v209
      %230 = vmatprep.subr.mxu0 0.0
      %231 = vmatpush1.msra.mxu0 %v210
      %232 = vmatprep.subr.mxu0 0.0
      %233 = vmatpush1.msra.mxu0 %v211
      %234 = vmatprep.subr.mxu0 0.0
      %235 = vmatpush1.msra.mxu0 %v212
      %236 = vmatprep.subr.mxu0 0.0
      %237 = vmatpush1.msra.mxu0 %v213
      %238 = vmatprep.subr.mxu0 0.0
      %239 = vmatpush1.msra.mxu0 %v214
      %240 = vmatprep.subr.mxu0 0.0
      %241 = vmatpush1.msra.mxu0 %v215
      %242 = vmatprep.subr.mxu0 0.0
      %243 = vmatpush1.msra.mxu0 %v216
      %244 = vmatprep.subr.mxu0 0.0
      %245 = vmatpush1.msra.mxu0 %v217
      %246 = vmatprep.subr.mxu0 0.0
      %247 = vmatpush1.msra.mxu0 %v218
      %248 = vmatprep.subr.mxu0 0.0
      %249 = vmatpush1.msra.mxu0 %v219
      %250 = vmatprep.subr.mxu0 0.0
      %251 = vmatpush1.msra.mxu0 %v220
      %252 = vmatprep.subr.mxu0 0.0
      %253 = vmatpush1.msra.mxu0 %v221
      %254 = vmatprep.subr.mxu0 0.0
      %255 = vmatpush1.msra.mxu0 0.0
      %256 = vmatprep.subr.mxu0 0.0
      %257 = vmatpush1.msra.mxu0 0.0
      %258 = vmatprep.subr.mxu0 0.0
      %259 = vmatpush1.msra.mxu0 0.0
      %260 = vmatprep.subr.mxu0 0.0
      %261 = vmatpush1.msra.mxu0 0.0
      %262 = vmatprep.subr.mxu0 0.0
      %263 = vmatpush1.msra.mxu0 0.0
      %264 = vmatprep.subr.mxu0 0.0
      %265 = vmatpush1.msra.mxu0 0.0
      %266 = vmatprep.subr.mxu0 0.0
      %267 = vmatpush1.msra.mxu0 0.0
      %268 = vmatprep.subr.mxu0 0.0
      %269 = vmatpush1.msra.mxu0 0.0
      %270 = vmatprep.subr.mxu0 0.0
      %271 = vmatpush1.msra.mxu0 0.0
      %272 = vmatprep.subr.mxu0 0.0
      %273 = vmatpush1.msra.mxu0 0.0
      %274 = vmatprep.subr.mxu0 0.0
      %275 = vmatpush1.msra.mxu0 0.0
      %276 = vmatprep.subr.mxu0 0.0
      %277 = vmatpush1.msra.mxu0 0.0
      %278 = vmatprep.subr.mxu0 0.0
      %279 = vmatpush1.msra.mxu0 0.0
      %280 = vmatprep.subr.mxu0 0.0
      %281 = vmatpush1.msra.mxu0 0.0
      %282 = vmatprep.subr.mxu0 0.0
      %283 = vmatpush1.msra.mxu0 0.0
      %284 = vmatprep.subr.mxu0 0.0
      %285 = vmatpush1.msra.mxu0 0.0
      %286 = vmatprep.mubr.f32.mxu0 0.0
      %287 = vmatmul.mubr.f32.gmra.mrb[0].mxu0 %v204
      %v288 = vpop.f32.mrb[0].mxu0
      %v289 = vadd.f32 0.0, %v288
      %v290 = vpop.f32.mrb[0].mxu0
      %291 = vdwg.mxu0
      %v292 = vadd.f32 %v205, %v289
      %293 = vst [vmem:[#allocation2] sm:$0xf] %v292
      %v294 = vld [vmem:[%s191 + $0x2] sm:$0xf]
      %v295 = vld [vmem:[#allocation2] sm:$0xf]
      %s296 = scalar_lea.vmem %s1, 128
      %v297 = vld [vmem:[%s296] sm:$0xff]
      %v298 = vld [vmem:[%s296 + $0x8] sm:$0xff]
      %v299 = vld [vmem:[%s296 + $0x10] sm:$0xff]
      %v300 = vld [vmem:[%s296 + $0x18] sm:$0xff]
      %v301 = vld [vmem:[%s296 + $0x20] sm:$0xff]
      %v302 = vld [vmem:[%s296 + $0x28] sm:$0xff]
      %v303 = vld [vmem:[%s296 + $0x30] sm:$0xff]
      %v304 = vld [vmem:[%s296 + $0x38] sm:$0xff]
      %v305 = vld [vmem:[%s296 + $0x40] sm:$0xff]
      %v306 = vld [vmem:[%s296 + $0x48] sm:$0xff]
      %v307 = vld [vmem:[%s296 + $0x50] sm:$0xff]
      %v308 = vld [vmem:[%s296 + $0x58] sm:$0xff]
      %v309 = vld [vmem:[%s296 + $0x60] sm:$0xff]
      %v310 = vld [vmem:[%s296 + $0x68] sm:$0xff]
      %v311 = vld [vmem:[%s296 + $0x70] sm:$0xff]
      %v312 = vld [vmem:[%s296 + $0x78] sm:$0xff]
      %313 = vmatprep.subr.mxu0 0.0
      %314 = vmatpush1.msra.mxu0 %v297
      %315 = vmatprep.subr.mxu0 0.0
      %316 = vmatpush1.msra.mxu0 %v298
      %317 = vmatprep.subr.mxu0 0.0
      %318 = vmatpush1.msra.mxu0 %v299
      %319 = vmatprep.subr.mxu0 0.0
      %320 = vmatpush1.msra.mxu0 %v300
      %321 = vmatprep.subr.mxu0 0.0
      %322 = vmatpush1.msra.mxu0 %v301
      %323 = vmatprep.subr.mxu0 0.0
      %324 = vmatpush1.msra.mxu0 %v302
      %325 = vmatprep.subr.mxu0 0.0
      %326 = vmatpush1.msra.mxu0 %v303
      %327 = vmatprep.subr.mxu0 0.0
      %328 = vmatpush1.msra.mxu0 %v304
      %329 = vmatprep.subr.mxu0 0.0
      %330 = vmatpush1.msra.mxu0 %v305
      %331 = vmatprep.subr.mxu0 0.0
      %332 = vmatpush1.msra.mxu0 %v306
      %333 = vmatprep.subr.mxu0 0.0
      %334 = vmatpush1.msra.mxu0 %v307
      %335 = vmatprep.subr.mxu0 0.0
      %336 = vmatpush1.msra.mxu0 %v308
      %337 = vmatprep.subr.mxu0 0.0
      %338 = vmatpush1.msra.mxu0 %v309
      %339 = vmatprep.subr.mxu0 0.0
      %340 = vmatpush1.msra.mxu0 %v310
      %341 = vmatprep.subr.mxu0 0.0
      %342 = vmatpush1.msra.mxu0 %v311
      %343 = vmatprep.subr.mxu0 0.0
      %344 = vmatpush1.msra.mxu0 %v312
      %345 = vmatprep.subr.mxu0 0.0
      %346 = vmatpush1.msra.mxu0 0.0
      %347 = vmatprep.subr.mxu0 0.0
      %348 = vmatpush1.msra.mxu0 0.0
      %349 = vmatprep.subr.mxu0 0.0
      %350 = vmatpush1.msra.mxu0 0.0
      %351 = vmatprep.subr.mxu0 0.0
      %352 = vmatpush1.msra.mxu0 0.0
      %353 = vmatprep.subr.mxu0 0.0
      %354 = vmatpush1.msra.mxu0 0.0
      %355 = vmatprep.subr.mxu0 0.0
      %356 = vmatpush1.msra.mxu0 0.0
      %357 = vmatprep.subr.mxu0 0.0
      %358 = vmatpush1.msra.mxu0 0.0
      %359 = vmatprep.subr.mxu0 0.0
      %360 = vmatpush1.msra.mxu0 0.0
      %361 = vmatprep.subr.mxu0 0.0
      %362 = vmatpush1.msra.mxu0 0.0
      %363 = vmatprep.subr.mxu0 0.0
      %364 = vmatpush1.msra.mxu0 0.0
      %365 = vmatprep.subr.mxu0 0.0
      %366 = vmatpush1.msra.mxu0 0.0
      %367 = vmatprep.subr.mxu0 0.0
      %368 = vmatpush1.msra.mxu0 0.0
      %369 = vmatprep.subr.mxu0 0.0
      %370 = vmatpush1.msra.mxu0 0.0
      %371 = vmatprep.subr.mxu0 0.0
      %372 = vmatpush1.msra.mxu0 0.0
      %373 = vmatprep.subr.mxu0 0.0
      %374 = vmatpush1.msra.mxu0 0.0
      %375 = vmatprep.subr.mxu0 0.0
      %376 = vmatpush1.msra.mxu0 0.0
      %377 = vmatprep.mubr.f32.mxu0 0.0
      %378 = vmatmul.mubr.f32.gmra.mrb[0].mxu0 %v294
      %v379 = vpop.f32.mrb[0].mxu0
      %v380 = vadd.f32 0.0, %v379
      %v381 = vpop.f32.mrb[0].mxu0
      %382 = vdwg.mxu0
      %v383 = vadd.f32 %v295, %v380
      %384 = vst [vmem:[#allocation2] sm:$0xf] %v383
      %v385 = vld [vmem:[%s191 + $0x3] sm:$0xf]
      %s386 = scalar_lea.vmem %s3, 4
      %v387 = vld [vmem:[%s386] sm:$0xf]
      %389 = vset.pattern.permute.xlu0 0
      %390 = vperm.xlu0 %389, %v387
      %v391 = vpop.permute.xlu0 %390
      %v393 = vmul.f32 %v385, %v391
      %v394 = vld [vmem:[#allocation2] sm:$0xf]
      %s395 = scalar_lea.vmem %s1, 256
      %v396 = vld [vmem:[%s395] sm:$0xff]
      %v397 = vld [vmem:[%s395 + $0x8] sm:$0xff]
      %v398 = vld [vmem:[%s395 + $0x10] sm:$0xff]
      %v399 = vld [vmem:[%s395 + $0x18] sm:$0xff]
      %v400 = vld [vmem:[%s395 + $0x20] sm:$0xff]
      %v401 = vld [vmem:[%s395 + $0x28] sm:$0xff]
      %v402 = vld [vmem:[%s395 + $0x30] sm:$0xff]
      %v403 = vld [vmem:[%s395 + $0x38] sm:$0xff]
      %v404 = vld [vmem:[%s395 + $0x40] sm:$0xff]
      %v405 = vld [vmem:[%s395 + $0x48] sm:$0xff]
      %v406 = vld [vmem:[%s395 + $0x50] sm:$0xff]
      %v407 = vld [vmem:[%s395 + $0x58] sm:$0xff]
      %v408 = vld [vmem:[%s395 + $0x60] sm:$0xff]
      %v409 = vld [vmem:[%s395 + $0x68] sm:$0xff]
      %v410 = vld [vmem:[%s395 + $0x70] sm:$0xff]
      %v411 = vld [vmem:[%s395 + $0x78] sm:$0xff]
      %412 = vmatprep.subr.mxu0 0.0
      %413 = vmatpush1.msra.mxu0 %v396
      %414 = vmatprep.subr.mxu0 0.0
      %415 = vmatpush1.msra.mxu0 %v397
      %416 = vmatprep.subr.mxu0 0.0
      %417 = vmatpush1.msra.mxu0 %v398
      %418 = vmatprep.subr.mxu0 0.0
      %419 = vmatpush1.msra.mxu0 %v399
      %420 = vmatprep.subr.mxu0 0.0
      %421 = vmatpush1.msra.mxu0 %v400
      %422 = vmatprep.subr.mxu0 0.0
      %423 = vmatpush1.msra.mxu0 %v401
      %424 = vmatprep.subr.mxu0 0.0
      %425 = vmatpush1.msra.mxu0 %v402
      %426 = vmatprep.subr.mxu0 0.0
      %427 = vmatpush1.msra.mxu0 %v403
      %428 = vmatprep.subr.mxu0 0.0
      %429 = vmatpush1.msra.mxu0 %v404
      %430 = vmatprep.subr.mxu0 0.0
      %431 = vmatpush1.msra.mxu0 %v405
      %432 = vmatprep.subr.mxu0 0.0
      %433 = vmatpush1.msra.mxu0 %v406
      %434 = vmatprep.subr.mxu0 0.0
      %435 = vmatpush1.msra.mxu0 %v407
      %436 = vmatprep.subr.mxu0 0.0
      %437 = vmatpush1.msra.mxu0 %v408
      %438 = vmatprep.subr.mxu0 0.0
      %439 = vmatpush1.msra.mxu0 %v409
      %440 = vmatprep.subr.mxu0 0.0
      %441 = vmatpush1.msra.mxu0 %v410
      %442 = vmatprep.subr.mxu0 0.0
      %443 = vmatpush1.msra.mxu0 %v411
      %444 = vmatprep.subr.mxu0 0.0
      %445 = vmatpush1.msra.mxu0 0.0
      %446 = vmatprep.subr.mxu0 0.0
      %447 = vmatpush1.msra.mxu0 0.0
      %448 = vmatprep.subr.mxu0 0.0
      %449 = vmatpush1.msra.mxu0 0.0
      %450 = vmatprep.subr.mxu0 0.0
      %451 = vmatpush1.msra.mxu0 0.0
      %452 = vmatprep.subr.mxu0 0.0
      %453 = vmatpush1.msra.mxu0 0.0
      %454 = vmatprep.subr.mxu0 0.0
      %455 = vmatpush1.msra.mxu0 0.0
      %456 = vmatprep.subr.mxu0 0.0
      %457 = vmatpush1.msra.mxu0 0.0
      %458 = vmatprep.subr.mxu0 0.0
      %459 = vmatpush1.msra.mxu0 0.0
      %460 = vmatprep.subr.mxu0 0.0
      %461 = vmatpush1.msra.mxu0 0.0
      %462 = vmatprep.subr.mxu0 0.0
      %463 = vmatpush1.msra.mxu0 0.0
      %464 = vmatprep.subr.mxu0 0.0
      %465 = vmatpush1.msra.mxu0 0.0
      %466 = vmatprep.subr.mxu0 0.0
      %467 = vmatpush1.msra.mxu0 0.0
      %468 = vmatprep.subr.mxu0 0.0
      %469 = vmatpush1.msra.mxu0 0.0
      %470 = vmatprep.subr.mxu0 0.0
      %471 = vmatpush1.msra.mxu0 0.0
      %472 = vmatprep.subr.mxu0 0.0
      %473 = vmatpush1.msra.mxu0 0.0
      %474 = vmatprep.subr.mxu0 0.0
      %475 = vmatpush1.msra.mxu0 0.0
      %476 = vmatprep.mubr.f32.mxu0 0.0
      %477 = vmatmul.mubr.f32.gmra.mrb[0].mxu0 %v393
      %v478 = vpop.f32.mrb[0].mxu0
      %v479 = vadd.f32 0.0, %v478
      %v480 = vpop.f32.mrb[0].mxu0
      %481 = vdwg.mxu0
      %v482 = vadd.f32 %v394, %v479
      %483 = vst [vmem:[#allocation2] sm:$0xf] %v482
      %v484 = vld [vmem:[%s191 + $0x3] sm:$0xf]
      %v485 = vld [vmem:[%s3] sm:$0xf]
      %487 = vset.pattern.permute.xlu0 0
      %488 = vperm.xlu0 %487, %v485
      %v489 = vpop.permute.xlu0 %488
      %v491 = vmul.f32 %v484, %v489
      %v492 = vld [vmem:[#allocation2] sm:$0xf]
      %s493 = scalar_lea.vmem %s1, 384
      %v494 = vld [vmem:[%s493] sm:$0xff]
      %v495 = vld [vmem:[%s493 + $0x8] sm:$0xff]
      %v496 = vld [vmem:[%s493 + $0x10] sm:$0xff]
      %v497 = vld [vmem:[%s493 + $0x18] sm:$0xff]
      %v498 = vld [vmem:[%s493 + $0x20] sm:$0xff]
      %v499 = vld [vmem:[%s493 + $0x28] sm:$0xff]
      %v500 = vld [vmem:[%s493 + $0x30] sm:$0xff]
      %v501 = vld [vmem:[%s493 + $0x38] sm:$0xff]
      %v502 = vld [vmem:[%s493 + $0x40] sm:$0xff]
      %v503 = vld [vmem:[%s493 + $0x48] sm:$0xff]
      %v504 = vld [vmem:[%s493 + $0x50] sm:$0xff]
      %v505 = vld [vmem:[%s493 + $0x58] sm:$0xff]
      %v506 = vld [vmem:[%s493 + $0x60] sm:$0xff]
      %v507 = vld [vmem:[%s493 + $0x68] sm:$0xff]
      %v508 = vld [vmem:[%s493 + $0x70] sm:$0xff]
      %v509 = vld [vmem:[%s493 + $0x78] sm:$0xff]
      %510 = vmatprep.subr.mxu0 0.0
      %511 = vmatpush1.msra.mxu0 %v494
      %512 = vmatprep.subr.mxu0 0.0
      %513 = vmatpush1.msra.mxu0 %v495
      %514 = vmatprep.subr.mxu0 0.0
      %515 = vmatpush1.msra.mxu0 %v496
      %516 = vmatprep.subr.mxu0 0.0
      %517 = vmatpush1.msra.mxu0 %v497
      %518 = vmatprep.subr.mxu0 0.0
      %519 = vmatpush1.msra.mxu0 %v498
      %520 = vmatprep.subr.mxu0 0.0
      %521 = vmatpush1.msra.mxu0 %v499
      %522 = vmatprep.subr.mxu0 0.0
      %523 = vmatpush1.msra.mxu0 %v500
      %524 = vmatprep.subr.mxu0 0.0
      %525 = vmatpush1.msra.mxu0 %v501
      %526 = vmatprep.subr.mxu0 0.0
      %527 = vmatpush1.msra.mxu0 %v502
      %528 = vmatprep.subr.mxu0 0.0
      %529 = vmatpush1.msra.mxu0 %v503
      %530 = vmatprep.subr.mxu0 0.0
      %531 = vmatpush1.msra.mxu0 %v504
      %532 = vmatprep.subr.mxu0 0.0
      %533 = vmatpush1.msra.mxu0 %v505
      %534 = vmatprep.subr.mxu0 0.0
      %535 = vmatpush1.msra.mxu0 %v506
      %536 = vmatprep.subr.mxu0 0.0
      %537 = vmatpush1.msra.mxu0 %v507
      %538 = vmatprep.subr.mxu0 0.0
      %539 = vmatpush1.msra.mxu0 %v508
      %540 = vmatprep.subr.mxu0 0.0
      %541 = vmatpush1.msra.mxu0 %v509
      %542 = vmatprep.subr.mxu0 0.0
      %543 = vmatpush1.msra.mxu0 0.0
      %544 = vmatprep.subr.mxu0 0.0
      %545 = vmatpush1.msra.mxu0 0.0
      %546 = vmatprep.subr.mxu0 0.0
      %547 = vmatpush1.msra.mxu0 0.0
      %548 = vmatprep.subr.mxu0 0.0
      %549 = vmatpush1.msra.mxu0 0.0
      %550 = vmatprep.subr.mxu0 0.0
      %551 = vmatpush1.msra.mxu0 0.0
      %552 = vmatprep.subr.mxu0 0.0
      %553 = vmatpush1.msra.mxu0 0.0
      %554 = vmatprep.subr.mxu0 0.0
      %555 = vmatpush1.msra.mxu0 0.0
      %556 = vmatprep.subr.mxu0 0.0
      %557 = vmatpush1.msra.mxu0 0.0
      %558 = vmatprep.subr.mxu0 0.0
      %559 = vmatpush1.msra.mxu0 0.0
      %560 = vmatprep.subr.mxu0 0.0
      %561 = vmatpush1.msra.mxu0 0.0
      %562 = vmatprep.subr.mxu0 0.0
      %563 = vmatpush1.msra.mxu0 0.0
      %564 = vmatprep.subr.mxu0 0.0
      %565 = vmatpush1.msra.mxu0 0.0
      %566 = vmatprep.subr.mxu0 0.0
      %567 = vmatpush1.msra.mxu0 0.0
      %568 = vmatprep.subr.mxu0 0.0
      %569 = vmatpush1.msra.mxu0 0.0
      %570 = vmatprep.subr.mxu0 0.0
      %571 = vmatpush1.msra.mxu0 0.0
      %572 = vmatprep.subr.mxu0 0.0
      %573 = vmatpush1.msra.mxu0 0.0
      %574 = vmatprep.mubr.f32.mxu0 0.0
      %575 = vmatmul.mubr.f32.gmra.mrb[0].mxu0 %v491
      %v576 = vpop.f32.mrb[0].mxu0
      %v577 = vadd.f32 0.0, %v576
      %v578 = vpop.f32.mrb[0].mxu0
      %579 = vdwg.mxu0
      %v580 = vadd.f32 %v492, %v577
      %581 = vst [vmem:[#allocation2] sm:$0xf] %v580
      %v582 = vld [vmem:[%s191 + $0x4] sm:$0xf]
      %v583 = vld [vmem:[#allocation2] sm:$0xf]
      %s584 = scalar_lea.vmem %s1, 512
      %v585 = vld [vmem:[%s584] sm:$0xff]
      %v586 = vld [vmem:[%s584 + $0x8] sm:$0xff]
      %v587 = vld [vmem:[%s584 + $0x10] sm:$0xff]
      %v588 = vld [vmem:[%s584 + $0x18] sm:$0xff]
      %v589 = vld [vmem:[%s584 + $0x20] sm:$0xff]
      %v590 = vld [vmem:[%s584 + $0x28] sm:$0xff]
      %v591 = vld [vmem:[%s584 + $0x30] sm:$0xff]
      %v592 = vld [vmem:[%s584 + $0x38] sm:$0xff]
      %v593 = vld [vmem:[%s584 + $0x40] sm:$0xff]
      %v594 = vld [vmem:[%s584 + $0x48] sm:$0xff]
      %v595 = vld [vmem:[%s584 + $0x50] sm:$0xff]
      %v596 = vld [vmem:[%s584 + $0x58] sm:$0xff]
      %v597 = vld [vmem:[%s584 + $0x60] sm:$0xff]
      %v598 = vld [vmem:[%s584 + $0x68] sm:$0xff]
      %v599 = vld [vmem:[%s584 + $0x70] sm:$0xff]
      %v600 = vld [vmem:[%s584 + $0x78] sm:$0xff]
      %601 = vmatprep.subr.mxu0 0.0
      %602 = vmatpush1.msra.mxu0 %v585
      %603 = vmatprep.subr.mxu0 0.0
      %604 = vmatpush1.msra.mxu0 %v586
      %605 = vmatprep.subr.mxu0 0.0
      %606 = vmatpush1.msra.mxu0 %v587
      %607 = vmatprep.subr.mxu0 0.0
      %608 = vmatpush1.msra.mxu0 %v588
      %609 = vmatprep.subr.mxu0 0.0
      %610 = vmatpush1.msra.mxu0 %v589
      %611 = vmatprep.subr.mxu0 0.0
      %612 = vmatpush1.msra.mxu0 %v590
      %613 = vmatprep.subr.mxu0 0.0
      %614 = vmatpush1.msra.mxu0 %v591
      %615 = vmatprep.subr.mxu0 0.0
      %616 = vmatpush1.msra.mxu0 %v592
      %617 = vmatprep.subr.mxu0 0.0
      %618 = vmatpush1.msra.mxu0 %v593
      %619 = vmatprep.subr.mxu0 0.0
      %620 = vmatpush1.msra.mxu0 %v594
      %621 = vmatprep.subr.mxu0 0.0
      %622 = vmatpush1.msra.mxu0 %v595
      %623 = vmatprep.subr.mxu0 0.0
      %624 = vmatpush1.msra.mxu0 %v596
      %625 = vmatprep.subr.mxu0 0.0
      %626 = vmatpush1.msra.mxu0 %v597
      %627 = vmatprep.subr.mxu0 0.0
      %628 = vmatpush1.msra.mxu0 %v598
      %629 = vmatprep.subr.mxu0 0.0
      %630 = vmatpush1.msra.mxu0 %v599
      %631 = vmatprep.subr.mxu0 0.0
      %632 = vmatpush1.msra.mxu0 %v600
      %633 = vmatprep.subr.mxu0 0.0
      %634 = vmatpush1.msra.mxu0 0.0
      %635 = vmatprep.subr.mxu0 0.0
      %636 = vmatpush1.msra.mxu0 0.0
      %637 = vmatprep.subr.mxu0 0.0
      %638 = vmatpush1.msra.mxu0 0.0
      %639 = vmatprep.subr.mxu0 0.0
      %640 = vmatpush1.msra.mxu0 0.0
      %641 = vmatprep.subr.mxu0 0.0
      %642 = vmatpush1.msra.mxu0 0.0
      %643 = vmatprep.subr.mxu0 0.0
      %644 = vmatpush1.msra.mxu0 0.0
      %645 = vmatprep.subr.mxu0 0.0
      %646 = vmatpush1.msra.mxu0 0.0
      %647 = vmatprep.subr.mxu0 0.0
      %648 = vmatpush1.msra.mxu0 0.0
      %649 = vmatprep.subr.mxu0 0.0
      %650 = vmatpush1.msra.mxu0 0.0
      %651 = vmatprep.subr.mxu0 0.0
      %652 = vmatpush1.msra.mxu0 0.0
      %653 = vmatprep.subr.mxu0 0.0
      %654 = vmatpush1.msra.mxu0 0.0
      %655 = vmatprep.subr.mxu0 0.0
      %656 = vmatpush1.msra.mxu0 0.0
      %657 = vmatprep.subr.mxu0 0.0
      %658 = vmatpush1.msra.mxu0 0.0
      %659 = vmatprep.subr.mxu0 0.0
      %660 = vmatpush1.msra.mxu0 0.0
      %661 = vmatprep.subr.mxu0 0.0
      %662 = vmatpush1.msra.mxu0 0.0
      %663 = vmatprep.subr.mxu0 0.0
      %664 = vmatpush1.msra.mxu0 0.0
      %665 = vmatprep.mubr.f32.mxu0 0.0
      %666 = vmatmul.mubr.f32.gmra.mrb[0].mxu0 %v582
      %v667 = vpop.f32.mrb[0].mxu0
      %v668 = vadd.f32 0.0, %v667
      %v669 = vpop.f32.mrb[0].mxu0
      %670 = vdwg.mxu0
      %v671 = vadd.f32 %v583, %v668
      %672 = vst [vmem:[#allocation2] sm:$0xf] %v671
      %v673 = vld [vmem:[%s191 + $0x5] sm:$0xf]
      %v674 = vld [vmem:[%s386] sm:$0xf]
      %676 = vset.pattern.permute.xlu0 0
      %677 = vperm.xlu0 %676, %v674
      %v678 = vpop.permute.xlu0 %677
      %v680 = vmul.f32 %v673, %v678
      %v681 = vld [vmem:[#allocation2] sm:$0xf]
      %s682 = scalar_lea.vmem %s1, 640
      %v683 = vld [vmem:[%s682] sm:$0xff]
      %v684 = vld [vmem:[%s682 + $0x8] sm:$0xff]
      %v685 = vld [vmem:[%s682 + $0x10] sm:$0xff]
      %v686 = vld [vmem:[%s682 + $0x18] sm:$0xff]
      %v687 = vld [vmem:[%s682 + $0x20] sm:$0xff]
      %v688 = vld [vmem:[%s682 + $0x28] sm:$0xff]
      %v689 = vld [vmem:[%s682 + $0x30] sm:$0xff]
      %v690 = vld [vmem:[%s682 + $0x38] sm:$0xff]
      %v691 = vld [vmem:[%s682 + $0x40] sm:$0xff]
      %v692 = vld [vmem:[%s682 + $0x48] sm:$0xff]
      %v693 = vld [vmem:[%s682 + $0x50] sm:$0xff]
      %v694 = vld [vmem:[%s682 + $0x58] sm:$0xff]
      %v695 = vld [vmem:[%s682 + $0x60] sm:$0xff]
      %v696 = vld [vmem:[%s682 + $0x68] sm:$0xff]
      %v697 = vld [vmem:[%s682 + $0x70] sm:$0xff]
      %v698 = vld [vmem:[%s682 + $0x78] sm:$0xff]
      %699 = vmatprep.subr.mxu0 0.0
      %700 = vmatpush1.msra.mxu0 %v683
      %701 = vmatprep.subr.mxu0 0.0
      %702 = vmatpush1.msra.mxu0 %v684
      %703 = vmatprep.subr.mxu0 0.0
      %704 = vmatpush1.msra.mxu0 %v685
      %705 = vmatprep.subr.mxu0 0.0
      %706 = vmatpush1.msra.mxu0 %v686
      %707 = vmatprep.subr.mxu0 0.0
      %708 = vmatpush1.msra.mxu0 %v687
      %709 = vmatprep.subr.mxu0 0.0
      %710 = vmatpush1.msra.mxu0 %v688
      %711 = vmatprep.subr.mxu0 0.0
      %712 = vmatpush1.msra.mxu0 %v689
      %713 = vmatprep.subr.mxu0 0.0
      %714 = vmatpush1.msra.mxu0 %v690
      %715 = vmatprep.subr.mxu0 0.0
      %716 = vmatpush1.msra.mxu0 %v691
      %717 = vmatprep.subr.mxu0 0.0
      %718 = vmatpush1.msra.mxu0 %v692
      %719 = vmatprep.subr.mxu0 0.0
      %720 = vmatpush1.msra.mxu0 %v693
      %721 = vmatprep.subr.mxu0 0.0
      %722 = vmatpush1.msra.mxu0 %v694
      %723 = vmatprep.subr.mxu0 0.0
      %724 = vmatpush1.msra.mxu0 %v695
      %725 = vmatprep.subr.mxu0 0.0
      %726 = vmatpush1.msra.mxu0 %v696
      %727 = vmatprep.subr.mxu0 0.0
      %728 = vmatpush1.msra.mxu0 %v697
      %729 = vmatprep.subr.mxu0 0.0
      %730 = vmatpush1.msra.mxu0 %v698
      %731 = vmatprep.subr.mxu0 0.0
      %732 = vmatpush1.msra.mxu0 0.0
      %733 = vmatprep.subr.mxu0 0.0
      %734 = vmatpush1.msra.mxu0 0.0
      %735 = vmatprep.subr.mxu0 0.0
      %736 = vmatpush1.msra.mxu0 0.0
      %737 = vmatprep.subr.mxu0 0.0
      %738 = vmatpush1.msra.mxu0 0.0
      %739 = vmatprep.subr.mxu0 0.0
      %740 = vmatpush1.msra.mxu0 0.0
      %741 = vmatprep.subr.mxu0 0.0
      %742 = vmatpush1.msra.mxu0 0.0
      %743 = vmatprep.subr.mxu0 0.0
      %744 = vmatpush1.msra.mxu0 0.0
      %745 = vmatprep.subr.mxu0 0.0
      %746 = vmatpush1.msra.mxu0 0.0
      %747 = vmatprep.subr.mxu0 0.0
      %748 = vmatpush1.msra.mxu0 0.0
      %749 = vmatprep.subr.mxu0 0.0
      %750 = vmatpush1.msra.mxu0 0.0
      %751 = vmatprep.subr.mxu0 0.0
      %752 = vmatpush1.msra.mxu0 0.0
      %753 = vmatprep.subr.mxu0 0.0
      %754 = vmatpush1.msra.mxu0 0.0
      %755 = vmatprep.subr.mxu0 0.0
      %756 = vmatpush1.msra.mxu0 0.0
      %757 = vmatprep.subr.mxu0 0.0
      %758 = vmatpush1.msra.mxu0 0.0
      %759 = vmatprep.subr.mxu0 0.0
      %760 = vmatpush1.msra.mxu0 0.0
      %761 = vmatprep.subr.mxu0 0.0
      %762 = vmatpush1.msra.mxu0 0.0
      %763 = vmatprep.mubr.f32.mxu0 0.0
      %764 = vmatmul.mubr.f32.gmra.mrb[0].mxu0 %v680
      %v765 = vpop.f32.mrb[0].mxu0
      %v766 = vadd.f32 0.0, %v765
      %v767 = vpop.f32.mrb[0].mxu0
      %768 = vdwg.mxu0
      %v769 = vadd.f32 %v681, %v766
      %770 = vst [vmem:[#allocation2] sm:$0xf] %v769
      %v771 = vld [vmem:[%s191 + $0x5] sm:$0xf]
      %v772 = vld [vmem:[%s3] sm:$0xf]
      %774 = vset.pattern.permute.xlu0 0
      %775 = vperm.xlu0 %774, %v772
      %v776 = vpop.permute.xlu0 %775
      %v778 = vmul.f32 %v771, %v776
      %v779 = vld [vmem:[#allocation2] sm:$0xf]
      %s780 = scalar_lea.vmem %s1, 768
      %v781 = vld [vmem:[%s780] sm:$0xff]
      %v782 = vld [vmem:[%s780 + $0x8] sm:$0xff]
      %v783 = vld [vmem:[%s780 + $0x10] sm:$0xff]
      %v784 = vld [vmem:[%s780 + $0x18] sm:$0xff]
      %v785 = vld [vmem:[%s780 + $0x20] sm:$0xff]
      %v786 = vld [vmem:[%s780 + $0x28] sm:$0xff]
      %v787 = vld [vmem:[%s780 + $0x30] sm:$0xff]
      %v788 = vld [vmem:[%s780 + $0x38] sm:$0xff]
      %v789 = vld [vmem:[%s780 + $0x40] sm:$0xff]
      %v790 = vld [vmem:[%s780 + $0x48] sm:$0xff]
      %v791 = vld [vmem:[%s780 + $0x50] sm:$0xff]
      %v792 = vld [vmem:[%s780 + $0x58] sm:$0xff]
      %v793 = vld [vmem:[%s780 + $0x60] sm:$0xff]
      %v794 = vld [vmem:[%s780 + $0x68] sm:$0xff]
      %v795 = vld [vmem:[%s780 + $0x70] sm:$0xff]
      %v796 = vld [vmem:[%s780 + $0x78] sm:$0xff]
      %797 = vmatprep.subr.mxu0 0.0
      %798 = vmatpush1.msra.mxu0 %v781
      %799 = vmatprep.subr.mxu0 0.0
      %800 = vmatpush1.msra.mxu0 %v782
      %801 = vmatprep.subr.mxu0 0.0
      %802 = vmatpush1.msra.mxu0 %v783
      %803 = vmatprep.subr.mxu0 0.0
      %804 = vmatpush1.msra.mxu0 %v784
      %805 = vmatprep.subr.mxu0 0.0
      %806 = vmatpush1.msra.mxu0 %v785
      %807 = vmatprep.subr.mxu0 0.0
      %808 = vmatpush1.msra.mxu0 %v786
      %809 = vmatprep.subr.mxu0 0.0
      %810 = vmatpush1.msra.mxu0 %v787
      %811 = vmatprep.subr.mxu0 0.0
      %812 = vmatpush1.msra.mxu0 %v788
      %813 = vmatprep.subr.mxu0 0.0
      %814 = vmatpush1.msra.mxu0 %v789
      %815 = vmatprep.subr.mxu0 0.0
      %816 = vmatpush1.msra.mxu0 %v790
      %817 = vmatprep.subr.mxu0 0.0
      %818 = vmatpush1.msra.mxu0 %v791
      %819 = vmatprep.subr.mxu0 0.0
      %820 = vmatpush1.msra.mxu0 %v792
      %821 = vmatprep.subr.mxu0 0.0
      %822 = vmatpush1.msra.mxu0 %v793
      %823 = vmatprep.subr.mxu0 0.0
      %824 = vmatpush1.msra.mxu0 %v794
      %825 = vmatprep.subr.mxu0 0.0
      %826 = vmatpush1.msra.mxu0 %v795
      %827 = vmatprep.subr.mxu0 0.0
      %828 = vmatpush1.msra.mxu0 %v796
      %829 = vmatprep.subr.mxu0 0.0
      %830 = vmatpush1.msra.mxu0 0.0
      %831 = vmatprep.subr.mxu0 0.0
      %832 = vmatpush1.msra.mxu0 0.0
      %833 = vmatprep.subr.mxu0 0.0
      %834 = vmatpush1.msra.mxu0 0.0
      %835 = vmatprep.subr.mxu0 0.0
      %836 = vmatpush1.msra.mxu0 0.0
      %837 = vmatprep.subr.mxu0 0.0
      %838 = vmatpush1.msra.mxu0 0.0
      %839 = vmatprep.subr.mxu0 0.0
      %840 = vmatpush1.msra.mxu0 0.0
      %841 = vmatprep.subr.mxu0 0.0
      %842 = vmatpush1.msra.mxu0 0.0
      %843 = vmatprep.subr.mxu0 0.0
      %844 = vmatpush1.msra.mxu0 0.0
      %845 = vmatprep.subr.mxu0 0.0
      %846 = vmatpush1.msra.mxu0 0.0
      %847 = vmatprep.subr.mxu0 0.0
      %848 = vmatpush1.msra.mxu0 0.0
      %849 = vmatprep.subr.mxu0 0.0
      %850 = vmatpush1.msra.mxu0 0.0
      %851 = vmatprep.subr.mxu0 0.0
      %852 = vmatpush1.msra.mxu0 0.0
      %853 = vmatprep.subr.mxu0 0.0
      %854 = vmatpush1.msra.mxu0 0.0
      %855 = vmatprep.subr.mxu0 0.0
      %856 = vmatpush1.msra.mxu0 0.0
      %857 = vmatprep.subr.mxu0 0.0
      %858 = vmatpush1.msra.mxu0 0.0
      %859 = vmatprep.subr.mxu0 0.0
      %860 = vmatpush1.msra.mxu0 0.0
      %861 = vmatprep.mubr.f32.mxu0 0.0
      %862 = vmatmul.mubr.f32.gmra.mrb[0].mxu0 %v778
      %v863 = vpop.f32.mrb[0].mxu0
      %v864 = vadd.f32 0.0, %v863
      %v865 = vpop.f32.mrb[0].mxu0
      %866 = vdwg.mxu0
      %v867 = vadd.f32 %v779, %v864
      %868 = vst [vmem:[#allocation2] sm:$0xf] %v867
      %v869 = vld [vmem:[%s191 + $0x6] sm:$0xf]
      %v870 = vld [vmem:[#allocation2] sm:$0xf]
      %s871 = scalar_lea.vmem %s1, 896
      %v872 = vld [vmem:[%s871] sm:$0xff]
      %v873 = vld [vmem:[%s871 + $0x8] sm:$0xff]
      %v874 = vld [vmem:[%s871 + $0x10] sm:$0xff]
      %v875 = vld [vmem:[%s871 + $0x18] sm:$0xff]
      %v876 = vld [vmem:[%s871 + $0x20] sm:$0xff]
      %v877 = vld [vmem:[%s871 + $0x28] sm:$0xff]
      %v878 = vld [vmem:[%s871 + $0x30] sm:$0xff]
      %v879 = vld [vmem:[%s871 + $0x38] sm:$0xff]
      %v880 = vld [vmem:[%s871 + $0x40] sm:$0xff]
      %v881 = vld [vmem:[%s871 + $0x48] sm:$0xff]
      %v882 = vld [vmem:[%s871 + $0x50] sm:$0xff]
      %v883 = vld [vmem:[%s871 + $0x58] sm:$0xff]
      %v884 = vld [vmem:[%s871 + $0x60] sm:$0xff]
      %v885 = vld [vmem:[%s871 + $0x68] sm:$0xff]
      %v886 = vld [vmem:[%s871 + $0x70] sm:$0xff]
      %v887 = vld [vmem:[%s871 + $0x78] sm:$0xff]
      %888 = vmatprep.subr.mxu0 0.0
      %889 = vmatpush1.msra.mxu0 %v872
      %890 = vmatprep.subr.mxu0 0.0
      %891 = vmatpush1.msra.mxu0 %v873
      %892 = vmatprep.subr.mxu0 0.0
      %893 = vmatpush1.msra.mxu0 %v874
      %894 = vmatprep.subr.mxu0 0.0
      %895 = vmatpush1.msra.mxu0 %v875
      %896 = vmatprep.subr.mxu0 0.0
      %897 = vmatpush1.msra.mxu0 %v876
      %898 = vmatprep.subr.mxu0 0.0
      %899 = vmatpush1.msra.mxu0 %v877
      %900 = vmatprep.subr.mxu0 0.0
      %901 = vmatpush1.msra.mxu0 %v878
      %902 = vmatprep.subr.mxu0 0.0
      %903 = vmatpush1.msra.mxu0 %v879
      %904 = vmatprep.subr.mxu0 0.0
      %905 = vmatpush1.msra.mxu0 %v880
      %906 = vmatprep.subr.mxu0 0.0
      %907 = vmatpush1.msra.mxu0 %v881
      %908 = vmatprep.subr.mxu0 0.0
      %909 = vmatpush1.msra.mxu0 %v882
      %910 = vmatprep.subr.mxu0 0.0
      %911 = vmatpush1.msra.mxu0 %v883
      %912 = vmatprep.subr.mxu0 0.0
      %913 = vmatpush1.msra.mxu0 %v884
      %914 = vmatprep.subr.mxu0 0.0
      %915 = vmatpush1.msra.mxu0 %v885
      %916 = vmatprep.subr.mxu0 0.0
      %917 = vmatpush1.msra.mxu0 %v886
      %918 = vmatprep.subr.mxu0 0.0
      %919 = vmatpush1.msra.mxu0 %v887
      %920 = vmatprep.subr.mxu0 0.0
      %921 = vmatpush1.msra.mxu0 0.0
      %922 = vmatprep.subr.mxu0 0.0
      %923 = vmatpush1.msra.mxu0 0.0
      %924 = vmatprep.subr.mxu0 0.0
      %925 = vmatpush1.msra.mxu0 0.0
      %926 = vmatprep.subr.mxu0 0.0
      %927 = vmatpush1.msra.mxu0 0.0
      %928 = vmatprep.subr.mxu0 0.0
      %929 = vmatpush1.msra.mxu0 0.0
      %930 = vmatprep.subr.mxu0 0.0
      %931 = vmatpush1.msra.mxu0 0.0
      %932 = vmatprep.subr.mxu0 0.0
      %933 = vmatpush1.msra.mxu0 0.0
      %934 = vmatprep.subr.mxu0 0.0
      %935 = vmatpush1.msra.mxu0 0.0
      %936 = vmatprep.subr.mxu0 0.0
      %937 = vmatpush1.msra.mxu0 0.0
      %938 = vmatprep.subr.mxu0 0.0
      %939 = vmatpush1.msra.mxu0 0.0
      %940 = vmatprep.subr.mxu0 0.0
      %941 = vmatpush1.msra.mxu0 0.0
      %942 = vmatprep.subr.mxu0 0.0
      %943 = vmatpush1.msra.mxu0 0.0
      %944 = vmatprep.subr.mxu0 0.0
      %945 = vmatpush1.msra.mxu0 0.0
      %946 = vmatprep.subr.mxu0 0.0
      %947 = vmatpush1.msra.mxu0 0.0
      %948 = vmatprep.subr.mxu0 0.0
      %949 = vmatpush1.msra.mxu0 0.0
      %950 = vmatprep.subr.mxu0 0.0
      %951 = vmatpush1.msra.mxu0 0.0
      %952 = vmatprep.mubr.f32.mxu0 0.0
      %953 = vmatmul.mubr.f32.gmra.mrb[0].mxu0 %v869
      %v954 = vpop.f32.mrb[0].mxu0
      %v955 = vadd.f32 0.0, %v954
      %v956 = vpop.f32.mrb[0].mxu0
      %957 = vdwg.mxu0
      %v958 = vadd.f32 %v870, %v955
      %959 = vst [vmem:[#allocation2] sm:$0xf] %v958
      %v960 = vld [vmem:[%s191 + $0x7] sm:$0xf]
      %v961 = vld [vmem:[%s386] sm:$0xf]
      %963 = vset.pattern.permute.xlu0 0
      %964 = vperm.xlu0 %963, %v961
      %v965 = vpop.permute.xlu0 %964
      %v967 = vmul.f32 %v960, %v965
      %v968 = vld [vmem:[#allocation2] sm:$0xf]
      %s969 = scalar_lea.vmem %s1, 1024
      %v970 = vld [vmem:[%s969] sm:$0xff]
      %v971 = vld [vmem:[%s969 + $0x8] sm:$0xff]
      %v972 = vld [vmem:[%s969 + $0x10] sm:$0xff]
      %v973 = vld [vmem:[%s969 + $0x18] sm:$0xff]
      %v974 = vld [vmem:[%s969 + $0x20] sm:$0xff]
      %v975 = vld [vmem:[%s969 + $0x28] sm:$0xff]
      %v976 = vld [vmem:[%s969 + $0x30] sm:$0xff]
      %v977 = vld [vmem:[%s969 + $0x38] sm:$0xff]
      %v978 = vld [vmem:[%s969 + $0x40] sm:$0xff]
      %v979 = vld [vmem:[%s969 + $0x48] sm:$0xff]
      %v980 = vld [vmem:[%s969 + $0x50] sm:$0xff]
      %v981 = vld [vmem:[%s969 + $0x58] sm:$0xff]
      %v982 = vld [vmem:[%s969 + $0x60] sm:$0xff]
      %v983 = vld [vmem:[%s969 + $0x68] sm:$0xff]
      %v984 = vld [vmem:[%s969 + $0x70] sm:$0xff]
      %v985 = vld [vmem:[%s969 + $0x78] sm:$0xff]
      %986 = vmatprep.subr.mxu0 0.0
      %987 = vmatpush1.msra.mxu0 %v970
      %988 = vmatprep.subr.mxu0 0.0
      %989 = vmatpush1.msra.mxu0 %v971
      %990 = vmatprep.subr.mxu0 0.0
      %991 = vmatpush1.msra.mxu0 %v972
      %992 = vmatprep.subr.mxu0 0.0
      %993 = vmatpush1.msra.mxu0 %v973
      %994 = vmatprep.subr.mxu0 0.0
      %995 = vmatpush1.msra.mxu0 %v974
      %996 = vmatprep.subr.mxu0 0.0
      %997 = vmatpush1.msra.mxu0 %v975
      %998 = vmatprep.subr.mxu0 0.0
      %999 = vmatpush1.msra.mxu0 %v976
      %1000 = vmatprep.subr.mxu0 0.0
      %1001 = vmatpush1.msra.mxu0 %v977
      %1002 = vmatprep.subr.mxu0 0.0
      %1003 = vmatpush1.msra.mxu0 %v978
      %1004 = vmatprep.subr.mxu0 0.0
      %1005 = vmatpush1.msra.mxu0 %v979
      %1006 = vmatprep.subr.mxu0 0.0
      %1007 = vmatpush1.msra.mxu0 %v980
      %1008 = vmatprep.subr.mxu0 0.0
      %1009 = vmatpush1.msra.mxu0 %v981
      %1010 = vmatprep.subr.mxu0 0.0
      %1011 = vmatpush1.msra.mxu0 %v982
      %1012 = vmatprep.subr.mxu0 0.0
      %1013 = vmatpush1.msra.mxu0 %v983
      %1014 = vmatprep.subr.mxu0 0.0
      %1015 = vmatpush1.msra.mxu0 %v984
      %1016 = vmatprep.subr.mxu0 0.0
      %1017 = vmatpush1.msra.mxu0 %v985
      %1018 = vmatprep.subr.mxu0 0.0
      %1019 = vmatpush1.msra.mxu0 0.0
      %1020 = vmatprep.subr.mxu0 0.0
      %1021 = vmatpush1.msra.mxu0 0.0
      %1022 = vmatprep.subr.mxu0 0.0
      %1023 = vmatpush1.msra.mxu0 0.0
      %1024 = vmatprep.subr.mxu0 0.0
      %1025 = vmatpush1.msra.mxu0 0.0
      %1026 = vmatprep.subr.mxu0 0.0
      %1027 = vmatpush1.msra.mxu0 0.0
      %1028 = vmatprep.subr.mxu0 0.0
      %1029 = vmatpush1.msra.mxu0 0.0
      %1030 = vmatprep.subr.mxu0 0.0
      %1031 = vmatpush1.msra.mxu0 0.0
      %1032 = vmatprep.subr.mxu0 0.0
      %1033 = vmatpush1.msra.mxu0 0.0
      %1034 = vmatprep.subr.mxu0 0.0
      %1035 = vmatpush1.msra.mxu0 0.0
      %1036 = vmatprep.subr.mxu0 0.0
      %1037 = vmatpush1.msra.mxu0 0.0
      %1038 = vmatprep.subr.mxu0 0.0
      %1039 = vmatpush1.msra.mxu0 0.0
      %1040 = vmatprep.subr.mxu0 0.0
      %1041 = vmatpush1.msra.mxu0 0.0
      %1042 = vmatprep.subr.mxu0 0.0
      %1043 = vmatpush1.msra.mxu0 0.0
      %1044 = vmatprep.subr.mxu0 0.0
      %1045 = vmatpush1.msra.mxu0 0.0
      %1046 = vmatprep.subr.mxu0 0.0
      %1047 = vmatpush1.msra.mxu0 0.0
      %1048 = vmatprep.subr.mxu0 0.0
      %1049 = vmatpush1.msra.mxu0 0.0
      %1050 = vmatprep.mubr.f32.mxu0 0.0
      %1051 = vmatmul.mubr.f32.gmra.mrb[0].mxu0 %v967
      %v1052 = vpop.f32.mrb[0].mxu0
      %v1053 = vadd.f32 0.0, %v1052
      %v1054 = vpop.f32.mrb[0].mxu0
      %1055 = vdwg.mxu0
      %v1056 = vadd.f32 %v968, %v1053
      %1057 = vst [vmem:[#allocation2] sm:$0xf] %v1056
      %v1058 = vld [vmem:[#allocation2] sm:$0xf]
      %v1059 = vld [vmem:[%s2] sm:$0x1]
      %v1061 = vlaneseq
      %v1062 = vshrl.u32 %v1061, 7
      %v1063 = vsub.s32 0, %v1062
      %v1064 = vrot.slane %v1059, %v1063
      %v1066 = vadd.f32 %v1058, %v1064
      %v1067 = vmax.f32 %v1066, 0.0
      %1068 = vst [vmem:[%s195] sm:$0xf] %v1067
      %p1069 = scmp.lt.s32.totalorder %s15, 1
      %s1070 = scalar_select %p1069, %s15, 1
      %s1071 = smul.addr %s1070, 4
      %s1072 = scalar_lea.vmem %s4, %s1071
      // Predicated region
      $region37: #{cnn_forward.6} parent=35 // pred_check
        %p1073 = pneg %p122
      $region38: #{cnn_forward.6} parent=35 // pred_check_branch
        %1075 = sbr.rel (%p1073) target = $region40
      $region39: #{cnn_forward.6} parent=35 // pred_region
        _
      $region40: #{cnn_forward.6} parent=35 // pred_fallthru
        _
    $region36: #{cnn_forward.6} parent=5 // pred_fallthru
      _
    %p1076 = scmp.le.s32.totalorder 2, %s10
    // Predicated region
    $region41: #{cnn_forward.6} parent=5 // pred_check
      %p1077 = pneg %p1076
    $region42: #{cnn_forward.6} parent=5 // pred_check_branch
      %1079 = sbr.rel (%p1077) target = $region44
    $region43: #{cnn_forward.6} parent=5 // pred_region
      %s1080 = ssub.s32 %s10, 2
      // Predicated region
      $region45: #{cnn_forward.6} parent=43 // pred_check
        %p1081 = pneg %p128
      $region46: #{cnn_forward.6} parent=43 // pred_check_branch
        %1083 = sbr.rel (%p1081) target = $region48
      $region47: #{cnn_forward.6} parent=43 // pred_region
        %p1084 = scmp.lt.s32.totalorder %s16, 1
        %s1085 = scalar_select %p1084, %s16, 1
        %s1086 = smul.addr %s1085, 4
        %s1087 = scalar_lea.vmem %s4, %s1086
      $region48: #{cnn_forward.6} parent=43 // pred_fallthru
        _
    $region44: #{cnn_forward.6} parent=5 // pred_fallthru
      _
  $region6: #{cnn_forward.6} parent=0 // loop_footer
    %s14 = sadd.s32 1, %s10
  $region7: #{cnn_forward.6} parent=0 // loop_footer_branch
    %9 = sbr.rel target = $region3
  $region8: #{cnn_forward.6} parent=0 // loop_exit
    _

// kernel: cnn_forward.7
$region0: #{cnn_forward.7}
  #allocation0 [shape = 'u32[]', space=smem, size = 0x4, offset = 0x4, fixed_abs, tag = 'smem constant byte address 0x4 - core index']
  #allocation1 [shape = 'u32[144,128]{1,0:T(1,128)}', space=vmem, size = 0x12000, scoped, tag = 'internal scratch']
  %s0 = inlined_call_operand.vmem [shape: f32[2,4,128], index: 0, kind: input, shape index: {}]
  %s1 = inlined_call_operand.vmem [shape: f32[128,256], index: 1, kind: input, shape index: {}]
  %s2 = inlined_call_operand.vmem [shape: f32[1,256], index: 2, kind: input, shape index: {}]
  %s3 = inlined_call_operand.vmem [shape: f32[256,128], index: 3, kind: input, shape index: {}]
  %s4 = inlined_call_operand.vmem [shape: f32[1,128], index: 4, kind: input, shape index: {}]
  %s5 = inlined_call_operand.hbm [shape: f32[2,128], index: 5, kind: output, shape index: {}]
  %s6 = sld [smem:[#allocation0]]
  $region30: #{cnn_forward.7} parent=0
    _
  %s8 = ssub.s32 1, %s6
  %s9 = scalar_select 0, %s8, %s6
  $region1: #{cnn_forward.7} parent=0
    #allocation2 [shape = 'u8[1024]{0}', space=vmem, size = 0x400, scoped, tag = 'output window, operand 0, single buffered']
    #allocation3 [shape = 's32[1]{0}', space=sflag, size = 0x4, scoped, tag = 'scoped memory for cnn_forward.7']
    %10 = vsyncpa [#allocation3], 0
    // Predicated region
    $region2: #{cnn_forward.7} parent=1 // pred_check
      _
    $region3: #{cnn_forward.7} parent=1 // pred_check_branch
      %12 = sbr.rel (0) target = $region5
    $region4: #{cnn_forward.7} parent=1 // pred_region
      _
    $region5: #{cnn_forward.7} parent=1 // pred_fallthru
      _
    // Predicated region
    $region6: #{cnn_forward.7} parent=1 // pred_check
      _
    $region7: #{cnn_forward.7} parent=1 // pred_check_branch
      %14 = sbr.rel (0) target = $region9
    $region8: #{cnn_forward.7} parent=1 // pred_region
      _
    $region9: #{cnn_forward.7} parent=1 // pred_fallthru
      _
    // Predicated region
    $region10: #{cnn_forward.7} parent=1 // pred_check
      _
    $region11: #{cnn_forward.7} parent=1 // pred_check_branch
      %16 = sbr.rel (0) target = $region13
    $region12: #{cnn_forward.7} parent=1 // pred_region
      _
    $region13: #{cnn_forward.7} parent=1 // pred_fallthru
      _
    // Predicated region
    $region14: #{cnn_forward.7} parent=1 // pred_check
      _
    $region15: #{cnn_forward.7} parent=1 // pred_check_branch
      %18 = sbr.rel (0) target = $region17
    $region16: #{cnn_forward.7} parent=1 // pred_region
      _
    $region17: #{cnn_forward.7} parent=1 // pred_fallthru
      _
    // Predicated region
    $region18: #{cnn_forward.7} parent=1 // pred_check
      _
    $region19: #{cnn_forward.7} parent=1 // pred_check_branch
      %20 = sbr.rel (0) target = $region21
    $region20: #{cnn_forward.7} parent=1 // pred_region
      _
    $region21: #{cnn_forward.7} parent=1 // pred_fallthru
      _
    %v21 = vld [vmem:[%s0] sm:$0xf]
    %v22 = vld [vmem:[%s0 + $0x4] sm:$0xf]
    %vm23 = vcmask 1043456
    %v24 = vsel %vm23, %v21, 0.0
    %v25 = vrot.slane %v24, 4
    %v26 = vadd.f32 %v24, %v25
    %v27 = vrot.slane %v26, 2
    %v28 = vadd.f32 %v26, %v27
    %v29 = vrot.slane %v28, 1
    %v30 = vadd.f32 %v28, %v29
    %v31 = vsel %vm23, %v22, 0.0
    %v32 = vrot.slane %v31, 4
    %v33 = vadd.f32 %v31, %v32
    %v34 = vrot.slane %v33, 2
    %v35 = vadd.f32 %v33, %v34
    %v36 = vrot.slane %v35, 1
    %v37 = vadd.f32 %v35, %v36
    %v38 = vrcp.pop 4.0
    %v39 = vmul.f32 %v30, %v38
    %v40 = vmul.f32 %v37, %v38
    %v41 = vld [vmem:[%s1] sm:$0xff]
    %v42 = vld [vmem:[%s1 + $0x8] sm:$0xff]
    %v43 = vld [vmem:[%s1 + $0x10] sm:$0xff]
    %v44 = vld [vmem:[%s1 + $0x18] sm:$0xff]
    %v45 = vld [vmem:[%s1 + $0x20] sm:$0xff]
    %v46 = vld [vmem:[%s1 + $0x28] sm:$0xff]
    %v47 = vld [vmem:[%s1 + $0x30] sm:$0xff]
    %v48 = vld [vmem:[%s1 + $0x38] sm:$0xff]
    %v49 = vld [vmem:[%s1 + $0x40] sm:$0xff]
    %v50 = vld [vmem:[%s1 + $0x48] sm:$0xff]
    %v51 = vld [vmem:[%s1 + $0x50] sm:$0xff]
    %v52 = vld [vmem:[%s1 + $0x58] sm:$0xff]
    %v53 = vld [vmem:[%s1 + $0x60] sm:$0xff]
    %v54 = vld [vmem:[%s1 + $0x68] sm:$0xff]
    %v55 = vld [vmem:[%s1 + $0x70] sm:$0xff]
    %v56 = vld [vmem:[%s1 + $0x78] sm:$0xff]
    %v57 = vld [vmem:[%s1 + $0x80] sm:$0xff]
    %v58 = vld [vmem:[%s1 + $0x88] sm:$0xff]
    %v59 = vld [vmem:[%s1 + $0x90] sm:$0xff]
    %v60 = vld [vmem:[%s1 + $0x98] sm:$0xff]
    %v61 = vld [vmem:[%s1 + $0xa0] sm:$0xff]
    %v62 = vld [vmem:[%s1 + $0xa8] sm:$0xff]
    %v63 = vld [vmem:[%s1 + $0xb0] sm:$0xff]
    %v64 = vld [vmem:[%s1 + $0xb8] sm:$0xff]
    %v65 = vld [vmem:[%s1 + $0xc0] sm:$0xff]
    %v66 = vld [vmem:[%s1 + $0xc8] sm:$0xff]
    %v67 = vld [vmem:[%s1 + $0xd0] sm:$0xff]
    %v68 = vld [vmem:[%s1 + $0xd8] sm:$0xff]
    %v69 = vld [vmem:[%s1 + $0xe0] sm:$0xff]
    %v70 = vld [vmem:[%s1 + $0xe8] sm:$0xff]
    %v71 = vld [vmem:[%s1 + $0xf0] sm:$0xff]
    %v72 = vld [vmem:[%s1 + $0xf8] sm:$0xff]
    %v73 = vld [vmem:[%s2] sm:$0x3]
    %v75 = vlaneseq
    %v76 = vshrl.u32 %v75, 7
    %v77 = vsub.s32 0, %v76
    %v78 = vrot.slane %v73, %v77
    %v79 = vlaneseq
    %v80 = vshrl.u32 %v79, 7
    %v81 = vsub.s32 1, %v80
    %v82 = vrot.slane %v73, %v81
    %vm87 = vcmask 1041409
    %v88 = vsel %vm87, %v40, %v39
    %90 = vmatprep.subr.mxu0 %v42
    %91 = vmatpush1.msra.mxu0 %v41
    %92 = vmatprep.subr.mxu0 %v44
    %93 = vmatpush1.msra.mxu0 %v43
    %94 = vmatprep.subr.mxu0 %v46
    %95 = vmatpush1.msra.mxu0 %v45
    %96 = vmatprep.subr.mxu0 %v48
    %97 = vmatpush1.msra.mxu0 %v47
    %98 = vmatprep.subr.mxu0 %v50
    %99 = vmatpush1.msra.mxu0 %v49
    %100 = vmatprep.subr.mxu0 %v52
    %101 = vmatpush1.msra.mxu0 %v51
    %102 = vmatprep.subr.mxu0 %v54
    %103 = vmatpush1.msra.mxu0 %v53
    %104 = vmatprep.subr.mxu0 %v56
    %105 = vmatpush1.msra.mxu0 %v55
    %106 = vmatprep.subr.mxu0 %v58
    %107 = vmatpush1.msra.mxu0 %v57
    %108 = vmatprep.subr.mxu0 %v60
    %109 = vmatpush1.msra.mxu0 %v59
    %110 = vmatprep.subr.mxu0 %v62
    %111 = vmatpush1.msra.mxu0 %v61
    %112 = vmatprep.subr.mxu0 %v64
    %113 = vmatpush1.msra.mxu0 %v63
    %114 = vmatprep.subr.mxu0 %v66
    %115 = vmatpush1.msra.mxu0 %v65
    %116 = vmatprep.subr.mxu0 %v68
    %117 = vmatpush1.msra.mxu0 %v67
    %118 = vmatprep.subr.mxu0 %v70
    %119 = vmatpush1.msra.mxu0 %v69
    %120 = vmatprep.subr.mxu0 %v72
    %121 = vmatpush1.msra.mxu0 %v71
    %122 = vmatprep.subr.mxu0 0.0
    %123 = vmatpush1.msra.mxu0 0.0
    %124 = vmatprep.subr.mxu0 0.0
    %125 = vmatpush1.msra.mxu0 0.0
    %126 = vmatprep.subr.mxu0 0.0
    %127 = vmatpush1.msra.mxu0 0.0
    %128 = vmatprep.subr.mxu0 0.0
    %129 = vmatpush1.msra.mxu0 0.0
    %130 = vmatprep.subr.mxu0 0.0
    %131 = vmatpush1.msra.mxu0 0.0
    %132 = vmatprep.subr.mxu0 0.0
    %133 = vmatpush1.msra.mxu0 0.0
    %134 = vmatprep.subr.mxu0 0.0
    %135 = vmatpush1.msra.mxu0 0.0
    %136 = vmatprep.subr.mxu0 0.0
    %137 = vmatpush1.msra.mxu0 0.0
    %138 = vmatprep.subr.mxu0 0.0
    %139 = vmatpush1.msra.mxu0 0.0
    %140 = vmatprep.subr.mxu0 0.0
    %141 = vmatpush1.msra.mxu0 0.0
    %142 = vmatprep.subr.mxu0 0.0
    %143 = vmatpush1.msra.mxu0 0.0
    %144 = vmatprep.subr.mxu0 0.0
    %145 = vmatpush1.msra.mxu0 0.0
    %146 = vmatprep.subr.mxu0 0.0
    %147 = vmatpush1.msra.mxu0 0.0
    %148 = vmatprep.subr.mxu0 0.0
    %149 = vmatpush1.msra.mxu0 0.0
    %150 = vmatprep.subr.mxu0 0.0
    %151 = vmatpush1.msra.mxu0 0.0
    %152 = vmatprep.subr.mxu0 0.0
    %153 = vmatpush1.msra.mxu0 0.0
    %154 = vmatprep.mubr.f32.mxu0 0.0
    %155 = vmatmul.mubr.f32.gmra.mrb[0].mxu0 %v88
    %v156 = vpop.f32.mrb[0].mxu0
    %v157 = vadd.f32 %v78, %v156
    %v158 = vpop.f32.mrb[0].mxu0
    %v159 = vadd.f32 %v82, %v158
    %160 = vdwg.mxu0
    %v161 = vmax.f32 %v157, 0.0
    %v162 = vmax.f32 %v159, 0.0
    %v163 = vld [vmem:[%s3] sm:$0xff]
    %v164 = vld [vmem:[%s3 + $0x8] sm:$0xff]
    %v165 = vld [vmem:[%s3 + $0x10] sm:$0xff]
    %v166 = vld [vmem:[%s3 + $0x18] sm:$0xff]
    %v167 = vld [vmem:[%s3 + $0x20] sm:$0xff]
    %v168 = vld [vmem:[%s3 + $0x28] sm:$0xff]
    %v169 = vld [vmem:[%s3 + $0x30] sm:$0xff]
    %v170 = vld [vmem:[%s3 + $0x38] sm:$0xff]
    %v171 = vld [vmem:[%s3 + $0x40] sm:$0xff]
    %v172 = vld [vmem:[%s3 + $0x48] sm:$0xff]
    %v173 = vld [vmem:[%s3 + $0x50] sm:$0xff]
    %v174 = vld [vmem:[%s3 + $0x58] sm:$0xff]
    %v175 = vld [vmem:[%s3 + $0x60] sm:$0xff]
    %v176 = vld [vmem:[%s3 + $0x68] sm:$0xff]
    %v177 = vld [vmem:[%s3 + $0x70] sm:$0xff]
    %v178 = vld [vmem:[%s3 + $0x78] sm:$0xff]
    %v179 = vld [vmem:[%s3 + $0x80] sm:$0xff]
    %v180 = vld [vmem:[%s3 + $0x88] sm:$0xff]
    %v181 = vld [vmem:[%s3 + $0x90] sm:$0xff]
    %v182 = vld [vmem:[%s3 + $0x98] sm:$0xff]
    %v183 = vld [vmem:[%s3 + $0xa0] sm:$0xff]
    %v184 = vld [vmem:[%s3 + $0xa8] sm:$0xff]
    %v185 = vld [vmem:[%s3 + $0xb0] sm:$0xff]
    %v186 = vld [vmem:[%s3 + $0xb8] sm:$0xff]
    %v187 = vld [vmem:[%s3 + $0xc0] sm:$0xff]
    %v188 = vld [vmem:[%s3 + $0xc8] sm:$0xff]
    %v189 = vld [vmem:[%s3 + $0xd0] sm:$0xff]
    %v190 = vld [vmem:[%s3 + $0xd8] sm:$0xff]
    %v191 = vld [vmem:[%s3 + $0xe0] sm:$0xff]
    %v192 = vld [vmem:[%s3 + $0xe8] sm:$0xff]
    %v193 = vld [vmem:[%s3 + $0xf0] sm:$0xff]
    %v194 = vld [vmem:[%s3 + $0xf8] sm:$0xff]
    %v195 = vld [vmem:[%s4] sm:$0x1]
    %v197 = vlaneseq
    %v198 = vshrl.u32 %v197, 7
    %v199 = vsub.s32 0, %v198
    %v200 = vrot.slane %v195, %v199
    %202 = vmatprep.subr.mxu0 0.0
    %203 = vmatpush1.msra.mxu0 %v163
    %204 = vmatprep.subr.mxu0 0.0
    %205 = vmatpush1.msra.mxu0 %v164
    %206 = vmatprep.subr.mxu0 0.0
    %207 = vmatpush1.msra.mxu0 %v165
    %208 = vmatprep.subr.mxu0 0.0
    %209 = vmatpush1.msra.mxu0 %v166
    %210 = vmatprep.subr.mxu0 0.0
    %211 = vmatpush1.msra.mxu0 %v167
    %212 = vmatprep.subr.mxu0 0.0
    %213 = vmatpush1.msra.mxu0 %v168
    %214 = vmatprep.subr.mxu0 0.0
    %215 = vmatpush1.msra.mxu0 %v169
    %216 = vmatprep.subr.mxu0 0.0
    %217 = vmatpush1.msra.mxu0 %v170
    %218 = vmatprep.subr.mxu0 0.0
    %219 = vmatpush1.msra.mxu0 %v171
    %220 = vmatprep.subr.mxu0 0.0
    %221 = vmatpush1.msra.mxu0 %v172
    %222 = vmatprep.subr.mxu0 0.0
    %223 = vmatpush1.msra.mxu0 %v173
    %224 = vmatprep.subr.mxu0 0.0
    %225 = vmatpush1.msra.mxu0 %v174
    %226 = vmatprep.subr.mxu0 0.0
    %227 = vmatpush1.msra.mxu0 %v175
    %228 = vmatprep.subr.mxu0 0.0
    %229 = vmatpush1.msra.mxu0 %v176
    %230 = vmatprep.subr.mxu0 0.0
    %231 = vmatpush1.msra.mxu0 %v177
    %232 = vmatprep.subr.mxu0 0.0
    %233 = vmatpush1.msra.mxu0 %v178
    %234 = vmatprep.subr.mxu0 0.0
    %235 = vmatpush1.msra.mxu0 %v179
    %236 = vmatprep.subr.mxu0 0.0
    %237 = vmatpush1.msra.mxu0 %v180
    %238 = vmatprep.subr.mxu0 0.0
    %239 = vmatpush1.msra.mxu0 %v181
    %240 = vmatprep.subr.mxu0 0.0
    %241 = vmatpush1.msra.mxu0 %v182
    %242 = vmatprep.subr.mxu0 0.0
    %243 = vmatpush1.msra.mxu0 %v183
    %244 = vmatprep.subr.mxu0 0.0
    %245 = vmatpush1.msra.mxu0 %v184
    %246 = vmatprep.subr.mxu0 0.0
    %247 = vmatpush1.msra.mxu0 %v185
    %248 = vmatprep.subr.mxu0 0.0
    %249 = vmatpush1.msra.mxu0 %v186
    %250 = vmatprep.subr.mxu0 0.0
    %251 = vmatpush1.msra.mxu0 %v187
    %252 = vmatprep.subr.mxu0 0.0
    %253 = vmatpush1.msra.mxu0 %v188
    %254 = vmatprep.subr.mxu0 0.0
    %255 = vmatpush1.msra.mxu0 %v189
    %256 = vmatprep.subr.mxu0 0.0
    %257 = vmatpush1.msra.mxu0 %v190
    %258 = vmatprep.subr.mxu0 0.0
    %259 = vmatpush1.msra.mxu0 %v191
    %260 = vmatprep.subr.mxu0 0.0
    %261 = vmatpush1.msra.mxu0 %v192
    %262 = vmatprep.subr.mxu0 0.0
    %263 = vmatpush1.msra.mxu0 %v193
    %264 = vmatprep.subr.mxu0 0.0
    %265 = vmatpush1.msra.mxu0 %v194
    %266 = vmatprep.mubr.f32.mxu0 %v162
    %267 = vmatmul.mubr.f32.gmra.mrb[0].mxu0 %v161
    %v268 = vpop.f32.mrb[0].mxu0
    %v269 = vadd.f32 %v200, %v268
    %v270 = vpop.f32.mrb[0].mxu0
    %271 = vdwg.mxu0
    %272 = vst [vmem:[#allocation2] sm:$0x3] %v269
    // Predicated region
    $region22: #{cnn_forward.7} parent=1 // pred_check
      _
    $region23: #{cnn_forward.7} parent=1 // pred_check_branch
      %274 = sbr.rel (0) target = $region25
    $region24: #{cnn_forward.7} parent=1 // pred_region
      %s276 = ssub.s32 32, 32
      %277 = vsyncadd [#allocation3], %s276
      %s279 = sshll.u32 [#allocation2], 4
      %s280 = int_to_ptr.vmem [resolvable:$true] %s279
      %282 = dma.vmem_to_hbm [thread:$0]  %s280, 32, %s5, [#allocation3]
    $region25: #{cnn_forward.7} parent=1 // pred_fallthru
      _
    // Predicated region
    $region26: #{cnn_forward.7} parent=1 // pred_check
      _
    $region27: #{cnn_forward.7} parent=1 // pred_check_branch
      %284 = sbr.rel (0) target = $region29
    $region28: #{cnn_forward.7} parent=1 // pred_region
      %285 = dma.done [#allocation3], 32
    $region29: #{cnn_forward.7} parent=1 // pred_fallthru
      _
    %286 = vsyncpa [#allocation3], 1

</llo_original>
